<compile_context>
chip_gen: v5e
topology: v5e:2x2
jax: 0.10.0
libtpu: 0.0.40
codegen_flags: <defaults>
</compile_context>

<pallas_src>
import math
import functools

import jax
import jax.numpy as jnp
from jax.experimental import pallas as pl
from jax.experimental.pallas import tpu as pltpu


# ---------------------------------------------------------------------------
# PositionalEncoding buffer (same formula as the PyTorch register_buffer)
# ---------------------------------------------------------------------------
def _positional_encoding(seq_len, d_model, pe_scale_factor=0.1):
    position = jnp.arange(seq_len, dtype=jnp.float32)[:, None]                 # (S, 1)
    div_term = jnp.exp(jnp.arange(0, d_model, 2, dtype=jnp.float32)
                       * -(math.log(10000.0) / d_model))                       # (D/2,)
    pe = jnp.zeros((seq_len, d_model), jnp.float32)
    pe = pe.at[:, 0::2].set(jnp.sin(position * div_term) * pe_scale_factor)
    pe = pe.at[:, 1::2].set(jnp.cos(position * div_term) * pe_scale_factor)
    return pe


# ---------------------------------------------------------------------------
# Fused kernel: one batch tile (bb, S, D) per grid step
# ---------------------------------------------------------------------------
def _mlp_mix_enrich_kernel(x_ref, pe_ref, w1t_ref, b1t_ref, w2t_ref, b2t_ref,
                           wb1_ref, bb1_ref, wb2_ref, bb2_ref, o_ref):
    bb, s, d = x_ref.shape
    f32 = jnp.float32

    # Positional encoding (pe already f32; elementwise math kept in f32).
    # TODO(synk): dropout(p=0.1) inside PositionalEncoding is identity
    #             (eval mode); training-mode RNG dropout is not implemented.
    x = x_ref[...].astype(f32) + pe_ref[...][None, :, :]                       # (bb, S, D)

    # ---- Token MLP (mixes along the sequence axis S).  S is tiny (=8), so do
    #      it on the VPU as unrolled scalar-weight FMAs over (bb, 1, D) slabs;
    #      the (S,S) weights / (S,) biases are SMEM scalars.  No MXU traffic.
    xs = [x[:, u:u + 1, :] for u in range(s)]                                  # S x (bb,1,D)
    hs = []
    for u in range(s):
        acc = xs[0] * w1t_ref[u, 0]
        for k in range(1, s):
            acc = acc + xs[k] * w1t_ref[u, k]
        hs.append(jnp.maximum(acc + b1t_ref[u], 0.0))                          # ReLU
    ys = []
    for u in range(s):
        acc = hs[0] * w2t_ref[u, 0]
        for k in range(1, s):
            acc = acc + hs[k] * w2t_ref[u, k]
        ys.append(acc + b2t_ref[u] + xs[u])                                    # + residual 1
    y = jnp.concatenate(ys, axis=1)                                            # (bb, S, D) f32

    # ---- Bottleneck MLP (mixes along the feature axis D) on the MXU:
    #      bf16 (or native) operands, f32 accumulation. ----
    y2 = y.reshape(bb * s, d)                                                  # lane-dense slab
    h2 = jnp.dot(y2.astype(wb1_ref.dtype), wb1_ref[...],
                 preferred_element_type=f32)
    h2 = jnp.maximum(h2 + bb1_ref[...], 0.0)
    bot = jnp.dot(h2.astype(wb2_ref.dtype), wb2_ref[...],
                  preferred_element_type=f32)
    out = bot + bb2_ref[...] + y2                                              # + residual 2

    o_ref[...] = out.reshape(bb, s, d).astype(o_ref.dtype)


# ---------------------------------------------------------------------------
# Wrapper
# ---------------------------------------------------------------------------
def mlp_mix_enrich(x, params, *, batch_block=None, matmul_dtype=jnp.bfloat16):
    """x: (B, S, D).  params: PyTorch-layout Linear weights/biases.

    batch_block=None  -> one grid step with the full batch (fills the MXU;
                         right choice on v5e/v6e).  For v7x pick
                         batch_block=ceil(B/2) for 2 balanced parallel steps.
    Non-divisible batches are zero-padded and sliced back afterwards.
    """
    B, S, D = x.shape
    bb = B if batch_block is None else min(int(batch_block), B)
    n_blocks = -(-B // bb)                    # cdiv
    Bp = n_blocks * bb
    x_in = x if Bp == B else jnp.pad(x, ((0, Bp - B), (0, 0), (0, 0)))

    f32 = jnp.float32
    # Constant blocks cast once here (not per grid step inside the kernel).
    pe = _positional_encoding(S, D)                                   # (S, D) f32, VMEM
    w1t = params["w1_tok"].astype(f32)                                # (S, S)  SMEM scalars
    b1t = params["b1_tok"].astype(f32)                                # (S,)    SMEM scalars
    w2t = params["w2_tok"].astype(f32)
    b2t = params["b2_tok"].astype(f32)
    wb1 = params["w1_bot"].T.astype(matmul_dtype)                     # (D, D): kernel does y @ W
    wb2 = params["w2_bot"].T.astype(matmul_dtype)
    bb1 = params["b1_bot"].reshape(1, D).astype(f32)
    bb2 = params["b2_bot"].reshape(1, D).astype(f32)

    # Explicit scoped-VMEM budget (default 16/32 MiB would not fit D=2048
    # weights): x/out tiles double-buffered + resident constant blocks.
    x_item = jnp.dtype(x.dtype).itemsize
    w_item = jnp.dtype(matmul_dtype).itemsize
    tile_bytes = bb * S * D * x_item
    const_bytes = pe.size * 4 + 2 * (D * D) * w_item + 2 * D * 4
    vmem_needed = 4 * tile_bytes + 2 * const_bytes + (4 << 20)
    vmem_limit = int(min(max(vmem_needed, 16 << 20), 64 << 20))

    flops = 4 * Bp * S * D * D + 4 * Bp * S * S * D
    bytes_accessed = 2 * Bp * S * D * x_item + 2 * D * D * w_item + 2 * D * 4 + pe.size * 4

    smem_spec = pl.BlockSpec(memory_space=pltpu.MemorySpace.SMEM)
    const2d = lambda i: (0, 0)

    out = pl.pallas_call(
        _mlp_mix_enrich_kernel,
        out_shape=jax.ShapeDtypeStruct((Bp, S, D), x.dtype),
        grid_spec=pltpu.PrefetchScalarGridSpec(
            num_scalar_prefetch=0,
            grid=(n_blocks,),
            in_specs=[
                pl.BlockSpec((bb, S, D), lambda i: (i, 0, 0)),   # x (batch tile)
                pl.BlockSpec((S, D), const2d),                   # positional encoding (f32)
                smem_spec,                                       # Tok inp_fc W  (S,S)  SMEM
                smem_spec,                                       # Tok inp_fc b  (S,)   SMEM
                smem_spec,                                       # Tok out_fc W  (S,S)  SMEM
                smem_spec,                                       # Tok out_fc b  (S,)   SMEM
                pl.BlockSpec((D, D), const2d),                   # Bot inp_fc W^T (matmul dtype)
                pl.BlockSpec((1, D), const2d),                   # Bot inp_fc b   (f32)
                pl.BlockSpec((D, D), const2d),                   # Bot out_fc W^T (matmul dtype)
                pl.BlockSpec((1, D), const2d),                   # Bot out_fc b   (f32)
            ],
            out_specs=pl.BlockSpec((bb, S, D), lambda i: (i, 0, 0)),
        ),
        compiler_params=pltpu.CompilerParams(
            dimension_semantics=("parallel",),
            vmem_limit_bytes=vmem_limit,
        ),
        cost_estimate=pl.CostEstimate(flops=flops, transcendentals=0,
                                      bytes_accessed=bytes_accessed),
    )(x_in, pe, w1t, b1t, w2t, b2t, wb1, bb1, wb2, bb2)

    return out[:B] if Bp != B else out


# ---------------------------------------------------------------------------
# Pure-JAX reference (mirrors the PyTorch forward exactly, eval mode)
# ---------------------------------------------------------------------------
def mlp_mix_enrich_ref(x, params):
    B, S, D = x.shape
    x = x + _positional_encoding(S, D)[None]
    h = jnp.einsum("us,bsd->bud", params["w1_tok"], x) + params["b1_tok"][None, :, None]
    h = jax.nn.relu(h)
    tok = jnp.einsum("us,bsd->bud", params["w2_tok"], h) + params["b2_tok"][None, :, None]
    y = tok + x
    h2 = jax.nn.relu(jnp.einsum("bsd,ed->bse", y, params["w1_bot"])
                     + params["b1_bot"][None, None, :])
    bot = jnp.einsum("bsd,ed->bse", h2, params["w2_bot"]) + params["b2_bot"][None, None, :]
    return bot + y


if __name__ == "__main__":
    # Small shapes consistent with the module: B x 8 x in_dim  (stand-in for
    # B=20/25, seq_len=8, in_dim=2048).
    B, S, D = 8, 8, 128
    key = jax.random.PRNGKey(0)
    ks = jax.random.split(key, 9)
    x = jax.random.normal(ks[0], (B, S, D), jnp.float32)

    def linear_init(kw, kb, out_f, in_f):
        bound = 1.0 / math.sqrt(in_f)
        w = jax.random.uniform(kw, (out_f, in_f), jnp.float32, -bound, bound)
        b = jax.random.uniform(kb, (out_f,), jnp.float32, -bound, bound)
        return w, b

    w1_tok, b1_tok = linear_init(ks[1], ks[2], S, S)
    w2_tok, b2_tok = linear_init(ks[3], ks[4], S, S)
    w1_bot, b1_bot = linear_init(ks[5], ks[6], D, D)
    w2_bot, b2_bot = linear_init(ks[7], ks[8], D, D)
    params = dict(w1_tok=w1_tok, b1_tok=b1_tok, w2_tok=w2_tok, b2_tok=b2_tok,
                  w1_bot=w1_bot, b1_bot=b1_bot, w2_bot=w2_bot, b2_bot=b2_bot)

    ref = jax.block_until_ready(mlp_mix_enrich_ref(x, params))

    # Default path: full batch in one grid step (bb = B).
    fwd_full = jax.jit(functools.partial(mlp_mix_enrich))
    out_full = jax.block_until_ready(fwd_full(x, params))
    assert out_full.shape == (B, S, D)
    assert bool(jnp.all(jnp.isfinite(out_full)))
    err_full = float(jnp.max(jnp.abs(out_full - ref)))
    assert err_full < 5e-2, f"full-batch mismatch vs reference: {err_full}"

    # Multi-step grid with batch padding (exercises the non-divisible path).
    fwd_pad = jax.jit(functools.partial(mlp_mix_enrich, batch_block=3))
    out_pad = jax.block_until_ready(fwd_pad(x, params))
    assert out_pad.shape == (B, S, D)
    err_pad = float(jnp.max(jnp.abs(out_pad - ref)))
    assert err_pad < 5e-2, f"padded-grid mismatch vs reference: {err_pad}"

    print("KERNEL_OK")
</pallas_src>

<mosaic_0001>
module attributes {stable_mosaic.version = 11 : i64} {
  func.func @_mlp_mix_enrich_kernel(%arg0: i32, %arg1: memref<8x8x128xf32, #tpu.memory_space<vmem>>, %arg2: memref<8x128xf32, #tpu.memory_space<vmem>>, %arg3: memref<8x8xf32, #tpu.memory_space<smem>>, %arg4: memref<8xf32, #tpu.memory_space<smem>>, %arg5: memref<8x8xf32, #tpu.memory_space<smem>>, %arg6: memref<8xf32, #tpu.memory_space<smem>>, %arg7: memref<128x128xbf16, #tpu.memory_space<vmem>>, %arg8: memref<1x128xf32, #tpu.memory_space<vmem>>, %arg9: memref<128x128xbf16, #tpu.memory_space<vmem>>, %arg10: memref<1x128xf32, #tpu.memory_space<vmem>>, %arg11: memref<8x8x128xf32, #tpu.memory_space<vmem>>) attributes {dimension_semantics = [#tpu.dimension_semantics<parallel>], iteration_bounds = array<i64: 1>, scalar_prefetch = 0 : i64, scratch_operands = 0 : i64, tpu.core_type = #tpu.core_type<tc>, window_params = [{transform_indices = @transform_0, window_bounds = array<i64: 8, 8, 128>}, {pipeline_mode = #tpu.pipeline_mode<synchronous>, transform_indices = @transform_1, window_bounds = array<i64: 8, 128>}, {transform_indices = @transform_2, window_bounds = array<i64: 8, 8>}, {transform_indices = @transform_3, window_bounds = array<i64: 8>}, {transform_indices = @transform_4, window_bounds = array<i64: 8, 8>}, {transform_indices = @transform_5, window_bounds = array<i64: 8>}, {pipeline_mode = #tpu.pipeline_mode<synchronous>, transform_indices = @transform_6, window_bounds = array<i64: 128, 128>}, {pipeline_mode = #tpu.pipeline_mode<synchronous>, transform_indices = @transform_7, window_bounds = array<i64: 1, 128>}, {pipeline_mode = #tpu.pipeline_mode<synchronous>, transform_indices = @transform_8, window_bounds = array<i64: 128, 128>}, {pipeline_mode = #tpu.pipeline_mode<synchronous>, transform_indices = @transform_9, window_bounds = array<i64: 1, 128>}, {transform_indices = @transform_10, window_bounds = array<i64: 8, 8, 128>}]} {
    %c0 = arith.constant 0 : index
    %c0_0 = arith.constant 0 : index
    %c0_1 = arith.constant 0 : index
    %0 = vector.load %arg1[%c0, %c0_0, %c0_1] : memref<8x8x128xf32, #tpu.memory_space<vmem>>, vector<8x8x128xf32>
    %c0_2 = arith.constant 0 : index
    %c0_3 = arith.constant 0 : index
    %1 = vector.load %arg2[%c0_2, %c0_3] : memref<8x128xf32, #tpu.memory_space<vmem>>, vector<8x128xf32>
    %2 = vector.shape_cast %1 : vector<8x128xf32> to vector<1x8x128xf32>
    %3 = vector.broadcast %2 : vector<1x8x128xf32> to vector<8x8x128xf32>
    %4 = arith.addf %0, %3 : vector<8x8x128xf32>
    %5 = vector.extract_strided_slice %4 {offsets = [0, 0, 0], sizes = [8, 1, 128], strides = [1, 1, 1]} : vector<8x8x128xf32> to vector<8x1x128xf32>
    %6 = vector.extract_strided_slice %4 {offsets = [0, 1, 0], sizes = [8, 1, 128], strides = [1, 1, 1]} : vector<8x8x128xf32> to vector<8x1x128xf32>
    %7 = vector.extract_strided_slice %4 {offsets = [0, 2, 0], sizes = [8, 1, 128], strides = [1, 1, 1]} : vector<8x8x128xf32> to vector<8x1x128xf32>
    %8 = vector.extract_strided_slice %4 {offsets = [0, 3, 0], sizes = [8, 1, 128], strides = [1, 1, 1]} : vector<8x8x128xf32> to vector<8x1x128xf32>
    %9 = vector.extract_strided_slice %4 {offsets = [0, 4, 0], sizes = [8, 1, 128], strides = [1, 1, 1]} : vector<8x8x128xf32> to vector<8x1x128xf32>
    %10 = vector.extract_strided_slice %4 {offsets = [0, 5, 0], sizes = [8, 1, 128], strides = [1, 1, 1]} : vector<8x8x128xf32> to vector<8x1x128xf32>
    %11 = vector.extract_strided_slice %4 {offsets = [0, 6, 0], sizes = [8, 1, 128], strides = [1, 1, 1]} : vector<8x8x128xf32> to vector<8x1x128xf32>
    %12 = vector.extract_strided_slice %4 {offsets = [0, 7, 0], sizes = [8, 1, 128], strides = [1, 1, 1]} : vector<8x8x128xf32> to vector<8x1x128xf32>
    %c0_4 = arith.constant 0 : index
    %c0_5 = arith.constant 0 : index
    %13 = memref.load %arg3[%c0_4, %c0_5] : memref<8x8xf32, #tpu.memory_space<smem>>
    %14 = vector.broadcast %13 : f32 to vector<8x1x128xf32>
    %15 = arith.mulf %5, %14 : vector<8x1x128xf32>
    %c0_6 = arith.constant 0 : index
    %c1 = arith.constant 1 : index
    %16 = memref.load %arg3[%c0_6, %c1] : memref<8x8xf32, #tpu.memory_space<smem>>
    %17 = vector.broadcast %16 : f32 to vector<8x1x128xf32>
    %18 = arith.mulf %6, %17 : vector<8x1x128xf32>
    %19 = arith.addf %15, %18 : vector<8x1x128xf32>
    %c0_7 = arith.constant 0 : index
    %c2 = arith.constant 2 : index
    %20 = memref.load %arg3[%c0_7, %c2] : memref<8x8xf32, #tpu.memory_space<smem>>
    %21 = vector.broadcast %20 : f32 to vector<8x1x128xf32>
    %22 = arith.mulf %7, %21 : vector<8x1x128xf32>
    %23 = arith.addf %19, %22 : vector<8x1x128xf32>
    %c0_8 = arith.constant 0 : index
    %c3 = arith.constant 3 : index
    %24 = memref.load %arg3[%c0_8, %c3] : memref<8x8xf32, #tpu.memory_space<smem>>
    %25 = vector.broadcast %24 : f32 to vector<8x1x128xf32>
    %26 = arith.mulf %8, %25 : vector<8x1x128xf32>
    %27 = arith.addf %23, %26 : vector<8x1x128xf32>
    %c0_9 = arith.constant 0 : index
    %c4 = arith.constant 4 : index
    %28 = memref.load %arg3[%c0_9, %c4] : memref<8x8xf32, #tpu.memory_space<smem>>
    %29 = vector.broadcast %28 : f32 to vector<8x1x128xf32>
    %30 = arith.mulf %9, %29 : vector<8x1x128xf32>
    %31 = arith.addf %27, %30 : vector<8x1x128xf32>
    %c0_10 = arith.constant 0 : index
    %c5 = arith.constant 5 : index
    %32 = memref.load %arg3[%c0_10, %c5] : memref<8x8xf32, #tpu.memory_space<smem>>
    %33 = vector.broadcast %32 : f32 to vector<8x1x128xf32>
    %34 = arith.mulf %10, %33 : vector<8x1x128xf32>
    %35 = arith.addf %31, %34 : vector<8x1x128xf32>
    %c0_11 = arith.constant 0 : index
    %c6 = arith.constant 6 : index
    %36 = memref.load %arg3[%c0_11, %c6] : memref<8x8xf32, #tpu.memory_space<smem>>
    %37 = vector.broadcast %36 : f32 to vector<8x1x128xf32>
    %38 = arith.mulf %11, %37 : vector<8x1x128xf32>
    %39 = arith.addf %35, %38 : vector<8x1x128xf32>
    %c0_12 = arith.constant 0 : index
    %c7 = arith.constant 7 : index
    %40 = memref.load %arg3[%c0_12, %c7] : memref<8x8xf32, #tpu.memory_space<smem>>
    %41 = vector.broadcast %40 : f32 to vector<8x1x128xf32>
    %42 = arith.mulf %12, %41 : vector<8x1x128xf32>
    %43 = arith.addf %39, %42 : vector<8x1x128xf32>
    %c0_13 = arith.constant 0 : index
    %44 = memref.load %arg4[%c0_13] : memref<8xf32, #tpu.memory_space<smem>>
    %45 = vector.broadcast %44 : f32 to vector<8x1x128xf32>
    %46 = arith.addf %43, %45 : vector<8x1x128xf32>
    %cst = arith.constant 0.000000e+00 : f32
    %47 = vector.broadcast %cst : f32 to vector<8x1x128xf32>
    %48 = arith.maximumf %46, %47 : vector<8x1x128xf32>
    %c1_14 = arith.constant 1 : index
    %c0_15 = arith.constant 0 : index
    %49 = memref.load %arg3[%c1_14, %c0_15] : memref<8x8xf32, #tpu.memory_space<smem>>
    %50 = vector.broadcast %49 : f32 to vector<8x1x128xf32>
    %51 = arith.mulf %5, %50 : vector<8x1x128xf32>
    %c1_16 = arith.constant 1 : index
    %c1_17 = arith.constant 1 : index
    %52 = memref.load %arg3[%c1_16, %c1_17] : memref<8x8xf32, #tpu.memory_space<smem>>
    %53 = vector.broadcast %52 : f32 to vector<8x1x128xf32>
    %54 = arith.mulf %6, %53 : vector<8x1x128xf32>
    %55 = arith.addf %51, %54 : vector<8x1x128xf32>
    %c1_18 = arith.constant 1 : index
    %c2_19 = arith.constant 2 : index
    %56 = memref.load %arg3[%c1_18, %c2_19] : memref<8x8xf32, #tpu.memory_space<smem>>
    %57 = vector.broadcast %56 : f32 to vector<8x1x128xf32>
    %58 = arith.mulf %7, %57 : vector<8x1x128xf32>
    %59 = arith.addf %55, %58 : vector<8x1x128xf32>
    %c1_20 = arith.constant 1 : index
    %c3_21 = arith.constant 3 : index
    %60 = memref.load %arg3[%c1_20, %c3_21] : memref<8x8xf32, #tpu.memory_space<smem>>
    %61 = vector.broadcast %60 : f32 to vector<8x1x128xf32>
    %62 = arith.mulf %8, %61 : vector<8x1x128xf32>
    %63 = arith.addf %59, %62 : vector<8x1x128xf32>
    %c1_22 = arith.constant 1 : index
    %c4_23 = arith.constant 4 : index
    %64 = memref.load %arg3[%c1_22, %c4_23] : memref<8x8xf32, #tpu.memory_space<smem>>
    %65 = vector.broadcast %64 : f32 to vector<8x1x128xf32>
    %66 = arith.mulf %9, %65 : vector<8x1x128xf32>
    %67 = arith.addf %63, %66 : vector<8x1x128xf32>
    %c1_24 = arith.constant 1 : index
    %c5_25 = arith.constant 5 : index
    %68 = memref.load %arg3[%c1_24, %c5_25] : memref<8x8xf32, #tpu.memory_space<smem>>
    %69 = vector.broadcast %68 : f32 to vector<8x1x128xf32>
    %70 = arith.mulf %10, %69 : vector<8x1x128xf32>
    %71 = arith.addf %67, %70 : vector<8x1x128xf32>
    %c1_26 = arith.constant 1 : index
    %c6_27 = arith.constant 6 : index
    %72 = memref.load %arg3[%c1_26, %c6_27] : memref<8x8xf32, #tpu.memory_space<smem>>
    %73 = vector.broadcast %72 : f32 to vector<8x1x128xf32>
    %74 = arith.mulf %11, %73 : vector<8x1x128xf32>
    %75 = arith.addf %71, %74 : vector<8x1x128xf32>
    %c1_28 = arith.constant 1 : index
    %c7_29 = arith.constant 7 : index
    %76 = memref.load %arg3[%c1_28, %c7_29] : memref<8x8xf32, #tpu.memory_space<smem>>
    %77 = vector.broadcast %76 : f32 to vector<8x1x128xf32>
    %78 = arith.mulf %12, %77 : vector<8x1x128xf32>
    %79 = arith.addf %75, %78 : vector<8x1x128xf32>
    %c1_30 = arith.constant 1 : index
    %80 = memref.load %arg4[%c1_30] : memref<8xf32, #tpu.memory_space<smem>>
    %81 = vector.broadcast %80 : f32 to vector<8x1x128xf32>
    %82 = arith.addf %79, %81 : vector<8x1x128xf32>
    %cst_31 = arith.constant 0.000000e+00 : f32
    %83 = vector.broadcast %cst_31 : f32 to vector<8x1x128xf32>
    %84 = arith.maximumf %82, %83 : vector<8x1x128xf32>
    %c2_32 = arith.constant 2 : index
    %c0_33 = arith.constant 0 : index
    %85 = memref.load %arg3[%c2_32, %c0_33] : memref<8x8xf32, #tpu.memory_space<smem>>
    %86 = vector.broadcast %85 : f32 to vector<8x1x128xf32>
    %87 = arith.mulf %5, %86 : vector<8x1x128xf32>
    %c2_34 = arith.constant 2 : index
    %c1_35 = arith.constant 1 : index
    %88 = memref.load %arg3[%c2_34, %c1_35] : memref<8x8xf32, #tpu.memory_space<smem>>
    %89 = vector.broadcast %88 : f32 to vector<8x1x128xf32>
    %90 = arith.mulf %6, %89 : vector<8x1x128xf32>
    %91 = arith.addf %87, %90 : vector<8x1x128xf32>
    %c2_36 = arith.constant 2 : index
    %c2_37 = arith.constant 2 : index
    %92 = memref.load %arg3[%c2_36, %c2_37] : memref<8x8xf32, #tpu.memory_space<smem>>
    %93 = vector.broadcast %92 : f32 to vector<8x1x128xf32>
    %94 = arith.mulf %7, %93 : vector<8x1x128xf32>
    %95 = arith.addf %91, %94 : vector<8x1x128xf32>
    %c2_38 = arith.constant 2 : index
    %c3_39 = arith.constant 3 : index
    %96 = memref.load %arg3[%c2_38, %c3_39] : memref<8x8xf32, #tpu.memory_space<smem>>
    %97 = vector.broadcast %96 : f32 to vector<8x1x128xf32>
    %98 = arith.mulf %8, %97 : vector<8x1x128xf32>
    %99 = arith.addf %95, %98 : vector<8x1x128xf32>
    %c2_40 = arith.constant 2 : index
    %c4_41 = arith.constant 4 : index
    %100 = memref.load %arg3[%c2_40, %c4_41] : memref<8x8xf32, #tpu.memory_space<smem>>
    %101 = vector.broadcast %100 : f32 to vector<8x1x128xf32>
    %102 = arith.mulf %9, %101 : vector<8x1x128xf32>
    %103 = arith.addf %99, %102 : vector<8x1x128xf32>
    %c2_42 = arith.constant 2 : index
    %c5_43 = arith.constant 5 : index
    %104 = memref.load %arg3[%c2_42, %c5_43] : memref<8x8xf32, #tpu.memory_space<smem>>
    %105 = vector.broadcast %104 : f32 to vector<8x1x128xf32>
    %106 = arith.mulf %10, %105 : vector<8x1x128xf32>
    %107 = arith.addf %103, %106 : vector<8x1x128xf32>
    %c2_44 = arith.constant 2 : index
    %c6_45 = arith.constant 6 : index
    %108 = memref.load %arg3[%c2_44, %c6_45] : memref<8x8xf32, #tpu.memory_space<smem>>
    %109 = vector.broadcast %108 : f32 to vector<8x1x128xf32>
    %110 = arith.mulf %11, %109 : vector<8x1x128xf32>
    %111 = arith.addf %107, %110 : vector<8x1x128xf32>
    %c2_46 = arith.constant 2 : index
    %c7_47 = arith.constant 7 : index
    %112 = memref.load %arg3[%c2_46, %c7_47] : memref<8x8xf32, #tpu.memory_space<smem>>
    %113 = vector.broadcast %112 : f32 to vector<8x1x128xf32>
    %114 = arith.mulf %12, %113 : vector<8x1x128xf32>
    %115 = arith.addf %111, %114 : vector<8x1x128xf32>
    %c2_48 = arith.constant 2 : index
    %116 = memref.load %arg4[%c2_48] : memref<8xf32, #tpu.memory_space<smem>>
    %117 = vector.broadcast %116 : f32 to vector<8x1x128xf32>
    %118 = arith.addf %115, %117 : vector<8x1x128xf32>
    %cst_49 = arith.constant 0.000000e+00 : f32
    %119 = vector.broadcast %cst_49 : f32 to vector<8x1x128xf32>
    %120 = arith.maximumf %118, %119 : vector<8x1x128xf32>
    %c3_50 = arith.constant 3 : index
    %c0_51 = arith.constant 0 : index
    %121 = memref.load %arg3[%c3_50, %c0_51] : memref<8x8xf32, #tpu.memory_space<smem>>
    %122 = vector.broadcast %121 : f32 to vector<8x1x128xf32>
    %123 = arith.mulf %5, %122 : vector<8x1x128xf32>
    %c3_52 = arith.constant 3 : index
    %c1_53 = arith.constant 1 : index
    %124 = memref.load %arg3[%c3_52, %c1_53] : memref<8x8xf32, #tpu.memory_space<smem>>
    %125 = vector.broadcast %124 : f32 to vector<8x1x128xf32>
    %126 = arith.mulf %6, %125 : vector<8x1x128xf32>
    %127 = arith.addf %123, %126 : vector<8x1x128xf32>
    %c3_54 = arith.constant 3 : index
    %c2_55 = arith.constant 2 : index
    %128 = memref.load %arg3[%c3_54, %c2_55] : memref<8x8xf32, #tpu.memory_space<smem>>
    %129 = vector.broadcast %128 : f32 to vector<8x1x128xf32>
    %130 = arith.mulf %7, %129 : vector<8x1x128xf32>
    %131 = arith.addf %127, %130 : vector<8x1x128xf32>
    %c3_56 = arith.constant 3 : index
    %c3_57 = arith.constant 3 : index
    %132 = memref.load %arg3[%c3_56, %c3_57] : memref<8x8xf32, #tpu.memory_space<smem>>
    %133 = vector.broadcast %132 : f32 to vector<8x1x128xf32>
    %134 = arith.mulf %8, %133 : vector<8x1x128xf32>
    %135 = arith.addf %131, %134 : vector<8x1x128xf32>
    %c3_58 = arith.constant 3 : index
    %c4_59 = arith.constant 4 : index
    %136 = memref.load %arg3[%c3_58, %c4_59] : memref<8x8xf32, #tpu.memory_space<smem>>
    %137 = vector.broadcast %136 : f32 to vector<8x1x128xf32>
    %138 = arith.mulf %9, %137 : vector<8x1x128xf32>
    %139 = arith.addf %135, %138 : vector<8x1x128xf32>
    %c3_60 = arith.constant 3 : index
    %c5_61 = arith.constant 5 : index
    %140 = memref.load %arg3[%c3_60, %c5_61] : memref<8x8xf32, #tpu.memory_space<smem>>
    %141 = vector.broadcast %140 : f32 to vector<8x1x128xf32>
    %142 = arith.mulf %10, %141 : vector<8x1x128xf32>
    %143 = arith.addf %139, %142 : vector<8x1x128xf32>
    %c3_62 = arith.constant 3 : index
    %c6_63 = arith.constant 6 : index
    %144 = memref.load %arg3[%c3_62, %c6_63] : memref<8x8xf32, #tpu.memory_space<smem>>
    %145 = vector.broadcast %144 : f32 to vector<8x1x128xf32>
    %146 = arith.mulf %11, %145 : vector<8x1x128xf32>
    %147 = arith.addf %143, %146 : vector<8x1x128xf32>
    %c3_64 = arith.constant 3 : index
    %c7_65 = arith.constant 7 : index
    %148 = memref.load %arg3[%c3_64, %c7_65] : memref<8x8xf32, #tpu.memory_space<smem>>
    %149 = vector.broadcast %148 : f32 to vector<8x1x128xf32>
    %150 = arith.mulf %12, %149 : vector<8x1x128xf32>
    %151 = arith.addf %147, %150 : vector<8x1x128xf32>
    %c3_66 = arith.constant 3 : index
    %152 = memref.load %arg4[%c3_66] : memref<8xf32, #tpu.memory_space<smem>>
    %153 = vector.broadcast %152 : f32 to vector<8x1x128xf32>
    %154 = arith.addf %151, %153 : vector<8x1x128xf32>
    %cst_67 = arith.constant 0.000000e+00 : f32
    %155 = vector.broadcast %cst_67 : f32 to vector<8x1x128xf32>
    %156 = arith.maximumf %154, %155 : vector<8x1x128xf32>
    %c4_68 = arith.constant 4 : index
    %c0_69 = arith.constant 0 : index
    %157 = memref.load %arg3[%c4_68, %c0_69] : memref<8x8xf32, #tpu.memory_space<smem>>
    %158 = vector.broadcast %157 : f32 to vector<8x1x128xf32>
    %159 = arith.mulf %5, %158 : vector<8x1x128xf32>
    %c4_70 = arith.constant 4 : index
    %c1_71 = arith.constant 1 : index
    %160 = memref.load %arg3[%c4_70, %c1_71] : memref<8x8xf32, #tpu.memory_space<smem>>
    %161 = vector.broadcast %160 : f32 to vector<8x1x128xf32>
    %162 = arith.mulf %6, %161 : vector<8x1x128xf32>
    %163 = arith.addf %159, %162 : vector<8x1x128xf32>
    %c4_72 = arith.constant 4 : index
    %c2_73 = arith.constant 2 : index
    %164 = memref.load %arg3[%c4_72, %c2_73] : memref<8x8xf32, #tpu.memory_space<smem>>
    %165 = vector.broadcast %164 : f32 to vector<8x1x128xf32>
    %166 = arith.mulf %7, %165 : vector<8x1x128xf32>
    %167 = arith.addf %163, %166 : vector<8x1x128xf32>
    %c4_74 = arith.constant 4 : index
    %c3_75 = arith.constant 3 : index
    %168 = memref.load %arg3[%c4_74, %c3_75] : memref<8x8xf32, #tpu.memory_space<smem>>
    %169 = vector.broadcast %168 : f32 to vector<8x1x128xf32>
    %170 = arith.mulf %8, %169 : vector<8x1x128xf32>
    %171 = arith.addf %167, %170 : vector<8x1x128xf32>
    %c4_76 = arith.constant 4 : index
    %c4_77 = arith.constant 4 : index
    %172 = memref.load %arg3[%c4_76, %c4_77] : memref<8x8xf32, #tpu.memory_space<smem>>
    %173 = vector.broadcast %172 : f32 to vector<8x1x128xf32>
    %174 = arith.mulf %9, %173 : vector<8x1x128xf32>
    %175 = arith.addf %171, %174 : vector<8x1x128xf32>
    %c4_78 = arith.constant 4 : index
    %c5_79 = arith.constant 5 : index
    %176 = memref.load %arg3[%c4_78, %c5_79] : memref<8x8xf32, #tpu.memory_space<smem>>
    %177 = vector.broadcast %176 : f32 to vector<8x1x128xf32>
    %178 = arith.mulf %10, %177 : vector<8x1x128xf32>
    %179 = arith.addf %175, %178 : vector<8x1x128xf32>
    %c4_80 = arith.constant 4 : index
    %c6_81 = arith.constant 6 : index
    %180 = memref.load %arg3[%c4_80, %c6_81] : memref<8x8xf32, #tpu.memory_space<smem>>
    %181 = vector.broadcast %180 : f32 to vector<8x1x128xf32>
    %182 = arith.mulf %11, %181 : vector<8x1x128xf32>
    %183 = arith.addf %179, %182 : vector<8x1x128xf32>
    %c4_82 = arith.constant 4 : index
    %c7_83 = arith.constant 7 : index
    %184 = memref.load %arg3[%c4_82, %c7_83] : memref<8x8xf32, #tpu.memory_space<smem>>
    %185 = vector.broadcast %184 : f32 to vector<8x1x128xf32>
    %186 = arith.mulf %12, %185 : vector<8x1x128xf32>
    %187 = arith.addf %183, %186 : vector<8x1x128xf32>
    %c4_84 = arith.constant 4 : index
    %188 = memref.load %arg4[%c4_84] : memref<8xf32, #tpu.memory_space<smem>>
    %189 = vector.broadcast %188 : f32 to vector<8x1x128xf32>
    %190 = arith.addf %187, %189 : vector<8x1x128xf32>
    %cst_85 = arith.constant 0.000000e+00 : f32
    %191 = vector.broadcast %cst_85 : f32 to vector<8x1x128xf32>
    %192 = arith.maximumf %190, %191 : vector<8x1x128xf32>
    %c5_86 = arith.constant 5 : index
    %c0_87 = arith.constant 0 : index
    %193 = memref.load %arg3[%c5_86, %c0_87] : memref<8x8xf32, #tpu.memory_space<smem>>
    %194 = vector.broadcast %193 : f32 to vector<8x1x128xf32>
    %195 = arith.mulf %5, %194 : vector<8x1x128xf32>
    %c5_88 = arith.constant 5 : index
    %c1_89 = arith.constant 1 : index
    %196 = memref.load %arg3[%c5_88, %c1_89] : memref<8x8xf32, #tpu.memory_space<smem>>
    %197 = vector.broadcast %196 : f32 to vector<8x1x128xf32>
    %198 = arith.mulf %6, %197 : vector<8x1x128xf32>
    %199 = arith.addf %195, %198 : vector<8x1x128xf32>
    %c5_90 = arith.constant 5 : index
    %c2_91 = arith.constant 2 : index
    %200 = memref.load %arg3[%c5_90, %c2_91] : memref<8x8xf32, #tpu.memory_space<smem>>
    %201 = vector.broadcast %200 : f32 to vector<8x1x128xf32>
    %202 = arith.mulf %7, %201 : vector<8x1x128xf32>
    %203 = arith.addf %199, %202 : vector<8x1x128xf32>
    %c5_92 = arith.constant 5 : index
    %c3_93 = arith.constant 3 : index
    %204 = memref.load %arg3[%c5_92, %c3_93] : memref<8x8xf32, #tpu.memory_space<smem>>
    %205 = vector.broadcast %204 : f32 to vector<8x1x128xf32>
    %206 = arith.mulf %8, %205 : vector<8x1x128xf32>
    %207 = arith.addf %203, %206 : vector<8x1x128xf32>
    %c5_94 = arith.constant 5 : index
    %c4_95 = arith.constant 4 : index
    %208 = memref.load %arg3[%c5_94, %c4_95] : memref<8x8xf32, #tpu.memory_space<smem>>
    %209 = vector.broadcast %208 : f32 to vector<8x1x128xf32>
    %210 = arith.mulf %9, %209 : vector<8x1x128xf32>
    %211 = arith.addf %207, %210 : vector<8x1x128xf32>
    %c5_96 = arith.constant 5 : index
    %c5_97 = arith.constant 5 : index
    %212 = memref.load %arg3[%c5_96, %c5_97] : memref<8x8xf32, #tpu.memory_space<smem>>
    %213 = vector.broadcast %212 : f32 to vector<8x1x128xf32>
    %214 = arith.mulf %10, %213 : vector<8x1x128xf32>
    %215 = arith.addf %211, %214 : vector<8x1x128xf32>
    %c5_98 = arith.constant 5 : index
    %c6_99 = arith.constant 6 : index
    %216 = memref.load %arg3[%c5_98, %c6_99] : memref<8x8xf32, #tpu.memory_space<smem>>
    %217 = vector.broadcast %216 : f32 to vector<8x1x128xf32>
    %218 = arith.mulf %11, %217 : vector<8x1x128xf32>
    %219 = arith.addf %215, %218 : vector<8x1x128xf32>
    %c5_100 = arith.constant 5 : index
    %c7_101 = arith.constant 7 : index
    %220 = memref.load %arg3[%c5_100, %c7_101] : memref<8x8xf32, #tpu.memory_space<smem>>
    %221 = vector.broadcast %220 : f32 to vector<8x1x128xf32>
    %222 = arith.mulf %12, %221 : vector<8x1x128xf32>
    %223 = arith.addf %219, %222 : vector<8x1x128xf32>
    %c5_102 = arith.constant 5 : index
    %224 = memref.load %arg4[%c5_102] : memref<8xf32, #tpu.memory_space<smem>>
    %225 = vector.broadcast %224 : f32 to vector<8x1x128xf32>
    %226 = arith.addf %223, %225 : vector<8x1x128xf32>
    %cst_103 = arith.constant 0.000000e+00 : f32
    %227 = vector.broadcast %cst_103 : f32 to vector<8x1x128xf32>
    %228 = arith.maximumf %226, %227 : vector<8x1x128xf32>
    %c6_104 = arith.constant 6 : index
    %c0_105 = arith.constant 0 : index
    %229 = memref.load %arg3[%c6_104, %c0_105] : memref<8x8xf32, #tpu.memory_space<smem>>
    %230 = vector.broadcast %229 : f32 to vector<8x1x128xf32>
    %231 = arith.mulf %5, %230 : vector<8x1x128xf32>
    %c6_106 = arith.constant 6 : index
    %c1_107 = arith.constant 1 : index
    %232 = memref.load %arg3[%c6_106, %c1_107] : memref<8x8xf32, #tpu.memory_space<smem>>
    %233 = vector.broadcast %232 : f32 to vector<8x1x128xf32>
    %234 = arith.mulf %6, %233 : vector<8x1x128xf32>
    %235 = arith.addf %231, %234 : vector<8x1x128xf32>
    %c6_108 = arith.constant 6 : index
    %c2_109 = arith.constant 2 : index
    %236 = memref.load %arg3[%c6_108, %c2_109] : memref<8x8xf32, #tpu.memory_space<smem>>
    %237 = vector.broadcast %236 : f32 to vector<8x1x128xf32>
    %238 = arith.mulf %7, %237 : vector<8x1x128xf32>
    %239 = arith.addf %235, %238 : vector<8x1x128xf32>
    %c6_110 = arith.constant 6 : index
    %c3_111 = arith.constant 3 : index
    %240 = memref.load %arg3[%c6_110, %c3_111] : memref<8x8xf32, #tpu.memory_space<smem>>
    %241 = vector.broadcast %240 : f32 to vector<8x1x128xf32>
    %242 = arith.mulf %8, %241 : vector<8x1x128xf32>
    %243 = arith.addf %239, %242 : vector<8x1x128xf32>
    %c6_112 = arith.constant 6 : index
    %c4_113 = arith.constant 4 : index
    %244 = memref.load %arg3[%c6_112, %c4_113] : memref<8x8xf32, #tpu.memory_space<smem>>
    %245 = vector.broadcast %244 : f32 to vector<8x1x128xf32>
    %246 = arith.mulf %9, %245 : vector<8x1x128xf32>
    %247 = arith.addf %243, %246 : vector<8x1x128xf32>
    %c6_114 = arith.constant 6 : index
    %c5_115 = arith.constant 5 : index
    %248 = memref.load %arg3[%c6_114, %c5_115] : memref<8x8xf32, #tpu.memory_space<smem>>
    %249 = vector.broadcast %248 : f32 to vector<8x1x128xf32>
    %250 = arith.mulf %10, %249 : vector<8x1x128xf32>
    %251 = arith.addf %247, %250 : vector<8x1x128xf32>
    %c6_116 = arith.constant 6 : index
    %c6_117 = arith.constant 6 : index
    %252 = memref.load %arg3[%c6_116, %c6_117] : memref<8x8xf32, #tpu.memory_space<smem>>
    %253 = vector.broadcast %252 : f32 to vector<8x1x128xf32>
    %254 = arith.mulf %11, %253 : vector<8x1x128xf32>
    %255 = arith.addf %251, %254 : vector<8x1x128xf32>
    %c6_118 = arith.constant 6 : index
    %c7_119 = arith.constant 7 : index
    %256 = memref.load %arg3[%c6_118, %c7_119] : memref<8x8xf32, #tpu.memory_space<smem>>
    %257 = vector.broadcast %256 : f32 to vector<8x1x128xf32>
    %258 = arith.mulf %12, %257 : vector<8x1x128xf32>
    %259 = arith.addf %255, %258 : vector<8x1x128xf32>
    %c6_120 = arith.constant 6 : index
    %260 = memref.load %arg4[%c6_120] : memref<8xf32, #tpu.memory_space<smem>>
    %261 = vector.broadcast %260 : f32 to vector<8x1x128xf32>
    %262 = arith.addf %259, %261 : vector<8x1x128xf32>
    %cst_121 = arith.constant 0.000000e+00 : f32
    %263 = vector.broadcast %cst_121 : f32 to vector<8x1x128xf32>
    %264 = arith.maximumf %262, %263 : vector<8x1x128xf32>
    %c7_122 = arith.constant 7 : index
    %c0_123 = arith.constant 0 : index
    %265 = memref.load %arg3[%c7_122, %c0_123] : memref<8x8xf32, #tpu.memory_space<smem>>
    %266 = vector.broadcast %265 : f32 to vector<8x1x128xf32>
    %267 = arith.mulf %5, %266 : vector<8x1x128xf32>
    %c7_124 = arith.constant 7 : index
    %c1_125 = arith.constant 1 : index
    %268 = memref.load %arg3[%c7_124, %c1_125] : memref<8x8xf32, #tpu.memory_space<smem>>
    %269 = vector.broadcast %268 : f32 to vector<8x1x128xf32>
    %270 = arith.mulf %6, %269 : vector<8x1x128xf32>
    %271 = arith.addf %267, %270 : vector<8x1x128xf32>
    %c7_126 = arith.constant 7 : index
    %c2_127 = arith.constant 2 : index
    %272 = memref.load %arg3[%c7_126, %c2_127] : memref<8x8xf32, #tpu.memory_space<smem>>
    %273 = vector.broadcast %272 : f32 to vector<8x1x128xf32>
    %274 = arith.mulf %7, %273 : vector<8x1x128xf32>
    %275 = arith.addf %271, %274 : vector<8x1x128xf32>
    %c7_128 = arith.constant 7 : index
    %c3_129 = arith.constant 3 : index
    %276 = memref.load %arg3[%c7_128, %c3_129] : memref<8x8xf32, #tpu.memory_space<smem>>
    %277 = vector.broadcast %276 : f32 to vector<8x1x128xf32>
    %278 = arith.mulf %8, %277 : vector<8x1x128xf32>
    %279 = arith.addf %275, %278 : vector<8x1x128xf32>
    %c7_130 = arith.constant 7 : index
    %c4_131 = arith.constant 4 : index
    %280 = memref.load %arg3[%c7_130, %c4_131] : memref<8x8xf32, #tpu.memory_space<smem>>
    %281 = vector.broadcast %280 : f32 to vector<8x1x128xf32>
    %282 = arith.mulf %9, %281 : vector<8x1x128xf32>
    %283 = arith.addf %279, %282 : vector<8x1x128xf32>
    %c7_132 = arith.constant 7 : index
    %c5_133 = arith.constant 5 : index
    %284 = memref.load %arg3[%c7_132, %c5_133] : memref<8x8xf32, #tpu.memory_space<smem>>
    %285 = vector.broadcast %284 : f32 to vector<8x1x128xf32>
    %286 = arith.mulf %10, %285 : vector<8x1x128xf32>
    %287 = arith.addf %283, %286 : vector<8x1x128xf32>
    %c7_134 = arith.constant 7 : index
    %c6_135 = arith.constant 6 : index
    %288 = memref.load %arg3[%c7_134, %c6_135] : memref<8x8xf32, #tpu.memory_space<smem>>
    %289 = vector.broadcast %288 : f32 to vector<8x1x128xf32>
    %290 = arith.mulf %11, %289 : vector<8x1x128xf32>
    %291 = arith.addf %287, %290 : vector<8x1x128xf32>
    %c7_136 = arith.constant 7 : index
    %c7_137 = arith.constant 7 : index
    %292 = memref.load %arg3[%c7_136, %c7_137] : memref<8x8xf32, #tpu.memory_space<smem>>
    %293 = vector.broadcast %292 : f32 to vector<8x1x128xf32>
    %294 = arith.mulf %12, %293 : vector<8x1x128xf32>
    %295 = arith.addf %291, %294 : vector<8x1x128xf32>
    %c7_138 = arith.constant 7 : index
    %296 = memref.load %arg4[%c7_138] : memref<8xf32, #tpu.memory_space<smem>>
    %297 = vector.broadcast %296 : f32 to vector<8x1x128xf32>
    %298 = arith.addf %295, %297 : vector<8x1x128xf32>
    %cst_139 = arith.constant 0.000000e+00 : f32
    %299 = vector.broadcast %cst_139 : f32 to vector<8x1x128xf32>
    %300 = arith.maximumf %298, %299 : vector<8x1x128xf32>
    %c0_140 = arith.constant 0 : index
    %c0_141 = arith.constant 0 : index
    %301 = memref.load %arg5[%c0_140, %c0_141] : memref<8x8xf32, #tpu.memory_space<smem>>
    %302 = vector.broadcast %301 : f32 to vector<8x1x128xf32>
    %303 = arith.mulf %48, %302 : vector<8x1x128xf32>
    %c0_142 = arith.constant 0 : index
    %c1_143 = arith.constant 1 : index
    %304 = memref.load %arg5[%c0_142, %c1_143] : memref<8x8xf32, #tpu.memory_space<smem>>
    %305 = vector.broadcast %304 : f32 to vector<8x1x128xf32>
    %306 = arith.mulf %84, %305 : vector<8x1x128xf32>
    %307 = arith.addf %303, %306 : vector<8x1x128xf32>
    %c0_144 = arith.constant 0 : index
    %c2_145 = arith.constant 2 : index
    %308 = memref.load %arg5[%c0_144, %c2_145] : memref<8x8xf32, #tpu.memory_space<smem>>
    %309 = vector.broadcast %308 : f32 to vector<8x1x128xf32>
    %310 = arith.mulf %120, %309 : vector<8x1x128xf32>
    %311 = arith.addf %307, %310 : vector<8x1x128xf32>
    %c0_146 = arith.constant 0 : index
    %c3_147 = arith.constant 3 : index
    %312 = memref.load %arg5[%c0_146, %c3_147] : memref<8x8xf32, #tpu.memory_space<smem>>
    %313 = vector.broadcast %312 : f32 to vector<8x1x128xf32>
    %314 = arith.mulf %156, %313 : vector<8x1x128xf32>
    %315 = arith.addf %311, %314 : vector<8x1x128xf32>
    %c0_148 = arith.constant 0 : index
    %c4_149 = arith.constant 4 : index
    %316 = memref.load %arg5[%c0_148, %c4_149] : memref<8x8xf32, #tpu.memory_space<smem>>
    %317 = vector.broadcast %316 : f32 to vector<8x1x128xf32>
    %318 = arith.mulf %192, %317 : vector<8x1x128xf32>
    %319 = arith.addf %315, %318 : vector<8x1x128xf32>
    %c0_150 = arith.constant 0 : index
    %c5_151 = arith.constant 5 : index
    %320 = memref.load %arg5[%c0_150, %c5_151] : memref<8x8xf32, #tpu.memory_space<smem>>
    %321 = vector.broadcast %320 : f32 to vector<8x1x128xf32>
    %322 = arith.mulf %228, %321 : vector<8x1x128xf32>
    %323 = arith.addf %319, %322 : vector<8x1x128xf32>
    %c0_152 = arith.constant 0 : index
    %c6_153 = arith.constant 6 : index
    %324 = memref.load %arg5[%c0_152, %c6_153] : memref<8x8xf32, #tpu.memory_space<smem>>
    %325 = vector.broadcast %324 : f32 to vector<8x1x128xf32>
    %326 = arith.mulf %264, %325 : vector<8x1x128xf32>
    %327 = arith.addf %323, %326 : vector<8x1x128xf32>
    %c0_154 = arith.constant 0 : index
    %c7_155 = arith.constant 7 : index
    %328 = memref.load %arg5[%c0_154, %c7_155] : memref<8x8xf32, #tpu.memory_space<smem>>
    %329 = vector.broadcast %328 : f32 to vector<8x1x128xf32>
    %330 = arith.mulf %300, %329 : vector<8x1x128xf32>
    %331 = arith.addf %327, %330 : vector<8x1x128xf32>
    %c0_156 = arith.constant 0 : index
    %332 = memref.load %arg6[%c0_156] : memref<8xf32, #tpu.memory_space<smem>>
    %333 = vector.broadcast %332 : f32 to vector<8x1x128xf32>
    %334 = arith.addf %331, %333 : vector<8x1x128xf32>
    %335 = arith.addf %334, %5 : vector<8x1x128xf32>
    %c1_157 = arith.constant 1 : index
    %c0_158 = arith.constant 0 : index
    %336 = memref.load %arg5[%c1_157, %c0_158] : memref<8x8xf32, #tpu.memory_space<smem>>
    %337 = vector.broadcast %336 : f32 to vector<8x1x128xf32>
    %338 = arith.mulf %48, %337 : vector<8x1x128xf32>
    %c1_159 = arith.constant 1 : index
    %c1_160 = arith.constant 1 : index
    %339 = memref.load %arg5[%c1_159, %c1_160] : memref<8x8xf32, #tpu.memory_space<smem>>
    %340 = vector.broadcast %339 : f32 to vector<8x1x128xf32>
    %341 = arith.mulf %84, %340 : vector<8x1x128xf32>
    %342 = arith.addf %338, %341 : vector<8x1x128xf32>
    %c1_161 = arith.constant 1 : index
    %c2_162 = arith.constant 2 : index
    %343 = memref.load %arg5[%c1_161, %c2_162] : memref<8x8xf32, #tpu.memory_space<smem>>
    %344 = vector.broadcast %343 : f32 to vector<8x1x128xf32>
    %345 = arith.mulf %120, %344 : vector<8x1x128xf32>
    %346 = arith.addf %342, %345 : vector<8x1x128xf32>
    %c1_163 = arith.constant 1 : index
    %c3_164 = arith.constant 3 : index
    %347 = memref.load %arg5[%c1_163, %c3_164] : memref<8x8xf32, #tpu.memory_space<smem>>
    %348 = vector.broadcast %347 : f32 to vector<8x1x128xf32>
    %349 = arith.mulf %156, %348 : vector<8x1x128xf32>
    %350 = arith.addf %346, %349 : vector<8x1x128xf32>
    %c1_165 = arith.constant 1 : index
    %c4_166 = arith.constant 4 : index
    %351 = memref.load %arg5[%c1_165, %c4_166] : memref<8x8xf32, #tpu.memory_space<smem>>
    %352 = vector.broadcast %351 : f32 to vector<8x1x128xf32>
    %353 = arith.mulf %192, %352 : vector<8x1x128xf32>
    %354 = arith.addf %350, %353 : vector<8x1x128xf32>
    %c1_167 = arith.constant 1 : index
    %c5_168 = arith.constant 5 : index
    %355 = memref.load %arg5[%c1_167, %c5_168] : memref<8x8xf32, #tpu.memory_space<smem>>
    %356 = vector.broadcast %355 : f32 to vector<8x1x128xf32>
    %357 = arith.mulf %228, %356 : vector<8x1x128xf32>
    %358 = arith.addf %354, %357 : vector<8x1x128xf32>
    %c1_169 = arith.constant 1 : index
    %c6_170 = arith.constant 6 : index
    %359 = memref.load %arg5[%c1_169, %c6_170] : memref<8x8xf32, #tpu.memory_space<smem>>
    %360 = vector.broadcast %359 : f32 to vector<8x1x128xf32>
    %361 = arith.mulf %264, %360 : vector<8x1x128xf32>
    %362 = arith.addf %358, %361 : vector<8x1x128xf32>
    %c1_171 = arith.constant 1 : index
    %c7_172 = arith.constant 7 : index
    %363 = memref.load %arg5[%c1_171, %c7_172] : memref<8x8xf32, #tpu.memory_space<smem>>
    %364 = vector.broadcast %363 : f32 to vector<8x1x128xf32>
    %365 = arith.mulf %300, %364 : vector<8x1x128xf32>
    %366 = arith.addf %362, %365 : vector<8x1x128xf32>
    %c1_173 = arith.constant 1 : index
    %367 = memref.load %arg6[%c1_173] : memref<8xf32, #tpu.memory_space<smem>>
    %368 = vector.broadcast %367 : f32 to vector<8x1x128xf32>
    %369 = arith.addf %366, %368 : vector<8x1x128xf32>
    %370 = arith.addf %369, %6 : vector<8x1x128xf32>
    %c2_174 = arith.constant 2 : index
    %c0_175 = arith.constant 0 : index
    %371 = memref.load %arg5[%c2_174, %c0_175] : memref<8x8xf32, #tpu.memory_space<smem>>
    %372 = vector.broadcast %371 : f32 to vector<8x1x128xf32>
    %373 = arith.mulf %48, %372 : vector<8x1x128xf32>
    %c2_176 = arith.constant 2 : index
    %c1_177 = arith.constant 1 : index
    %374 = memref.load %arg5[%c2_176, %c1_177] : memref<8x8xf32, #tpu.memory_space<smem>>
    %375 = vector.broadcast %374 : f32 to vector<8x1x128xf32>
    %376 = arith.mulf %84, %375 : vector<8x1x128xf32>
    %377 = arith.addf %373, %376 : vector<8x1x128xf32>
    %c2_178 = arith.constant 2 : index
    %c2_179 = arith.constant 2 : index
    %378 = memref.load %arg5[%c2_178, %c2_179] : memref<8x8xf32, #tpu.memory_space<smem>>
    %379 = vector.broadcast %378 : f32 to vector<8x1x128xf32>
    %380 = arith.mulf %120, %379 : vector<8x1x128xf32>
    %381 = arith.addf %377, %380 : vector<8x1x128xf32>
    %c2_180 = arith.constant 2 : index
    %c3_181 = arith.constant 3 : index
    %382 = memref.load %arg5[%c2_180, %c3_181] : memref<8x8xf32, #tpu.memory_space<smem>>
    %383 = vector.broadcast %382 : f32 to vector<8x1x128xf32>
    %384 = arith.mulf %156, %383 : vector<8x1x128xf32>
    %385 = arith.addf %381, %384 : vector<8x1x128xf32>
    %c2_182 = arith.constant 2 : index
    %c4_183 = arith.constant 4 : index
    %386 = memref.load %arg5[%c2_182, %c4_183] : memref<8x8xf32, #tpu.memory_space<smem>>
    %387 = vector.broadcast %386 : f32 to vector<8x1x128xf32>
    %388 = arith.mulf %192, %387 : vector<8x1x128xf32>
    %389 = arith.addf %385, %388 : vector<8x1x128xf32>
    %c2_184 = arith.constant 2 : index
    %c5_185 = arith.constant 5 : index
    %390 = memref.load %arg5[%c2_184, %c5_185] : memref<8x8xf32, #tpu.memory_space<smem>>
    %391 = vector.broadcast %390 : f32 to vector<8x1x128xf32>
    %392 = arith.mulf %228, %391 : vector<8x1x128xf32>
    %393 = arith.addf %389, %392 : vector<8x1x128xf32>
    %c2_186 = arith.constant 2 : index
    %c6_187 = arith.constant 6 : index
    %394 = memref.load %arg5[%c2_186, %c6_187] : memref<8x8xf32, #tpu.memory_space<smem>>
    %395 = vector.broadcast %394 : f32 to vector<8x1x128xf32>
    %396 = arith.mulf %264, %395 : vector<8x1x128xf32>
    %397 = arith.addf %393, %396 : vector<8x1x128xf32>
    %c2_188 = arith.constant 2 : index
    %c7_189 = arith.constant 7 : index
    %398 = memref.load %arg5[%c2_188, %c7_189] : memref<8x8xf32, #tpu.memory_space<smem>>
    %399 = vector.broadcast %398 : f32 to vector<8x1x128xf32>
    %400 = arith.mulf %300, %399 : vector<8x1x128xf32>
    %401 = arith.addf %397, %400 : vector<8x1x128xf32>
    %c2_190 = arith.constant 2 : index
    %402 = memref.load %arg6[%c2_190] : memref<8xf32, #tpu.memory_space<smem>>
    %403 = vector.broadcast %402 : f32 to vector<8x1x128xf32>
    %404 = arith.addf %401, %403 : vector<8x1x128xf32>
    %405 = arith.addf %404, %7 : vector<8x1x128xf32>
    %c3_191 = arith.constant 3 : index
    %c0_192 = arith.constant 0 : index
    %406 = memref.load %arg5[%c3_191, %c0_192] : memref<8x8xf32, #tpu.memory_space<smem>>
    %407 = vector.broadcast %406 : f32 to vector<8x1x128xf32>
    %408 = arith.mulf %48, %407 : vector<8x1x128xf32>
    %c3_193 = arith.constant 3 : index
    %c1_194 = arith.constant 1 : index
    %409 = memref.load %arg5[%c3_193, %c1_194] : memref<8x8xf32, #tpu.memory_space<smem>>
    %410 = vector.broadcast %409 : f32 to vector<8x1x128xf32>
    %411 = arith.mulf %84, %410 : vector<8x1x128xf32>
    %412 = arith.addf %408, %411 : vector<8x1x128xf32>
    %c3_195 = arith.constant 3 : index
    %c2_196 = arith.constant 2 : index
    %413 = memref.load %arg5[%c3_195, %c2_196] : memref<8x8xf32, #tpu.memory_space<smem>>
    %414 = vector.broadcast %413 : f32 to vector<8x1x128xf32>
    %415 = arith.mulf %120, %414 : vector<8x1x128xf32>
    %416 = arith.addf %412, %415 : vector<8x1x128xf32>
    %c3_197 = arith.constant 3 : index
    %c3_198 = arith.constant 3 : index
    %417 = memref.load %arg5[%c3_197, %c3_198] : memref<8x8xf32, #tpu.memory_space<smem>>
    %418 = vector.broadcast %417 : f32 to vector<8x1x128xf32>
    %419 = arith.mulf %156, %418 : vector<8x1x128xf32>
    %420 = arith.addf %416, %419 : vector<8x1x128xf32>
    %c3_199 = arith.constant 3 : index
    %c4_200 = arith.constant 4 : index
    %421 = memref.load %arg5[%c3_199, %c4_200] : memref<8x8xf32, #tpu.memory_space<smem>>
    %422 = vector.broadcast %421 : f32 to vector<8x1x128xf32>
    %423 = arith.mulf %192, %422 : vector<8x1x128xf32>
    %424 = arith.addf %420, %423 : vector<8x1x128xf32>
    %c3_201 = arith.constant 3 : index
    %c5_202 = arith.constant 5 : index
    %425 = memref.load %arg5[%c3_201, %c5_202] : memref<8x8xf32, #tpu.memory_space<smem>>
    %426 = vector.broadcast %425 : f32 to vector<8x1x128xf32>
    %427 = arith.mulf %228, %426 : vector<8x1x128xf32>
    %428 = arith.addf %424, %427 : vector<8x1x128xf32>
    %c3_203 = arith.constant 3 : index
    %c6_204 = arith.constant 6 : index
    %429 = memref.load %arg5[%c3_203, %c6_204] : memref<8x8xf32, #tpu.memory_space<smem>>
    %430 = vector.broadcast %429 : f32 to vector<8x1x128xf32>
    %431 = arith.mulf %264, %430 : vector<8x1x128xf32>
    %432 = arith.addf %428, %431 : vector<8x1x128xf32>
    %c3_205 = arith.constant 3 : index
    %c7_206 = arith.constant 7 : index
    %433 = memref.load %arg5[%c3_205, %c7_206] : memref<8x8xf32, #tpu.memory_space<smem>>
    %434 = vector.broadcast %433 : f32 to vector<8x1x128xf32>
    %435 = arith.mulf %300, %434 : vector<8x1x128xf32>
    %436 = arith.addf %432, %435 : vector<8x1x128xf32>
    %c3_207 = arith.constant 3 : index
    %437 = memref.load %arg6[%c3_207] : memref<8xf32, #tpu.memory_space<smem>>
    %438 = vector.broadcast %437 : f32 to vector<8x1x128xf32>
    %439 = arith.addf %436, %438 : vector<8x1x128xf32>
    %440 = arith.addf %439, %8 : vector<8x1x128xf32>
    %c4_208 = arith.constant 4 : index
    %c0_209 = arith.constant 0 : index
    %441 = memref.load %arg5[%c4_208, %c0_209] : memref<8x8xf32, #tpu.memory_space<smem>>
    %442 = vector.broadcast %441 : f32 to vector<8x1x128xf32>
    %443 = arith.mulf %48, %442 : vector<8x1x128xf32>
    %c4_210 = arith.constant 4 : index
    %c1_211 = arith.constant 1 : index
    %444 = memref.load %arg5[%c4_210, %c1_211] : memref<8x8xf32, #tpu.memory_space<smem>>
    %445 = vector.broadcast %444 : f32 to vector<8x1x128xf32>
    %446 = arith.mulf %84, %445 : vector<8x1x128xf32>
    %447 = arith.addf %443, %446 : vector<8x1x128xf32>
    %c4_212 = arith.constant 4 : index
    %c2_213 = arith.constant 2 : index
    %448 = memref.load %arg5[%c4_212, %c2_213] : memref<8x8xf32, #tpu.memory_space<smem>>
    %449 = vector.broadcast %448 : f32 to vector<8x1x128xf32>
    %450 = arith.mulf %120, %449 : vector<8x1x128xf32>
    %451 = arith.addf %447, %450 : vector<8x1x128xf32>
    %c4_214 = arith.constant 4 : index
    %c3_215 = arith.constant 3 : index
    %452 = memref.load %arg5[%c4_214, %c3_215] : memref<8x8xf32, #tpu.memory_space<smem>>
    %453 = vector.broadcast %452 : f32 to vector<8x1x128xf32>
    %454 = arith.mulf %156, %453 : vector<8x1x128xf32>
    %455 = arith.addf %451, %454 : vector<8x1x128xf32>
    %c4_216 = arith.constant 4 : index
    %c4_217 = arith.constant 4 : index
    %456 = memref.load %arg5[%c4_216, %c4_217] : memref<8x8xf32, #tpu.memory_space<smem>>
    %457 = vector.broadcast %456 : f32 to vector<8x1x128xf32>
    %458 = arith.mulf %192, %457 : vector<8x1x128xf32>
    %459 = arith.addf %455, %458 : vector<8x1x128xf32>
    %c4_218 = arith.constant 4 : index
    %c5_219 = arith.constant 5 : index
    %460 = memref.load %arg5[%c4_218, %c5_219] : memref<8x8xf32, #tpu.memory_space<smem>>
    %461 = vector.broadcast %460 : f32 to vector<8x1x128xf32>
    %462 = arith.mulf %228, %461 : vector<8x1x128xf32>
    %463 = arith.addf %459, %462 : vector<8x1x128xf32>
    %c4_220 = arith.constant 4 : index
    %c6_221 = arith.constant 6 : index
    %464 = memref.load %arg5[%c4_220, %c6_221] : memref<8x8xf32, #tpu.memory_space<smem>>
    %465 = vector.broadcast %464 : f32 to vector<8x1x128xf32>
    %466 = arith.mulf %264, %465 : vector<8x1x128xf32>
    %467 = arith.addf %463, %466 : vector<8x1x128xf32>
    %c4_222 = arith.constant 4 : index
    %c7_223 = arith.constant 7 : index
    %468 = memref.load %arg5[%c4_222, %c7_223] : memref<8x8xf32, #tpu.memory_space<smem>>
    %469 = vector.broadcast %468 : f32 to vector<8x1x128xf32>
    %470 = arith.mulf %300, %469 : vector<8x1x128xf32>
    %471 = arith.addf %467, %470 : vector<8x1x128xf32>
    %c4_224 = arith.constant 4 : index
    %472 = memref.load %arg6[%c4_224] : memref<8xf32, #tpu.memory_space<smem>>
    %473 = vector.broadcast %472 : f32 to vector<8x1x128xf32>
    %474 = arith.addf %471, %473 : vector<8x1x128xf32>
    %475 = arith.addf %474, %9 : vector<8x1x128xf32>
    %c5_225 = arith.constant 5 : index
    %c0_226 = arith.constant 0 : index
    %476 = memref.load %arg5[%c5_225, %c0_226] : memref<8x8xf32, #tpu.memory_space<smem>>
    %477 = vector.broadcast %476 : f32 to vector<8x1x128xf32>
    %478 = arith.mulf %48, %477 : vector<8x1x128xf32>
    %c5_227 = arith.constant 5 : index
    %c1_228 = arith.constant 1 : index
    %479 = memref.load %arg5[%c5_227, %c1_228] : memref<8x8xf32, #tpu.memory_space<smem>>
    %480 = vector.broadcast %479 : f32 to vector<8x1x128xf32>
    %481 = arith.mulf %84, %480 : vector<8x1x128xf32>
    %482 = arith.addf %478, %481 : vector<8x1x128xf32>
    %c5_229 = arith.constant 5 : index
    %c2_230 = arith.constant 2 : index
    %483 = memref.load %arg5[%c5_229, %c2_230] : memref<8x8xf32, #tpu.memory_space<smem>>
    %484 = vector.broadcast %483 : f32 to vector<8x1x128xf32>
    %485 = arith.mulf %120, %484 : vector<8x1x128xf32>
    %486 = arith.addf %482, %485 : vector<8x1x128xf32>
    %c5_231 = arith.constant 5 : index
    %c3_232 = arith.constant 3 : index
    %487 = memref.load %arg5[%c5_231, %c3_232] : memref<8x8xf32, #tpu.memory_space<smem>>
    %488 = vector.broadcast %487 : f32 to vector<8x1x128xf32>
    %489 = arith.mulf %156, %488 : vector<8x1x128xf32>
    %490 = arith.addf %486, %489 : vector<8x1x128xf32>
    %c5_233 = arith.constant 5 : index
    %c4_234 = arith.constant 4 : index
    %491 = memref.load %arg5[%c5_233, %c4_234] : memref<8x8xf32, #tpu.memory_space<smem>>
    %492 = vector.broadcast %491 : f32 to vector<8x1x128xf32>
    %493 = arith.mulf %192, %492 : vector<8x1x128xf32>
    %494 = arith.addf %490, %493 : vector<8x1x128xf32>
    %c5_235 = arith.constant 5 : index
    %c5_236 = arith.constant 5 : index
    %495 = memref.load %arg5[%c5_235, %c5_236] : memref<8x8xf32, #tpu.memory_space<smem>>
    %496 = vector.broadcast %495 : f32 to vector<8x1x128xf32>
    %497 = arith.mulf %228, %496 : vector<8x1x128xf32>
    %498 = arith.addf %494, %497 : vector<8x1x128xf32>
    %c5_237 = arith.constant 5 : index
    %c6_238 = arith.constant 6 : index
    %499 = memref.load %arg5[%c5_237, %c6_238] : memref<8x8xf32, #tpu.memory_space<smem>>
    %500 = vector.broadcast %499 : f32 to vector<8x1x128xf32>
    %501 = arith.mulf %264, %500 : vector<8x1x128xf32>
    %502 = arith.addf %498, %501 : vector<8x1x128xf32>
    %c5_239 = arith.constant 5 : index
    %c7_240 = arith.constant 7 : index
    %503 = memref.load %arg5[%c5_239, %c7_240] : memref<8x8xf32, #tpu.memory_space<smem>>
    %504 = vector.broadcast %503 : f32 to vector<8x1x128xf32>
    %505 = arith.mulf %300, %504 : vector<8x1x128xf32>
    %506 = arith.addf %502, %505 : vector<8x1x128xf32>
    %c5_241 = arith.constant 5 : index
    %507 = memref.load %arg6[%c5_241] : memref<8xf32, #tpu.memory_space<smem>>
    %508 = vector.broadcast %507 : f32 to vector<8x1x128xf32>
    %509 = arith.addf %506, %508 : vector<8x1x128xf32>
    %510 = arith.addf %509, %10 : vector<8x1x128xf32>
    %c6_242 = arith.constant 6 : index
    %c0_243 = arith.constant 0 : index
    %511 = memref.load %arg5[%c6_242, %c0_243] : memref<8x8xf32, #tpu.memory_space<smem>>
    %512 = vector.broadcast %511 : f32 to vector<8x1x128xf32>
    %513 = arith.mulf %48, %512 : vector<8x1x128xf32>
    %c6_244 = arith.constant 6 : index
    %c1_245 = arith.constant 1 : index
    %514 = memref.load %arg5[%c6_244, %c1_245] : memref<8x8xf32, #tpu.memory_space<smem>>
    %515 = vector.broadcast %514 : f32 to vector<8x1x128xf32>
    %516 = arith.mulf %84, %515 : vector<8x1x128xf32>
    %517 = arith.addf %513, %516 : vector<8x1x128xf32>
    %c6_246 = arith.constant 6 : index
    %c2_247 = arith.constant 2 : index
    %518 = memref.load %arg5[%c6_246, %c2_247] : memref<8x8xf32, #tpu.memory_space<smem>>
    %519 = vector.broadcast %518 : f32 to vector<8x1x128xf32>
    %520 = arith.mulf %120, %519 : vector<8x1x128xf32>
    %521 = arith.addf %517, %520 : vector<8x1x128xf32>
    %c6_248 = arith.constant 6 : index
    %c3_249 = arith.constant 3 : index
    %522 = memref.load %arg5[%c6_248, %c3_249] : memref<8x8xf32, #tpu.memory_space<smem>>
    %523 = vector.broadcast %522 : f32 to vector<8x1x128xf32>
    %524 = arith.mulf %156, %523 : vector<8x1x128xf32>
    %525 = arith.addf %521, %524 : vector<8x1x128xf32>
    %c6_250 = arith.constant 6 : index
    %c4_251 = arith.constant 4 : index
    %526 = memref.load %arg5[%c6_250, %c4_251] : memref<8x8xf32, #tpu.memory_space<smem>>
    %527 = vector.broadcast %526 : f32 to vector<8x1x128xf32>
    %528 = arith.mulf %192, %527 : vector<8x1x128xf32>
    %529 = arith.addf %525, %528 : vector<8x1x128xf32>
    %c6_252 = arith.constant 6 : index
    %c5_253 = arith.constant 5 : index
    %530 = memref.load %arg5[%c6_252, %c5_253] : memref<8x8xf32, #tpu.memory_space<smem>>
    %531 = vector.broadcast %530 : f32 to vector<8x1x128xf32>
    %532 = arith.mulf %228, %531 : vector<8x1x128xf32>
    %533 = arith.addf %529, %532 : vector<8x1x128xf32>
    %c6_254 = arith.constant 6 : index
    %c6_255 = arith.constant 6 : index
    %534 = memref.load %arg5[%c6_254, %c6_255] : memref<8x8xf32, #tpu.memory_space<smem>>
    %535 = vector.broadcast %534 : f32 to vector<8x1x128xf32>
    %536 = arith.mulf %264, %535 : vector<8x1x128xf32>
    %537 = arith.addf %533, %536 : vector<8x1x128xf32>
    %c6_256 = arith.constant 6 : index
    %c7_257 = arith.constant 7 : index
    %538 = memref.load %arg5[%c6_256, %c7_257] : memref<8x8xf32, #tpu.memory_space<smem>>
    %539 = vector.broadcast %538 : f32 to vector<8x1x128xf32>
    %540 = arith.mulf %300, %539 : vector<8x1x128xf32>
    %541 = arith.addf %537, %540 : vector<8x1x128xf32>
    %c6_258 = arith.constant 6 : index
    %542 = memref.load %arg6[%c6_258] : memref<8xf32, #tpu.memory_space<smem>>
    %543 = vector.broadcast %542 : f32 to vector<8x1x128xf32>
    %544 = arith.addf %541, %543 : vector<8x1x128xf32>
    %545 = arith.addf %544, %11 : vector<8x1x128xf32>
    %c7_259 = arith.constant 7 : index
    %c0_260 = arith.constant 0 : index
    %546 = memref.load %arg5[%c7_259, %c0_260] : memref<8x8xf32, #tpu.memory_space<smem>>
    %547 = vector.broadcast %546 : f32 to vector<8x1x128xf32>
    %548 = arith.mulf %48, %547 : vector<8x1x128xf32>
    %c7_261 = arith.constant 7 : index
    %c1_262 = arith.constant 1 : index
    %549 = memref.load %arg5[%c7_261, %c1_262] : memref<8x8xf32, #tpu.memory_space<smem>>
    %550 = vector.broadcast %549 : f32 to vector<8x1x128xf32>
    %551 = arith.mulf %84, %550 : vector<8x1x128xf32>
    %552 = arith.addf %548, %551 : vector<8x1x128xf32>
    %c7_263 = arith.constant 7 : index
    %c2_264 = arith.constant 2 : index
    %553 = memref.load %arg5[%c7_263, %c2_264] : memref<8x8xf32, #tpu.memory_space<smem>>
    %554 = vector.broadcast %553 : f32 to vector<8x1x128xf32>
    %555 = arith.mulf %120, %554 : vector<8x1x128xf32>
    %556 = arith.addf %552, %555 : vector<8x1x128xf32>
    %c7_265 = arith.constant 7 : index
    %c3_266 = arith.constant 3 : index
    %557 = memref.load %arg5[%c7_265, %c3_266] : memref<8x8xf32, #tpu.memory_space<smem>>
    %558 = vector.broadcast %557 : f32 to vector<8x1x128xf32>
    %559 = arith.mulf %156, %558 : vector<8x1x128xf32>
    %560 = arith.addf %556, %559 : vector<8x1x128xf32>
    %c7_267 = arith.constant 7 : index
    %c4_268 = arith.constant 4 : index
    %561 = memref.load %arg5[%c7_267, %c4_268] : memref<8x8xf32, #tpu.memory_space<smem>>
    %562 = vector.broadcast %561 : f32 to vector<8x1x128xf32>
    %563 = arith.mulf %192, %562 : vector<8x1x128xf32>
    %564 = arith.addf %560, %563 : vector<8x1x128xf32>
    %c7_269 = arith.constant 7 : index
    %c5_270 = arith.constant 5 : index
    %565 = memref.load %arg5[%c7_269, %c5_270] : memref<8x8xf32, #tpu.memory_space<smem>>
    %566 = vector.broadcast %565 : f32 to vector<8x1x128xf32>
    %567 = arith.mulf %228, %566 : vector<8x1x128xf32>
    %568 = arith.addf %564, %567 : vector<8x1x128xf32>
    %c7_271 = arith.constant 7 : index
    %c6_272 = arith.constant 6 : index
    %569 = memref.load %arg5[%c7_271, %c6_272] : memref<8x8xf32, #tpu.memory_space<smem>>
    %570 = vector.broadcast %569 : f32 to vector<8x1x128xf32>
    %571 = arith.mulf %264, %570 : vector<8x1x128xf32>
    %572 = arith.addf %568, %571 : vector<8x1x128xf32>
    %c7_273 = arith.constant 7 : index
    %c7_274 = arith.constant 7 : index
    %573 = memref.load %arg5[%c7_273, %c7_274] : memref<8x8xf32, #tpu.memory_space<smem>>
    %574 = vector.broadcast %573 : f32 to vector<8x1x128xf32>
    %575 = arith.mulf %300, %574 : vector<8x1x128xf32>
    %576 = arith.addf %572, %575 : vector<8x1x128xf32>
    %c7_275 = arith.constant 7 : index
    %577 = memref.load %arg6[%c7_275] : memref<8xf32, #tpu.memory_space<smem>>
    %578 = vector.broadcast %577 : f32 to vector<8x1x128xf32>
    %579 = arith.addf %576, %578 : vector<8x1x128xf32>
    %580 = arith.addf %579, %12 : vector<8x1x128xf32>
    %581 = tpu.concatenate %335, %370, %405, %440, %475, %510, %545, %580 in 1 : vector<8x1x128xf32>, vector<8x1x128xf32>, vector<8x1x128xf32>, vector<8x1x128xf32>, vector<8x1x128xf32>, vector<8x1x128xf32>, vector<8x1x128xf32>, vector<8x1x128xf32> -> vector<8x8x128xf32>
    %582 = vector.shape_cast %581 : vector<8x8x128xf32> to vector<64x128xf32>
    %583 = arith.truncf %582 : vector<64x128xf32> to vector<64x128xbf16>
    %c0_276 = arith.constant 0 : index
    %c0_277 = arith.constant 0 : index
    %584 = vector.load %arg7[%c0_276, %c0_277] : memref<128x128xbf16, #tpu.memory_space<vmem>>, vector<128x128xbf16>
    %cst_278 = arith.constant dense<0.000000e+00> : vector<64x128xf32>
    %585 = tpu.matmul %583, %584, %cst_278 {dimension_numbers = #tpu.dot_dimension_numbers<[1], [0], [0], [1], [0, 0, 1, 1], [], []>} : vector<64x128xbf16>, vector<128x128xbf16>, vector<64x128xf32> -> vector<64x128xf32>
    %c0_279 = arith.constant 0 : index
    %c0_280 = arith.constant 0 : index
    %586 = vector.load %arg8[%c0_279, %c0_280] : memref<1x128xf32, #tpu.memory_space<vmem>>, vector<1x128xf32>
    %587 = vector.broadcast %586 : vector<1x128xf32> to vector<64x128xf32>
    %588 = arith.addf %585, %587 : vector<64x128xf32>
    %cst_281 = arith.constant 0.000000e+00 : f32
    %589 = vector.broadcast %cst_281 : f32 to vector<64x128xf32>
    %590 = arith.maximumf %588, %589 : vector<64x128xf32>
    %591 = arith.truncf %590 : vector<64x128xf32> to vector<64x128xbf16>
    %c0_282 = arith.constant 0 : index
    %c0_283 = arith.constant 0 : index
    %592 = vector.load %arg9[%c0_282, %c0_283] : memref<128x128xbf16, #tpu.memory_space<vmem>>, vector<128x128xbf16>
    %cst_284 = arith.constant dense<0.000000e+00> : vector<64x128xf32>
    %593 = tpu.matmul %591, %592, %cst_284 {dimension_numbers = #tpu.dot_dimension_numbers<[1], [0], [0], [1], [0, 0, 1, 1], [], []>} : vector<64x128xbf16>, vector<128x128xbf16>, vector<64x128xf32> -> vector<64x128xf32>
    %c0_285 = arith.constant 0 : index
    %c0_286 = arith.constant 0 : index
    %594 = vector.load %arg10[%c0_285, %c0_286] : memref<1x128xf32, #tpu.memory_space<vmem>>, vector<1x128xf32>
    %595 = vector.broadcast %594 : vector<1x128xf32> to vector<64x128xf32>
    %596 = arith.addf %593, %595 : vector<64x128xf32>
    %597 = arith.addf %596, %582 : vector<64x128xf32>
    %598 = vector.shape_cast %597 : vector<64x128xf32> to vector<8x8x128xf32>
    %c0_287 = arith.constant 0 : index
    %c0_288 = arith.constant 0 : index
    %c0_289 = arith.constant 0 : index
    %599 = vector.load %arg11[%c0_287, %c0_288, %c0_289] : memref<8x8x128xf32, #tpu.memory_space<vmem>>, vector<8x8x128xf32>
    tpu.vector_store %arg11[%c0_287, %c0_288, %c0_289], %598 {strides = array<i32>} : memref<8x8x128xf32, #tpu.memory_space<vmem>>, vector<8x8x128xf32>,
    return
  }
  func.func @transform_0(%arg0: i32) -> (i32, i32, i32) {
    %c0_i32 = arith.constant 0 : i32
    %c0_i32_0 = arith.constant 0 : i32
    %c0_i32_1 = arith.constant 0 : i32
    return %arg0, %c0_i32, %c0_i32_0 : i32, i32, i32
  }
  func.func @transform_1(%arg0: i32) -> (i32, i32) {
    %c0_i32 = arith.constant 0 : i32
    %c0_i32_0 = arith.constant 0 : i32
    %c0_i32_1 = arith.constant 0 : i32
    return %c0_i32, %c0_i32_0 : i32, i32
  }
  func.func @transform_2(%arg0: i32) -> (i32, i32) {
    %c0_i32 = arith.constant 0 : i32
    %c0_i32_0 = arith.constant 0 : i32
    %c0_i32_1 = arith.constant 0 : i32
    return %c0_i32, %c0_i32_0 : i32, i32
  }
  func.func @transform_3(%arg0: i32) -> i32 {
    %c0_i32 = arith.constant 0 : i32
    %c0_i32_0 = arith.constant 0 : i32
    return %c0_i32 : i32
  }
  func.func @transform_4(%arg0: i32) -> (i32, i32) {
    %c0_i32 = arith.constant 0 : i32
    %c0_i32_0 = arith.constant 0 : i32
    %c0_i32_1 = arith.constant 0 : i32
    return %c0_i32, %c0_i32_0 : i32, i32
  }
  func.func @transform_5(%arg0: i32) -> i32 {
    %c0_i32 = arith.constant 0 : i32
    %c0_i32_0 = arith.constant 0 : i32
    return %c0_i32 : i32
  }
  func.func @transform_6(%arg0: i32) -> (i32, i32) {
    %c0_i32 = arith.constant 0 : i32
    %c0_i32_0 = arith.constant 0 : i32
    %c0_i32_1 = arith.constant 0 : i32
    return %c0_i32, %c0_i32_0 : i32, i32
  }
  func.func @transform_7(%arg0: i32) -> (i32, i32) {
    %c0_i32 = arith.constant 0 : i32
    %c0_i32_0 = arith.constant 0 : i32
    %c0_i32_1 = arith.constant 0 : i32
    return %c0_i32, %c0_i32_0 : i32, i32
  }
  func.func @transform_8(%arg0: i32) -> (i32, i32) {
    %c0_i32 = arith.constant 0 : i32
    %c0_i32_0 = arith.constant 0 : i32
    %c0_i32_1 = arith.constant 0 : i32
    return %c0_i32, %c0_i32_0 : i32, i32
  }
  func.func @transform_9(%arg0: i32) -> (i32, i32) {
    %c0_i32 = arith.constant 0 : i32
    %c0_i32_0 = arith.constant 0 : i32
    %c0_i32_1 = arith.constant 0 : i32
    return %c0_i32, %c0_i32_0 : i32, i32
  }
  func.func @transform_10(%arg0: i32) -> (i32, i32, i32) {
    %c0_i32 = arith.constant 0 : i32
    %c0_i32_0 = arith.constant 0 : i32
    %c0_i32_1 = arith.constant 0 : i32
    return %arg0, %c0_i32, %c0_i32_0 : i32, i32, i32
  }
}

</mosaic_0001>

<llo_original>
// kernel: mlp_mix_enrich.1
$region0: #{mlp_mix_enrich.1}
  #allocation0 [shape = 'u32[]', space=smem, size = 0x4, offset = 0x4, fixed_abs, tag = 'smem constant byte address 0x4 - core index']
  #allocation1 [shape = 'u32[72,128]{1,0:T(1,128)}', space=vmem, size = 0x9000, scoped, tag = 'internal scratch']
  %s0 = inlined_call_operand.vmem [shape: f32[8,8,128], index: 0, kind: input, shape index: {}]
  %s1 = inlined_call_operand.vmem [shape: f32[8,128], index: 1, kind: input, shape index: {}]
  %s2 = inlined_call_operand.vmem [shape: f32[8,8], index: 2, kind: input, shape index: {}]
  %s3 = inlined_call_operand.vmem [shape: f32[8], index: 3, kind: input, shape index: {}]
  %s4 = inlined_call_operand.vmem [shape: f32[8,8], index: 4, kind: input, shape index: {}]
  %s5 = inlined_call_operand.vmem [shape: f32[8], index: 5, kind: input, shape index: {}]
  %s6 = inlined_call_operand.vmem [shape: bf16[128,128], index: 6, kind: input, shape index: {}]
  %s7 = inlined_call_operand.vmem [shape: f32[1,128], index: 7, kind: input, shape index: {}]
  %s8 = inlined_call_operand.vmem [shape: bf16[128,128], index: 8, kind: input, shape index: {}]
  %s9 = inlined_call_operand.vmem [shape: f32[1,128], index: 9, kind: input, shape index: {}]
  %s10 = inlined_call_operand.hbm [shape: f32[8,8,128], index: 10, kind: output, shape index: {}]
  %s11 = sld [smem:[#allocation0]]
  $region66: #{mlp_mix_enrich.1} parent=0
    _
  %s13 = ssub.s32 1, %s11
  %s14 = scalar_select 0, %s13, %s11
  $region1: #{mlp_mix_enrich.1} parent=0
    #allocation2 [shape = 'u8[4096]{0}', space=smem, size = 0x1000, scoped, tag = 'input window, operand 2, single buffered']
    #allocation3 [shape = 's32[1]{0}', space=sflag, size = 0x4, scoped, tag = 'scoped memory for mlp_mix_enrich.1']
    #allocation4 [shape = 's32[1]{0}', space=sflag, size = 0x4, scoped, tag = 'scoped memory for mlp_mix_enrich.1']
    #allocation5 [shape = 'u8[512]{0}', space=smem, size = 0x200, scoped, tag = 'input window, operand 3, single buffered']
    #allocation6 [shape = 's32[1]{0}', space=sflag, size = 0x4, scoped, tag = 'scoped memory for mlp_mix_enrich.1']
    #allocation7 [shape = 'u8[4096]{0}', space=smem, size = 0x1000, scoped, tag = 'input window, operand 4, single buffered']
    #allocation8 [shape = 'u8[512]{0}', space=smem, size = 0x200, scoped, tag = 'input window, operand 5, single buffered']
    #allocation9 [shape = 's32[1]{0}', space=sflag, size = 0x4, scoped, tag = 'scoped memory for mlp_mix_enrich.1']
    #allocation10 [shape = 'u8[32768]{0}', space=vmem, size = 0x8000, scoped, tag = 'output window, operand 0, single buffered']
    %15 = vsyncpa [#allocation4], 0
    %16 = vsyncpa [#allocation6], 0
    %17 = vsyncpa [#allocation9], 0
    %18 = vsyncpa [#allocation3], 0
    // Predicated region
    $region2: #{mlp_mix_enrich.1} parent=1 // pred_check
      _
    $region3: #{mlp_mix_enrich.1} parent=1 // pred_check_branch
      %20 = sbr.rel (0) target = $region5
    $region4: #{mlp_mix_enrich.1} parent=1 // pred_region
      _
    $region5: #{mlp_mix_enrich.1} parent=1 // pred_fallthru
      _
    // Predicated region
    $region6: #{mlp_mix_enrich.1} parent=1 // pred_check
      _
    $region7: #{mlp_mix_enrich.1} parent=1 // pred_check_branch
      %22 = sbr.rel (0) target = $region9
    $region8: #{mlp_mix_enrich.1} parent=1 // pred_region
      _
    $region9: #{mlp_mix_enrich.1} parent=1 // pred_fallthru
      _
    // Predicated region
    $region10: #{mlp_mix_enrich.1} parent=1 // pred_check
      _
    $region11: #{mlp_mix_enrich.1} parent=1 // pred_check_branch
      %24 = sbr.rel (0) target = $region13
    $region12: #{mlp_mix_enrich.1} parent=1 // pred_region
      %26 = vsyncadd [#allocation4], 0
      %s28 = sshll.u32 %s2, 4
      %s29 = int_to_ptr.vmem [resolvable:$true] %s28
      %31 = dma.vmem_to_smem %s29, 128, [#allocation2], [#allocation4]
    $region13: #{mlp_mix_enrich.1} parent=1 // pred_fallthru
      _
    // Predicated region
    $region14: #{mlp_mix_enrich.1} parent=1 // pred_check
      _
    $region15: #{mlp_mix_enrich.1} parent=1 // pred_check_branch
      %33 = sbr.rel (0) target = $region17
    $region16: #{mlp_mix_enrich.1} parent=1 // pred_region
      %35 = vsyncadd [#allocation6], 0
      %s37 = sshll.u32 %s3, 4
      %s38 = int_to_ptr.vmem [resolvable:$true] %s37
      %40 = dma.vmem_to_smem %s38, 16, [#allocation5], [#allocation6]
    $region17: #{mlp_mix_enrich.1} parent=1 // pred_fallthru
      _
    // Predicated region
    $region18: #{mlp_mix_enrich.1} parent=1 // pred_check
      _
    $region19: #{mlp_mix_enrich.1} parent=1 // pred_check_branch
      %42 = sbr.rel (0) target = $region21
    $region20: #{mlp_mix_enrich.1} parent=1 // pred_region
      %44 = vsyncadd [#allocation6], 0
      %s46 = sshll.u32 %s4, 4
      %s47 = int_to_ptr.vmem [resolvable:$true] %s46
      %49 = dma.vmem_to_smem %s47, 128, [#allocation7], [#allocation6]
    $region21: #{mlp_mix_enrich.1} parent=1 // pred_fallthru
      _
    // Predicated region
    $region22: #{mlp_mix_enrich.1} parent=1 // pred_check
      _
    $region23: #{mlp_mix_enrich.1} parent=1 // pred_check_branch
      %51 = sbr.rel (0) target = $region25
    $region24: #{mlp_mix_enrich.1} parent=1 // pred_region
      %53 = vsyncadd [#allocation9], 0
      %s55 = sshll.u32 %s5, 4
      %s56 = int_to_ptr.vmem [resolvable:$true] %s55
      %58 = dma.vmem_to_smem %s56, 16, [#allocation8], [#allocation9]
    $region25: #{mlp_mix_enrich.1} parent=1 // pred_fallthru
      _
    // Predicated region
    $region26: #{mlp_mix_enrich.1} parent=1 // pred_check
      _
    $region27: #{mlp_mix_enrich.1} parent=1 // pred_check_branch
      %60 = sbr.rel (0) target = $region29
    $region28: #{mlp_mix_enrich.1} parent=1 // pred_region
      _
    $region29: #{mlp_mix_enrich.1} parent=1 // pred_fallthru
      _
    // Predicated region
    $region30: #{mlp_mix_enrich.1} parent=1 // pred_check
      _
    $region31: #{mlp_mix_enrich.1} parent=1 // pred_check_branch
      %62 = sbr.rel (0) target = $region33
    $region32: #{mlp_mix_enrich.1} parent=1 // pred_region
      _
    $region33: #{mlp_mix_enrich.1} parent=1 // pred_fallthru
      _
    // Predicated region
    $region34: #{mlp_mix_enrich.1} parent=1 // pred_check
      _
    $region35: #{mlp_mix_enrich.1} parent=1 // pred_check_branch
      %64 = sbr.rel (0) target = $region37
    $region36: #{mlp_mix_enrich.1} parent=1 // pred_region
      _
    $region37: #{mlp_mix_enrich.1} parent=1 // pred_fallthru
      _
    // Predicated region
    $region38: #{mlp_mix_enrich.1} parent=1 // pred_check
      _
    $region39: #{mlp_mix_enrich.1} parent=1 // pred_check_branch
      %66 = sbr.rel (0) target = $region41
    $region40: #{mlp_mix_enrich.1} parent=1 // pred_region
      _
    $region41: #{mlp_mix_enrich.1} parent=1 // pred_fallthru
      _
    // Predicated region
    $region42: #{mlp_mix_enrich.1} parent=1 // pred_check
      _
    $region43: #{mlp_mix_enrich.1} parent=1 // pred_check_branch
      %68 = sbr.rel (0) target = $region45
    $region44: #{mlp_mix_enrich.1} parent=1 // pred_region
      %70 = dma.done [#allocation4], 128
    $region45: #{mlp_mix_enrich.1} parent=1 // pred_fallthru
      _
    // Predicated region
    $region46: #{mlp_mix_enrich.1} parent=1 // pred_check
      _
    $region47: #{mlp_mix_enrich.1} parent=1 // pred_check_branch
      %72 = sbr.rel (0) target = $region49
    $region48: #{mlp_mix_enrich.1} parent=1 // pred_region
      %74 = dma.done [#allocation6], 16
    $region49: #{mlp_mix_enrich.1} parent=1 // pred_fallthru
      _
    // Predicated region
    $region50: #{mlp_mix_enrich.1} parent=1 // pred_check
      _
    $region51: #{mlp_mix_enrich.1} parent=1 // pred_check_branch
      %76 = sbr.rel (0) target = $region53
    $region52: #{mlp_mix_enrich.1} parent=1 // pred_region
      %78 = dma.done [#allocation6], 128
    $region53: #{mlp_mix_enrich.1} parent=1 // pred_fallthru
      _
    // Predicated region
    $region54: #{mlp_mix_enrich.1} parent=1 // pred_check
      _
    $region55: #{mlp_mix_enrich.1} parent=1 // pred_check_branch
      %80 = sbr.rel (0) target = $region57
    $region56: #{mlp_mix_enrich.1} parent=1 // pred_region
      %82 = dma.done [#allocation9], 16
    $region57: #{mlp_mix_enrich.1} parent=1 // pred_fallthru
      _
    %83 = sfence
    %v84 = vld [vmem:[%s0] sm:$0xff]
    %v85 = vld [vmem:[%s0 + $0x8] sm:$0xff]
    %v86 = vld [vmem:[%s0 + $0x10] sm:$0xff]
    %v87 = vld [vmem:[%s0 + $0x18] sm:$0xff]
    %v88 = vld [vmem:[%s0 + $0x20] sm:$0xff]
    %v89 = vld [vmem:[%s0 + $0x28] sm:$0xff]
    %v90 = vld [vmem:[%s0 + $0x30] sm:$0xff]
    %v91 = vld [vmem:[%s0 + $0x38] sm:$0xff]
    %v92 = vld [vmem:[%s1] sm:$0xff]
    %v93 = vadd.f32 %v84, %v92
    %v94 = vadd.f32 %v85, %v92
    %v95 = vadd.f32 %v86, %v92
    %v96 = vadd.f32 %v87, %v92
    %v97 = vadd.f32 %v88, %v92
    %v98 = vadd.f32 %v89, %v92
    %v99 = vadd.f32 %v90, %v92
    %v100 = vadd.f32 %v91, %v92
    %s101 = sld [smem:[#allocation2]]
    %v102 = vstv %s101
    %v103 = vmul.f32 %v93, %v102
    %v104 = vmul.f32 %v94, %v102
    %v105 = vmul.f32 %v95, %v102
    %v106 = vmul.f32 %v96, %v102
    %v107 = vmul.f32 %v97, %v102
    %v108 = vmul.f32 %v98, %v102
    %v109 = vmul.f32 %v99, %v102
    %v110 = vmul.f32 %v100, %v102
    %s111 = sld [smem:[#allocation2 + $0x1]]
    %v112 = vstv %s111
    %v113 = vmul.f32 %v93, %v112
    %v114 = vmul.f32 %v94, %v112
    %v115 = vmul.f32 %v95, %v112
    %v116 = vmul.f32 %v96, %v112
    %v117 = vmul.f32 %v97, %v112
    %v118 = vmul.f32 %v98, %v112
    %v119 = vmul.f32 %v99, %v112
    %v120 = vmul.f32 %v100, %v112
    %v129 = vrot.slane %v113, 1
    %v130 = vrot.slane %v114, 1
    %v131 = vrot.slane %v115, 1
    %v132 = vrot.slane %v116, 1
    %v133 = vrot.slane %v117, 1
    %v134 = vrot.slane %v118, 1
    %v135 = vrot.slane %v119, 1
    %v136 = vrot.slane %v120, 1
    %v145 = vadd.f32 %v103, %v129
    %v146 = vadd.f32 %v104, %v130
    %v147 = vadd.f32 %v105, %v131
    %v148 = vadd.f32 %v106, %v132
    %v149 = vadd.f32 %v107, %v133
    %v150 = vadd.f32 %v108, %v134
    %v151 = vadd.f32 %v109, %v135
    %v152 = vadd.f32 %v110, %v136
    %s153 = sld [smem:[#allocation2 + $0x2]]
    %v154 = vstv %s153
    %v155 = vmul.f32 %v93, %v154
    %v156 = vmul.f32 %v94, %v154
    %v157 = vmul.f32 %v95, %v154
    %v158 = vmul.f32 %v96, %v154
    %v159 = vmul.f32 %v97, %v154
    %v160 = vmul.f32 %v98, %v154
    %v161 = vmul.f32 %v99, %v154
    %v162 = vmul.f32 %v100, %v154
    %v171 = vrot.slane %v155, 2
    %v172 = vrot.slane %v156, 2
    %v173 = vrot.slane %v157, 2
    %v174 = vrot.slane %v158, 2
    %v175 = vrot.slane %v159, 2
    %v176 = vrot.slane %v160, 2
    %v177 = vrot.slane %v161, 2
    %v178 = vrot.slane %v162, 2
    %v187 = vadd.f32 %v145, %v171
    %v188 = vadd.f32 %v146, %v172
    %v189 = vadd.f32 %v147, %v173
    %v190 = vadd.f32 %v148, %v174
    %v191 = vadd.f32 %v149, %v175
    %v192 = vadd.f32 %v150, %v176
    %v193 = vadd.f32 %v151, %v177
    %v194 = vadd.f32 %v152, %v178
    %s195 = sld [smem:[#allocation2 + $0x3]]
    %v196 = vstv %s195
    %v197 = vmul.f32 %v93, %v196
    %v198 = vmul.f32 %v94, %v196
    %v199 = vmul.f32 %v95, %v196
    %v200 = vmul.f32 %v96, %v196
    %v201 = vmul.f32 %v97, %v196
    %v202 = vmul.f32 %v98, %v196
    %v203 = vmul.f32 %v99, %v196
    %v204 = vmul.f32 %v100, %v196
    %v213 = vrot.slane %v197, 3
    %v214 = vrot.slane %v198, 3
    %v215 = vrot.slane %v199, 3
    %v216 = vrot.slane %v200, 3
    %v217 = vrot.slane %v201, 3
    %v218 = vrot.slane %v202, 3
    %v219 = vrot.slane %v203, 3
    %v220 = vrot.slane %v204, 3
    %v229 = vadd.f32 %v187, %v213
    %v230 = vadd.f32 %v188, %v214
    %v231 = vadd.f32 %v189, %v215
    %v232 = vadd.f32 %v190, %v216
    %v233 = vadd.f32 %v191, %v217
    %v234 = vadd.f32 %v192, %v218
    %v235 = vadd.f32 %v193, %v219
    %v236 = vadd.f32 %v194, %v220
    %s237 = sld [smem:[#allocation2 + $0x4]]
    %v238 = vstv %s237
    %v239 = vmul.f32 %v93, %v238
    %v240 = vmul.f32 %v94, %v238
    %v241 = vmul.f32 %v95, %v238
    %v242 = vmul.f32 %v96, %v238
    %v243 = vmul.f32 %v97, %v238
    %v244 = vmul.f32 %v98, %v238
    %v245 = vmul.f32 %v99, %v238
    %v246 = vmul.f32 %v100, %v238
    %v255 = vrot.slane %v239, 4
    %v256 = vrot.slane %v240, 4
    %v257 = vrot.slane %v241, 4
    %v258 = vrot.slane %v242, 4
    %v259 = vrot.slane %v243, 4
    %v260 = vrot.slane %v244, 4
    %v261 = vrot.slane %v245, 4
    %v262 = vrot.slane %v246, 4
    %v271 = vadd.f32 %v229, %v255
    %v272 = vadd.f32 %v230, %v256
    %v273 = vadd.f32 %v231, %v257
    %v274 = vadd.f32 %v232, %v258
    %v275 = vadd.f32 %v233, %v259
    %v276 = vadd.f32 %v234, %v260
    %v277 = vadd.f32 %v235, %v261
    %v278 = vadd.f32 %v236, %v262
    %s279 = sld [smem:[#allocation2 + $0x5]]
    %v280 = vstv %s279
    %v281 = vmul.f32 %v93, %v280
    %v282 = vmul.f32 %v94, %v280
    %v283 = vmul.f32 %v95, %v280
    %v284 = vmul.f32 %v96, %v280
    %v285 = vmul.f32 %v97, %v280
    %v286 = vmul.f32 %v98, %v280
    %v287 = vmul.f32 %v99, %v280
    %v288 = vmul.f32 %v100, %v280
    %v297 = vrot.slane %v281, 5
    %v298 = vrot.slane %v282, 5
    %v299 = vrot.slane %v283, 5
    %v300 = vrot.slane %v284, 5
    %v301 = vrot.slane %v285, 5
    %v302 = vrot.slane %v286, 5
    %v303 = vrot.slane %v287, 5
    %v304 = vrot.slane %v288, 5
    %v313 = vadd.f32 %v271, %v297
    %v314 = vadd.f32 %v272, %v298
    %v315 = vadd.f32 %v273, %v299
    %v316 = vadd.f32 %v274, %v300
    %v317 = vadd.f32 %v275, %v301
    %v318 = vadd.f32 %v276, %v302
    %v319 = vadd.f32 %v277, %v303
    %v320 = vadd.f32 %v278, %v304
    %s321 = sld [smem:[#allocation2 + $0x6]]
    %v322 = vstv %s321
    %v323 = vmul.f32 %v93, %v322
    %v324 = vmul.f32 %v94, %v322
    %v325 = vmul.f32 %v95, %v322
    %v326 = vmul.f32 %v96, %v322
    %v327 = vmul.f32 %v97, %v322
    %v328 = vmul.f32 %v98, %v322
    %v329 = vmul.f32 %v99, %v322
    %v330 = vmul.f32 %v100, %v322
    %v339 = vrot.slane %v323, 6
    %v340 = vrot.slane %v324, 6
    %v341 = vrot.slane %v325, 6
    %v342 = vrot.slane %v326, 6
    %v343 = vrot.slane %v327, 6
    %v344 = vrot.slane %v328, 6
    %v345 = vrot.slane %v329, 6
    %v346 = vrot.slane %v330, 6
    %v355 = vadd.f32 %v313, %v339
    %v356 = vadd.f32 %v314, %v340
    %v357 = vadd.f32 %v315, %v341
    %v358 = vadd.f32 %v316, %v342
    %v359 = vadd.f32 %v317, %v343
    %v360 = vadd.f32 %v318, %v344
    %v361 = vadd.f32 %v319, %v345
    %v362 = vadd.f32 %v320, %v346
    %s363 = sld [smem:[#allocation2 + $0x7]]
    %v364 = vstv %s363
    %v365 = vmul.f32 %v93, %v364
    %v366 = vmul.f32 %v94, %v364
    %v367 = vmul.f32 %v95, %v364
    %v368 = vmul.f32 %v96, %v364
    %v369 = vmul.f32 %v97, %v364
    %v370 = vmul.f32 %v98, %v364
    %v371 = vmul.f32 %v99, %v364
    %v372 = vmul.f32 %v100, %v364
    %v381 = vrot.slane %v365, 7
    %v382 = vrot.slane %v366, 7
    %v383 = vrot.slane %v367, 7
    %v384 = vrot.slane %v368, 7
    %v385 = vrot.slane %v369, 7
    %v386 = vrot.slane %v370, 7
    %v387 = vrot.slane %v371, 7
    %v388 = vrot.slane %v372, 7
    %v397 = vadd.f32 %v355, %v381
    %v398 = vadd.f32 %v356, %v382
    %v399 = vadd.f32 %v357, %v383
    %v400 = vadd.f32 %v358, %v384
    %v401 = vadd.f32 %v359, %v385
    %v402 = vadd.f32 %v360, %v386
    %v403 = vadd.f32 %v361, %v387
    %v404 = vadd.f32 %v362, %v388
    %s405 = sld [smem:[#allocation5]]
    %v406 = vstv %s405
    %v407 = vadd.f32 %v397, %v406
    %v408 = vadd.f32 %v398, %v406
    %v409 = vadd.f32 %v399, %v406
    %v410 = vadd.f32 %v400, %v406
    %v411 = vadd.f32 %v401, %v406
    %v412 = vadd.f32 %v402, %v406
    %v413 = vadd.f32 %v403, %v406
    %v414 = vadd.f32 %v404, %v406
    %v415 = vmax.f32 %v407, 0.0
    %v416 = vmax.f32 %v408, 0.0
    %v417 = vmax.f32 %v409, 0.0
    %v418 = vmax.f32 %v410, 0.0
    %v419 = vmax.f32 %v411, 0.0
    %v420 = vmax.f32 %v412, 0.0
    %v421 = vmax.f32 %v413, 0.0
    %v422 = vmax.f32 %v414, 0.0
    %s423 = sld [smem:[#allocation2 + $0x80]]
    %v424 = vstv %s423
    %v425 = vmul.f32 %v93, %v424
    %v426 = vmul.f32 %v94, %v424
    %v427 = vmul.f32 %v95, %v424
    %v428 = vmul.f32 %v96, %v424
    %v429 = vmul.f32 %v97, %v424
    %v430 = vmul.f32 %v98, %v424
    %v431 = vmul.f32 %v99, %v424
    %v432 = vmul.f32 %v100, %v424
    %s433 = sld [smem:[#allocation2 + $0x81]]
    %v434 = vstv %s433
    %v435 = vmul.f32 %v93, %v434
    %v436 = vmul.f32 %v94, %v434
    %v437 = vmul.f32 %v95, %v434
    %v438 = vmul.f32 %v96, %v434
    %v439 = vmul.f32 %v97, %v434
    %v440 = vmul.f32 %v98, %v434
    %v441 = vmul.f32 %v99, %v434
    %v442 = vmul.f32 %v100, %v434
    %v451 = vrot.slane %v435, 1
    %v452 = vrot.slane %v436, 1
    %v453 = vrot.slane %v437, 1
    %v454 = vrot.slane %v438, 1
    %v455 = vrot.slane %v439, 1
    %v456 = vrot.slane %v440, 1
    %v457 = vrot.slane %v441, 1
    %v458 = vrot.slane %v442, 1
    %v467 = vadd.f32 %v425, %v451
    %v468 = vadd.f32 %v426, %v452
    %v469 = vadd.f32 %v427, %v453
    %v470 = vadd.f32 %v428, %v454
    %v471 = vadd.f32 %v429, %v455
    %v472 = vadd.f32 %v430, %v456
    %v473 = vadd.f32 %v431, %v457
    %v474 = vadd.f32 %v432, %v458
    %s475 = sld [smem:[#allocation2 + $0x82]]
    %v476 = vstv %s475
    %v477 = vmul.f32 %v93, %v476
    %v478 = vmul.f32 %v94, %v476
    %v479 = vmul.f32 %v95, %v476
    %v480 = vmul.f32 %v96, %v476
    %v481 = vmul.f32 %v97, %v476
    %v482 = vmul.f32 %v98, %v476
    %v483 = vmul.f32 %v99, %v476
    %v484 = vmul.f32 %v100, %v476
    %v493 = vrot.slane %v477, 2
    %v494 = vrot.slane %v478, 2
    %v495 = vrot.slane %v479, 2
    %v496 = vrot.slane %v480, 2
    %v497 = vrot.slane %v481, 2
    %v498 = vrot.slane %v482, 2
    %v499 = vrot.slane %v483, 2
    %v500 = vrot.slane %v484, 2
    %v509 = vadd.f32 %v467, %v493
    %v510 = vadd.f32 %v468, %v494
    %v511 = vadd.f32 %v469, %v495
    %v512 = vadd.f32 %v470, %v496
    %v513 = vadd.f32 %v471, %v497
    %v514 = vadd.f32 %v472, %v498
    %v515 = vadd.f32 %v473, %v499
    %v516 = vadd.f32 %v474, %v500
    %s517 = sld [smem:[#allocation2 + $0x83]]
    %v518 = vstv %s517
    %v519 = vmul.f32 %v93, %v518
    %v520 = vmul.f32 %v94, %v518
    %v521 = vmul.f32 %v95, %v518
    %v522 = vmul.f32 %v96, %v518
    %v523 = vmul.f32 %v97, %v518
    %v524 = vmul.f32 %v98, %v518
    %v525 = vmul.f32 %v99, %v518
    %v526 = vmul.f32 %v100, %v518
    %v535 = vrot.slane %v519, 3
    %v536 = vrot.slane %v520, 3
    %v537 = vrot.slane %v521, 3
    %v538 = vrot.slane %v522, 3
    %v539 = vrot.slane %v523, 3
    %v540 = vrot.slane %v524, 3
    %v541 = vrot.slane %v525, 3
    %v542 = vrot.slane %v526, 3
    %v551 = vadd.f32 %v509, %v535
    %v552 = vadd.f32 %v510, %v536
    %v553 = vadd.f32 %v511, %v537
    %v554 = vadd.f32 %v512, %v538
    %v555 = vadd.f32 %v513, %v539
    %v556 = vadd.f32 %v514, %v540
    %v557 = vadd.f32 %v515, %v541
    %v558 = vadd.f32 %v516, %v542
    %s559 = sld [smem:[#allocation2 + $0x84]]
    %v560 = vstv %s559
    %v561 = vmul.f32 %v93, %v560
    %v562 = vmul.f32 %v94, %v560
    %v563 = vmul.f32 %v95, %v560
    %v564 = vmul.f32 %v96, %v560
    %v565 = vmul.f32 %v97, %v560
    %v566 = vmul.f32 %v98, %v560
    %v567 = vmul.f32 %v99, %v560
    %v568 = vmul.f32 %v100, %v560
    %v577 = vrot.slane %v561, 4
    %v578 = vrot.slane %v562, 4
    %v579 = vrot.slane %v563, 4
    %v580 = vrot.slane %v564, 4
    %v581 = vrot.slane %v565, 4
    %v582 = vrot.slane %v566, 4
    %v583 = vrot.slane %v567, 4
    %v584 = vrot.slane %v568, 4
    %v593 = vadd.f32 %v551, %v577
    %v594 = vadd.f32 %v552, %v578
    %v595 = vadd.f32 %v553, %v579
    %v596 = vadd.f32 %v554, %v580
    %v597 = vadd.f32 %v555, %v581
    %v598 = vadd.f32 %v556, %v582
    %v599 = vadd.f32 %v557, %v583
    %v600 = vadd.f32 %v558, %v584
    %s601 = sld [smem:[#allocation2 + $0x85]]
    %v602 = vstv %s601
    %v603 = vmul.f32 %v93, %v602
    %v604 = vmul.f32 %v94, %v602
    %v605 = vmul.f32 %v95, %v602
    %v606 = vmul.f32 %v96, %v602
    %v607 = vmul.f32 %v97, %v602
    %v608 = vmul.f32 %v98, %v602
    %v609 = vmul.f32 %v99, %v602
    %v610 = vmul.f32 %v100, %v602
    %v619 = vrot.slane %v603, 5
    %v620 = vrot.slane %v604, 5
    %v621 = vrot.slane %v605, 5
    %v622 = vrot.slane %v606, 5
    %v623 = vrot.slane %v607, 5
    %v624 = vrot.slane %v608, 5
    %v625 = vrot.slane %v609, 5
    %v626 = vrot.slane %v610, 5
    %v635 = vadd.f32 %v593, %v619
    %v636 = vadd.f32 %v594, %v620
    %v637 = vadd.f32 %v595, %v621
    %v638 = vadd.f32 %v596, %v622
    %v639 = vadd.f32 %v597, %v623
    %v640 = vadd.f32 %v598, %v624
    %v641 = vadd.f32 %v599, %v625
    %v642 = vadd.f32 %v600, %v626
    %s643 = sld [smem:[#allocation2 + $0x86]]
    %v644 = vstv %s643
    %v645 = vmul.f32 %v93, %v644
    %v646 = vmul.f32 %v94, %v644
    %v647 = vmul.f32 %v95, %v644
    %v648 = vmul.f32 %v96, %v644
    %v649 = vmul.f32 %v97, %v644
    %v650 = vmul.f32 %v98, %v644
    %v651 = vmul.f32 %v99, %v644
    %v652 = vmul.f32 %v100, %v644
    %v661 = vrot.slane %v645, 6
    %v662 = vrot.slane %v646, 6
    %v663 = vrot.slane %v647, 6
    %v664 = vrot.slane %v648, 6
    %v665 = vrot.slane %v649, 6
    %v666 = vrot.slane %v650, 6
    %v667 = vrot.slane %v651, 6
    %v668 = vrot.slane %v652, 6
    %v677 = vadd.f32 %v635, %v661
    %v678 = vadd.f32 %v636, %v662
    %v679 = vadd.f32 %v637, %v663
    %v680 = vadd.f32 %v638, %v664
    %v681 = vadd.f32 %v639, %v665
    %v682 = vadd.f32 %v640, %v666
    %v683 = vadd.f32 %v641, %v667
    %v684 = vadd.f32 %v642, %v668
    %s685 = sld [smem:[#allocation2 + $0x87]]
    %v686 = vstv %s685
    %v687 = vmul.f32 %v93, %v686
    %v688 = vmul.f32 %v94, %v686
    %v689 = vmul.f32 %v95, %v686
    %v690 = vmul.f32 %v96, %v686
    %v691 = vmul.f32 %v97, %v686
    %v692 = vmul.f32 %v98, %v686
    %v693 = vmul.f32 %v99, %v686
    %v694 = vmul.f32 %v100, %v686
    %v703 = vrot.slane %v687, 7
    %v704 = vrot.slane %v688, 7
    %v705 = vrot.slane %v689, 7
    %v706 = vrot.slane %v690, 7
    %v707 = vrot.slane %v691, 7
    %v708 = vrot.slane %v692, 7
    %v709 = vrot.slane %v693, 7
    %v710 = vrot.slane %v694, 7
    %v719 = vadd.f32 %v677, %v703
    %v720 = vadd.f32 %v678, %v704
    %v721 = vadd.f32 %v679, %v705
    %v722 = vadd.f32 %v680, %v706
    %v723 = vadd.f32 %v681, %v707
    %v724 = vadd.f32 %v682, %v708
    %v725 = vadd.f32 %v683, %v709
    %v726 = vadd.f32 %v684, %v710
    %s727 = sld [smem:[#allocation5 + $0x1]]
    %v728 = vstv %s727
    %v729 = vadd.f32 %v719, %v728
    %v730 = vadd.f32 %v720, %v728
    %v731 = vadd.f32 %v721, %v728
    %v732 = vadd.f32 %v722, %v728
    %v733 = vadd.f32 %v723, %v728
    %v734 = vadd.f32 %v724, %v728
    %v735 = vadd.f32 %v725, %v728
    %v736 = vadd.f32 %v726, %v728
    %v737 = vmax.f32 %v729, 0.0
    %v738 = vmax.f32 %v730, 0.0
    %v739 = vmax.f32 %v731, 0.0
    %v740 = vmax.f32 %v732, 0.0
    %v741 = vmax.f32 %v733, 0.0
    %v742 = vmax.f32 %v734, 0.0
    %v743 = vmax.f32 %v735, 0.0
    %v744 = vmax.f32 %v736, 0.0
    %s745 = sld [smem:[#allocation2 + $0x100]]
    %v746 = vstv %s745
    %v747 = vmul.f32 %v93, %v746
    %v748 = vmul.f32 %v94, %v746
    %v749 = vmul.f32 %v95, %v746
    %v750 = vmul.f32 %v96, %v746
    %v751 = vmul.f32 %v97, %v746
    %v752 = vmul.f32 %v98, %v746
    %v753 = vmul.f32 %v99, %v746
    %v754 = vmul.f32 %v100, %v746
    %s755 = sld [smem:[#allocation2 + $0x101]]
    %v756 = vstv %s755
    %v757 = vmul.f32 %v93, %v756
    %v758 = vmul.f32 %v94, %v756
    %v759 = vmul.f32 %v95, %v756
    %v760 = vmul.f32 %v96, %v756
    %v761 = vmul.f32 %v97, %v756
    %v762 = vmul.f32 %v98, %v756
    %v763 = vmul.f32 %v99, %v756
    %v764 = vmul.f32 %v100, %v756
    %v773 = vrot.slane %v757, 1
    %v774 = vrot.slane %v758, 1
    %v775 = vrot.slane %v759, 1
    %v776 = vrot.slane %v760, 1
    %v777 = vrot.slane %v761, 1
    %v778 = vrot.slane %v762, 1
    %v779 = vrot.slane %v763, 1
    %v780 = vrot.slane %v764, 1
    %v789 = vadd.f32 %v747, %v773
    %v790 = vadd.f32 %v748, %v774
    %v791 = vadd.f32 %v749, %v775
    %v792 = vadd.f32 %v750, %v776
    %v793 = vadd.f32 %v751, %v777
    %v794 = vadd.f32 %v752, %v778
    %v795 = vadd.f32 %v753, %v779
    %v796 = vadd.f32 %v754, %v780
    %s797 = sld [smem:[#allocation2 + $0x102]]
    %v798 = vstv %s797
    %v799 = vmul.f32 %v93, %v798
    %v800 = vmul.f32 %v94, %v798
    %v801 = vmul.f32 %v95, %v798
    %v802 = vmul.f32 %v96, %v798
    %v803 = vmul.f32 %v97, %v798
    %v804 = vmul.f32 %v98, %v798
    %v805 = vmul.f32 %v99, %v798
    %v806 = vmul.f32 %v100, %v798
    %v815 = vrot.slane %v799, 2
    %v816 = vrot.slane %v800, 2
    %v817 = vrot.slane %v801, 2
    %v818 = vrot.slane %v802, 2
    %v819 = vrot.slane %v803, 2
    %v820 = vrot.slane %v804, 2
    %v821 = vrot.slane %v805, 2
    %v822 = vrot.slane %v806, 2
    %v831 = vadd.f32 %v789, %v815
    %v832 = vadd.f32 %v790, %v816
    %v833 = vadd.f32 %v791, %v817
    %v834 = vadd.f32 %v792, %v818
    %v835 = vadd.f32 %v793, %v819
    %v836 = vadd.f32 %v794, %v820
    %v837 = vadd.f32 %v795, %v821
    %v838 = vadd.f32 %v796, %v822
    %s839 = sld [smem:[#allocation2 + $0x103]]
    %v840 = vstv %s839
    %v841 = vmul.f32 %v93, %v840
    %v842 = vmul.f32 %v94, %v840
    %v843 = vmul.f32 %v95, %v840
    %v844 = vmul.f32 %v96, %v840
    %v845 = vmul.f32 %v97, %v840
    %v846 = vmul.f32 %v98, %v840
    %v847 = vmul.f32 %v99, %v840
    %v848 = vmul.f32 %v100, %v840
    %v857 = vrot.slane %v841, 3
    %v858 = vrot.slane %v842, 3
    %v859 = vrot.slane %v843, 3
    %v860 = vrot.slane %v844, 3
    %v861 = vrot.slane %v845, 3
    %v862 = vrot.slane %v846, 3
    %v863 = vrot.slane %v847, 3
    %v864 = vrot.slane %v848, 3
    %v873 = vadd.f32 %v831, %v857
    %v874 = vadd.f32 %v832, %v858
    %v875 = vadd.f32 %v833, %v859
    %v876 = vadd.f32 %v834, %v860
    %v877 = vadd.f32 %v835, %v861
    %v878 = vadd.f32 %v836, %v862
    %v879 = vadd.f32 %v837, %v863
    %v880 = vadd.f32 %v838, %v864
    %s881 = sld [smem:[#allocation2 + $0x104]]
    %v882 = vstv %s881
    %v883 = vmul.f32 %v93, %v882
    %v884 = vmul.f32 %v94, %v882
    %v885 = vmul.f32 %v95, %v882
    %v886 = vmul.f32 %v96, %v882
    %v887 = vmul.f32 %v97, %v882
    %v888 = vmul.f32 %v98, %v882
    %v889 = vmul.f32 %v99, %v882
    %v890 = vmul.f32 %v100, %v882
    %v899 = vrot.slane %v883, 4
    %v900 = vrot.slane %v884, 4
    %v901 = vrot.slane %v885, 4
    %v902 = vrot.slane %v886, 4
    %v903 = vrot.slane %v887, 4
    %v904 = vrot.slane %v888, 4
    %v905 = vrot.slane %v889, 4
    %v906 = vrot.slane %v890, 4
    %v915 = vadd.f32 %v873, %v899
    %v916 = vadd.f32 %v874, %v900
    %v917 = vadd.f32 %v875, %v901
    %v918 = vadd.f32 %v876, %v902
    %v919 = vadd.f32 %v877, %v903
    %v920 = vadd.f32 %v878, %v904
    %v921 = vadd.f32 %v879, %v905
    %v922 = vadd.f32 %v880, %v906
    %s923 = sld [smem:[#allocation2 + $0x105]]
    %v924 = vstv %s923
    %v925 = vmul.f32 %v93, %v924
    %v926 = vmul.f32 %v94, %v924
    %v927 = vmul.f32 %v95, %v924
    %v928 = vmul.f32 %v96, %v924
    %v929 = vmul.f32 %v97, %v924
    %v930 = vmul.f32 %v98, %v924
    %v931 = vmul.f32 %v99, %v924
    %v932 = vmul.f32 %v100, %v924
    %v941 = vrot.slane %v925, 5
    %v942 = vrot.slane %v926, 5
    %v943 = vrot.slane %v927, 5
    %v944 = vrot.slane %v928, 5
    %v945 = vrot.slane %v929, 5
    %v946 = vrot.slane %v930, 5
    %v947 = vrot.slane %v931, 5
    %v948 = vrot.slane %v932, 5
    %v957 = vadd.f32 %v915, %v941
    %v958 = vadd.f32 %v916, %v942
    %v959 = vadd.f32 %v917, %v943
    %v960 = vadd.f32 %v918, %v944
    %v961 = vadd.f32 %v919, %v945
    %v962 = vadd.f32 %v920, %v946
    %v963 = vadd.f32 %v921, %v947
    %v964 = vadd.f32 %v922, %v948
    %s965 = sld [smem:[#allocation2 + $0x106]]
    %v966 = vstv %s965
    %v967 = vmul.f32 %v93, %v966
    %v968 = vmul.f32 %v94, %v966
    %v969 = vmul.f32 %v95, %v966
    %v970 = vmul.f32 %v96, %v966
    %v971 = vmul.f32 %v97, %v966
    %v972 = vmul.f32 %v98, %v966
    %v973 = vmul.f32 %v99, %v966
    %v974 = vmul.f32 %v100, %v966
    %v983 = vrot.slane %v967, 6
    %v984 = vrot.slane %v968, 6
    %v985 = vrot.slane %v969, 6
    %v986 = vrot.slane %v970, 6
    %v987 = vrot.slane %v971, 6
    %v988 = vrot.slane %v972, 6
    %v989 = vrot.slane %v973, 6
    %v990 = vrot.slane %v974, 6
    %v999 = vadd.f32 %v957, %v983
    %v1000 = vadd.f32 %v958, %v984
    %v1001 = vadd.f32 %v959, %v985
    %v1002 = vadd.f32 %v960, %v986
    %v1003 = vadd.f32 %v961, %v987
    %v1004 = vadd.f32 %v962, %v988
    %v1005 = vadd.f32 %v963, %v989
    %v1006 = vadd.f32 %v964, %v990
    %s1007 = sld [smem:[#allocation2 + $0x107]]
    %v1008 = vstv %s1007
    %v1009 = vmul.f32 %v93, %v1008
    %v1010 = vmul.f32 %v94, %v1008
    %v1011 = vmul.f32 %v95, %v1008
    %v1012 = vmul.f32 %v96, %v1008
    %v1013 = vmul.f32 %v97, %v1008
    %v1014 = vmul.f32 %v98, %v1008
    %v1015 = vmul.f32 %v99, %v1008
    %v1016 = vmul.f32 %v100, %v1008
    %v1025 = vrot.slane %v1009, 7
    %v1026 = vrot.slane %v1010, 7
    %v1027 = vrot.slane %v1011, 7
    %v1028 = vrot.slane %v1012, 7
    %v1029 = vrot.slane %v1013, 7
    %v1030 = vrot.slane %v1014, 7
    %v1031 = vrot.slane %v1015, 7
    %v1032 = vrot.slane %v1016, 7
    %v1041 = vadd.f32 %v999, %v1025
    %v1042 = vadd.f32 %v1000, %v1026
    %v1043 = vadd.f32 %v1001, %v1027
    %v1044 = vadd.f32 %v1002, %v1028
    %v1045 = vadd.f32 %v1003, %v1029
    %v1046 = vadd.f32 %v1004, %v1030
    %v1047 = vadd.f32 %v1005, %v1031
    %v1048 = vadd.f32 %v1006, %v1032
    %s1049 = sld [smem:[#allocation5 + $0x2]]
    %v1050 = vstv %s1049
    %v1051 = vadd.f32 %v1041, %v1050
    %v1052 = vadd.f32 %v1042, %v1050
    %v1053 = vadd.f32 %v1043, %v1050
    %v1054 = vadd.f32 %v1044, %v1050
    %v1055 = vadd.f32 %v1045, %v1050
    %v1056 = vadd.f32 %v1046, %v1050
    %v1057 = vadd.f32 %v1047, %v1050
    %v1058 = vadd.f32 %v1048, %v1050
    %v1059 = vmax.f32 %v1051, 0.0
    %v1060 = vmax.f32 %v1052, 0.0
    %v1061 = vmax.f32 %v1053, 0.0
    %v1062 = vmax.f32 %v1054, 0.0
    %v1063 = vmax.f32 %v1055, 0.0
    %v1064 = vmax.f32 %v1056, 0.0
    %v1065 = vmax.f32 %v1057, 0.0
    %v1066 = vmax.f32 %v1058, 0.0
    %s1067 = sld [smem:[#allocation2 + $0x180]]
    %v1068 = vstv %s1067
    %v1069 = vmul.f32 %v93, %v1068
    %v1070 = vmul.f32 %v94, %v1068
    %v1071 = vmul.f32 %v95, %v1068
    %v1072 = vmul.f32 %v96, %v1068
    %v1073 = vmul.f32 %v97, %v1068
    %v1074 = vmul.f32 %v98, %v1068
    %v1075 = vmul.f32 %v99, %v1068
    %v1076 = vmul.f32 %v100, %v1068
    %s1077 = sld [smem:[#allocation2 + $0x181]]
    %v1078 = vstv %s1077
    %v1079 = vmul.f32 %v93, %v1078
    %v1080 = vmul.f32 %v94, %v1078
    %v1081 = vmul.f32 %v95, %v1078
    %v1082 = vmul.f32 %v96, %v1078
    %v1083 = vmul.f32 %v97, %v1078
    %v1084 = vmul.f32 %v98, %v1078
    %v1085 = vmul.f32 %v99, %v1078
    %v1086 = vmul.f32 %v100, %v1078
    %v1095 = vrot.slane %v1079, 1
    %v1096 = vrot.slane %v1080, 1
    %v1097 = vrot.slane %v1081, 1
    %v1098 = vrot.slane %v1082, 1
    %v1099 = vrot.slane %v1083, 1
    %v1100 = vrot.slane %v1084, 1
    %v1101 = vrot.slane %v1085, 1
    %v1102 = vrot.slane %v1086, 1
    %v1111 = vadd.f32 %v1069, %v1095
    %v1112 = vadd.f32 %v1070, %v1096
    %v1113 = vadd.f32 %v1071, %v1097
    %v1114 = vadd.f32 %v1072, %v1098
    %v1115 = vadd.f32 %v1073, %v1099
    %v1116 = vadd.f32 %v1074, %v1100
    %v1117 = vadd.f32 %v1075, %v1101
    %v1118 = vadd.f32 %v1076, %v1102
    %s1119 = sld [smem:[#allocation2 + $0x182]]
    %v1120 = vstv %s1119
    %v1121 = vmul.f32 %v93, %v1120
    %v1122 = vmul.f32 %v94, %v1120
    %v1123 = vmul.f32 %v95, %v1120
    %v1124 = vmul.f32 %v96, %v1120
    %v1125 = vmul.f32 %v97, %v1120
    %v1126 = vmul.f32 %v98, %v1120
    %v1127 = vmul.f32 %v99, %v1120
    %v1128 = vmul.f32 %v100, %v1120
    %v1137 = vrot.slane %v1121, 2
    %v1138 = vrot.slane %v1122, 2
    %v1139 = vrot.slane %v1123, 2
    %v1140 = vrot.slane %v1124, 2
    %v1141 = vrot.slane %v1125, 2
    %v1142 = vrot.slane %v1126, 2
    %v1143 = vrot.slane %v1127, 2
    %v1144 = vrot.slane %v1128, 2
    %v1153 = vadd.f32 %v1111, %v1137
    %v1154 = vadd.f32 %v1112, %v1138
    %v1155 = vadd.f32 %v1113, %v1139
    %v1156 = vadd.f32 %v1114, %v1140
    %v1157 = vadd.f32 %v1115, %v1141
    %v1158 = vadd.f32 %v1116, %v1142
    %v1159 = vadd.f32 %v1117, %v1143
    %v1160 = vadd.f32 %v1118, %v1144
    %s1161 = sld [smem:[#allocation2 + $0x183]]
    %v1162 = vstv %s1161
    %v1163 = vmul.f32 %v93, %v1162
    %v1164 = vmul.f32 %v94, %v1162
    %v1165 = vmul.f32 %v95, %v1162
    %v1166 = vmul.f32 %v96, %v1162
    %v1167 = vmul.f32 %v97, %v1162
    %v1168 = vmul.f32 %v98, %v1162
    %v1169 = vmul.f32 %v99, %v1162
    %v1170 = vmul.f32 %v100, %v1162
    %v1179 = vrot.slane %v1163, 3
    %v1180 = vrot.slane %v1164, 3
    %v1181 = vrot.slane %v1165, 3
    %v1182 = vrot.slane %v1166, 3
    %v1183 = vrot.slane %v1167, 3
    %v1184 = vrot.slane %v1168, 3
    %v1185 = vrot.slane %v1169, 3
    %v1186 = vrot.slane %v1170, 3
    %v1195 = vadd.f32 %v1153, %v1179
    %v1196 = vadd.f32 %v1154, %v1180
    %v1197 = vadd.f32 %v1155, %v1181
    %v1198 = vadd.f32 %v1156, %v1182
    %v1199 = vadd.f32 %v1157, %v1183
    %v1200 = vadd.f32 %v1158, %v1184
    %v1201 = vadd.f32 %v1159, %v1185
    %v1202 = vadd.f32 %v1160, %v1186
    %s1203 = sld [smem:[#allocation2 + $0x184]]
    %v1204 = vstv %s1203
    %v1205 = vmul.f32 %v93, %v1204
    %v1206 = vmul.f32 %v94, %v1204
    %v1207 = vmul.f32 %v95, %v1204
    %v1208 = vmul.f32 %v96, %v1204
    %v1209 = vmul.f32 %v97, %v1204
    %v1210 = vmul.f32 %v98, %v1204
    %v1211 = vmul.f32 %v99, %v1204
    %v1212 = vmul.f32 %v100, %v1204
    %v1221 = vrot.slane %v1205, 4
    %v1222 = vrot.slane %v1206, 4
    %v1223 = vrot.slane %v1207, 4
    %v1224 = vrot.slane %v1208, 4
    %v1225 = vrot.slane %v1209, 4
    %v1226 = vrot.slane %v1210, 4
    %v1227 = vrot.slane %v1211, 4
    %v1228 = vrot.slane %v1212, 4
    %v1237 = vadd.f32 %v1195, %v1221
    %v1238 = vadd.f32 %v1196, %v1222
    %v1239 = vadd.f32 %v1197, %v1223
    %v1240 = vadd.f32 %v1198, %v1224
    %v1241 = vadd.f32 %v1199, %v1225
    %v1242 = vadd.f32 %v1200, %v1226
    %v1243 = vadd.f32 %v1201, %v1227
    %v1244 = vadd.f32 %v1202, %v1228
    %s1245 = sld [smem:[#allocation2 + $0x185]]
    %v1246 = vstv %s1245
    %v1247 = vmul.f32 %v93, %v1246
    %v1248 = vmul.f32 %v94, %v1246
    %v1249 = vmul.f32 %v95, %v1246
    %v1250 = vmul.f32 %v96, %v1246
    %v1251 = vmul.f32 %v97, %v1246
    %v1252 = vmul.f32 %v98, %v1246
    %v1253 = vmul.f32 %v99, %v1246
    %v1254 = vmul.f32 %v100, %v1246
    %v1263 = vrot.slane %v1247, 5
    %v1264 = vrot.slane %v1248, 5
    %v1265 = vrot.slane %v1249, 5
    %v1266 = vrot.slane %v1250, 5
    %v1267 = vrot.slane %v1251, 5
    %v1268 = vrot.slane %v1252, 5
    %v1269 = vrot.slane %v1253, 5
    %v1270 = vrot.slane %v1254, 5
    %v1279 = vadd.f32 %v1237, %v1263
    %v1280 = vadd.f32 %v1238, %v1264
    %v1281 = vadd.f32 %v1239, %v1265
    %v1282 = vadd.f32 %v1240, %v1266
    %v1283 = vadd.f32 %v1241, %v1267
    %v1284 = vadd.f32 %v1242, %v1268
    %v1285 = vadd.f32 %v1243, %v1269
    %v1286 = vadd.f32 %v1244, %v1270
    %s1287 = sld [smem:[#allocation2 + $0x186]]
    %v1288 = vstv %s1287
    %v1289 = vmul.f32 %v93, %v1288
    %v1290 = vmul.f32 %v94, %v1288
    %v1291 = vmul.f32 %v95, %v1288
    %v1292 = vmul.f32 %v96, %v1288
    %v1293 = vmul.f32 %v97, %v1288
    %v1294 = vmul.f32 %v98, %v1288
    %v1295 = vmul.f32 %v99, %v1288
    %v1296 = vmul.f32 %v100, %v1288
    %v1305 = vrot.slane %v1289, 6
    %v1306 = vrot.slane %v1290, 6
    %v1307 = vrot.slane %v1291, 6
    %v1308 = vrot.slane %v1292, 6
    %v1309 = vrot.slane %v1293, 6
    %v1310 = vrot.slane %v1294, 6
    %v1311 = vrot.slane %v1295, 6
    %v1312 = vrot.slane %v1296, 6
    %v1321 = vadd.f32 %v1279, %v1305
    %v1322 = vadd.f32 %v1280, %v1306
    %v1323 = vadd.f32 %v1281, %v1307
    %v1324 = vadd.f32 %v1282, %v1308
    %v1325 = vadd.f32 %v1283, %v1309
    %v1326 = vadd.f32 %v1284, %v1310
    %v1327 = vadd.f32 %v1285, %v1311
    %v1328 = vadd.f32 %v1286, %v1312
    %s1329 = sld [smem:[#allocation2 + $0x187]]
    %v1330 = vstv %s1329
    %v1331 = vmul.f32 %v93, %v1330
    %v1332 = vmul.f32 %v94, %v1330
    %v1333 = vmul.f32 %v95, %v1330
    %v1334 = vmul.f32 %v96, %v1330
    %v1335 = vmul.f32 %v97, %v1330
    %v1336 = vmul.f32 %v98, %v1330
    %v1337 = vmul.f32 %v99, %v1330
    %v1338 = vmul.f32 %v100, %v1330
    %v1347 = vrot.slane %v1331, 7
    %v1348 = vrot.slane %v1332, 7
    %v1349 = vrot.slane %v1333, 7
    %v1350 = vrot.slane %v1334, 7
    %v1351 = vrot.slane %v1335, 7
    %v1352 = vrot.slane %v1336, 7
    %v1353 = vrot.slane %v1337, 7
    %v1354 = vrot.slane %v1338, 7
    %v1363 = vadd.f32 %v1321, %v1347
    %v1364 = vadd.f32 %v1322, %v1348
    %v1365 = vadd.f32 %v1323, %v1349
    %v1366 = vadd.f32 %v1324, %v1350
    %v1367 = vadd.f32 %v1325, %v1351
    %v1368 = vadd.f32 %v1326, %v1352
    %v1369 = vadd.f32 %v1327, %v1353
    %v1370 = vadd.f32 %v1328, %v1354
    %s1371 = sld [smem:[#allocation5 + $0x3]]
    %v1372 = vstv %s1371
    %v1373 = vadd.f32 %v1363, %v1372
    %v1374 = vadd.f32 %v1364, %v1372
    %v1375 = vadd.f32 %v1365, %v1372
    %v1376 = vadd.f32 %v1366, %v1372
    %v1377 = vadd.f32 %v1367, %v1372
    %v1378 = vadd.f32 %v1368, %v1372
    %v1379 = vadd.f32 %v1369, %v1372
    %v1380 = vadd.f32 %v1370, %v1372
    %v1381 = vmax.f32 %v1373, 0.0
    %v1382 = vmax.f32 %v1374, 0.0
    %v1383 = vmax.f32 %v1375, 0.0
    %v1384 = vmax.f32 %v1376, 0.0
    %v1385 = vmax.f32 %v1377, 0.0
    %v1386 = vmax.f32 %v1378, 0.0
    %v1387 = vmax.f32 %v1379, 0.0
    %v1388 = vmax.f32 %v1380, 0.0
    %s1389 = sld [smem:[#allocation2 + $0x200]]
    %v1390 = vstv %s1389
    %v1391 = vmul.f32 %v93, %v1390
    %v1392 = vmul.f32 %v94, %v1390
    %v1393 = vmul.f32 %v95, %v1390
    %v1394 = vmul.f32 %v96, %v1390
    %v1395 = vmul.f32 %v97, %v1390
    %v1396 = vmul.f32 %v98, %v1390
    %v1397 = vmul.f32 %v99, %v1390
    %v1398 = vmul.f32 %v100, %v1390
    %s1399 = sld [smem:[#allocation2 + $0x201]]
    %v1400 = vstv %s1399
    %v1401 = vmul.f32 %v93, %v1400
    %v1402 = vmul.f32 %v94, %v1400
    %v1403 = vmul.f32 %v95, %v1400
    %v1404 = vmul.f32 %v96, %v1400
    %v1405 = vmul.f32 %v97, %v1400
    %v1406 = vmul.f32 %v98, %v1400
    %v1407 = vmul.f32 %v99, %v1400
    %v1408 = vmul.f32 %v100, %v1400
    %v1417 = vrot.slane %v1401, 1
    %v1418 = vrot.slane %v1402, 1
    %v1419 = vrot.slane %v1403, 1
    %v1420 = vrot.slane %v1404, 1
    %v1421 = vrot.slane %v1405, 1
    %v1422 = vrot.slane %v1406, 1
    %v1423 = vrot.slane %v1407, 1
    %v1424 = vrot.slane %v1408, 1
    %v1433 = vadd.f32 %v1391, %v1417
    %v1434 = vadd.f32 %v1392, %v1418
    %v1435 = vadd.f32 %v1393, %v1419
    %v1436 = vadd.f32 %v1394, %v1420
    %v1437 = vadd.f32 %v1395, %v1421
    %v1438 = vadd.f32 %v1396, %v1422
    %v1439 = vadd.f32 %v1397, %v1423
    %v1440 = vadd.f32 %v1398, %v1424
    %s1441 = sld [smem:[#allocation2 + $0x202]]
    %v1442 = vstv %s1441
    %v1443 = vmul.f32 %v93, %v1442
    %v1444 = vmul.f32 %v94, %v1442
    %v1445 = vmul.f32 %v95, %v1442
    %v1446 = vmul.f32 %v96, %v1442
    %v1447 = vmul.f32 %v97, %v1442
    %v1448 = vmul.f32 %v98, %v1442
    %v1449 = vmul.f32 %v99, %v1442
    %v1450 = vmul.f32 %v100, %v1442
    %v1459 = vrot.slane %v1443, 2
    %v1460 = vrot.slane %v1444, 2
    %v1461 = vrot.slane %v1445, 2
    %v1462 = vrot.slane %v1446, 2
    %v1463 = vrot.slane %v1447, 2
    %v1464 = vrot.slane %v1448, 2
    %v1465 = vrot.slane %v1449, 2
    %v1466 = vrot.slane %v1450, 2
    %v1475 = vadd.f32 %v1433, %v1459
    %v1476 = vadd.f32 %v1434, %v1460
    %v1477 = vadd.f32 %v1435, %v1461
    %v1478 = vadd.f32 %v1436, %v1462
    %v1479 = vadd.f32 %v1437, %v1463
    %v1480 = vadd.f32 %v1438, %v1464
    %v1481 = vadd.f32 %v1439, %v1465
    %v1482 = vadd.f32 %v1440, %v1466
    %s1483 = sld [smem:[#allocation2 + $0x203]]
    %v1484 = vstv %s1483
    %v1485 = vmul.f32 %v93, %v1484
    %v1486 = vmul.f32 %v94, %v1484
    %v1487 = vmul.f32 %v95, %v1484
    %v1488 = vmul.f32 %v96, %v1484
    %v1489 = vmul.f32 %v97, %v1484
    %v1490 = vmul.f32 %v98, %v1484
    %v1491 = vmul.f32 %v99, %v1484
    %v1492 = vmul.f32 %v100, %v1484
    %v1501 = vrot.slane %v1485, 3
    %v1502 = vrot.slane %v1486, 3
    %v1503 = vrot.slane %v1487, 3
    %v1504 = vrot.slane %v1488, 3
    %v1505 = vrot.slane %v1489, 3
    %v1506 = vrot.slane %v1490, 3
    %v1507 = vrot.slane %v1491, 3
    %v1508 = vrot.slane %v1492, 3
    %v1517 = vadd.f32 %v1475, %v1501
    %v1518 = vadd.f32 %v1476, %v1502
    %v1519 = vadd.f32 %v1477, %v1503
    %v1520 = vadd.f32 %v1478, %v1504
    %v1521 = vadd.f32 %v1479, %v1505
    %v1522 = vadd.f32 %v1480, %v1506
    %v1523 = vadd.f32 %v1481, %v1507
    %v1524 = vadd.f32 %v1482, %v1508
    %s1525 = sld [smem:[#allocation2 + $0x204]]
    %v1526 = vstv %s1525
    %v1527 = vmul.f32 %v93, %v1526
    %v1528 = vmul.f32 %v94, %v1526
    %v1529 = vmul.f32 %v95, %v1526
    %v1530 = vmul.f32 %v96, %v1526
    %v1531 = vmul.f32 %v97, %v1526
    %v1532 = vmul.f32 %v98, %v1526
    %v1533 = vmul.f32 %v99, %v1526
    %v1534 = vmul.f32 %v100, %v1526
    %v1543 = vrot.slane %v1527, 4
    %v1544 = vrot.slane %v1528, 4
    %v1545 = vrot.slane %v1529, 4
    %v1546 = vrot.slane %v1530, 4
    %v1547 = vrot.slane %v1531, 4
    %v1548 = vrot.slane %v1532, 4
    %v1549 = vrot.slane %v1533, 4
    %v1550 = vrot.slane %v1534, 4
    %v1559 = vadd.f32 %v1517, %v1543
    %v1560 = vadd.f32 %v1518, %v1544
    %v1561 = vadd.f32 %v1519, %v1545
    %v1562 = vadd.f32 %v1520, %v1546
    %v1563 = vadd.f32 %v1521, %v1547
    %v1564 = vadd.f32 %v1522, %v1548
    %v1565 = vadd.f32 %v1523, %v1549
    %v1566 = vadd.f32 %v1524, %v1550
    %s1567 = sld [smem:[#allocation2 + $0x205]]
    %v1568 = vstv %s1567
    %v1569 = vmul.f32 %v93, %v1568
    %v1570 = vmul.f32 %v94, %v1568
    %v1571 = vmul.f32 %v95, %v1568
    %v1572 = vmul.f32 %v96, %v1568
    %v1573 = vmul.f32 %v97, %v1568
    %v1574 = vmul.f32 %v98, %v1568
    %v1575 = vmul.f32 %v99, %v1568
    %v1576 = vmul.f32 %v100, %v1568
    %v1585 = vrot.slane %v1569, 5
    %v1586 = vrot.slane %v1570, 5
    %v1587 = vrot.slane %v1571, 5
    %v1588 = vrot.slane %v1572, 5
    %v1589 = vrot.slane %v1573, 5
    %v1590 = vrot.slane %v1574, 5
    %v1591 = vrot.slane %v1575, 5
    %v1592 = vrot.slane %v1576, 5
    %v1601 = vadd.f32 %v1559, %v1585
    %v1602 = vadd.f32 %v1560, %v1586
    %v1603 = vadd.f32 %v1561, %v1587
    %v1604 = vadd.f32 %v1562, %v1588
    %v1605 = vadd.f32 %v1563, %v1589
    %v1606 = vadd.f32 %v1564, %v1590
    %v1607 = vadd.f32 %v1565, %v1591
    %v1608 = vadd.f32 %v1566, %v1592
    %s1609 = sld [smem:[#allocation2 + $0x206]]
    %v1610 = vstv %s1609
    %v1611 = vmul.f32 %v93, %v1610
    %v1612 = vmul.f32 %v94, %v1610
    %v1613 = vmul.f32 %v95, %v1610
    %v1614 = vmul.f32 %v96, %v1610
    %v1615 = vmul.f32 %v97, %v1610
    %v1616 = vmul.f32 %v98, %v1610
    %v1617 = vmul.f32 %v99, %v1610
    %v1618 = vmul.f32 %v100, %v1610
    %v1627 = vrot.slane %v1611, 6
    %v1628 = vrot.slane %v1612, 6
    %v1629 = vrot.slane %v1613, 6
    %v1630 = vrot.slane %v1614, 6
    %v1631 = vrot.slane %v1615, 6
    %v1632 = vrot.slane %v1616, 6
    %v1633 = vrot.slane %v1617, 6
    %v1634 = vrot.slane %v1618, 6
    %v1643 = vadd.f32 %v1601, %v1627
    %v1644 = vadd.f32 %v1602, %v1628
    %v1645 = vadd.f32 %v1603, %v1629
    %v1646 = vadd.f32 %v1604, %v1630
    %v1647 = vadd.f32 %v1605, %v1631
    %v1648 = vadd.f32 %v1606, %v1632
    %v1649 = vadd.f32 %v1607, %v1633
    %v1650 = vadd.f32 %v1608, %v1634
    %s1651 = sld [smem:[#allocation2 + $0x207]]
    %v1652 = vstv %s1651
    %v1653 = vmul.f32 %v93, %v1652
    %v1654 = vmul.f32 %v94, %v1652
    %v1655 = vmul.f32 %v95, %v1652
    %v1656 = vmul.f32 %v96, %v1652
    %v1657 = vmul.f32 %v97, %v1652
    %v1658 = vmul.f32 %v98, %v1652
    %v1659 = vmul.f32 %v99, %v1652
    %v1660 = vmul.f32 %v100, %v1652
    %v1669 = vrot.slane %v1653, 7
    %v1670 = vrot.slane %v1654, 7
    %v1671 = vrot.slane %v1655, 7
    %v1672 = vrot.slane %v1656, 7
    %v1673 = vrot.slane %v1657, 7
    %v1674 = vrot.slane %v1658, 7
    %v1675 = vrot.slane %v1659, 7
    %v1676 = vrot.slane %v1660, 7
    %v1685 = vadd.f32 %v1643, %v1669
    %v1686 = vadd.f32 %v1644, %v1670
    %v1687 = vadd.f32 %v1645, %v1671
    %v1688 = vadd.f32 %v1646, %v1672
    %v1689 = vadd.f32 %v1647, %v1673
    %v1690 = vadd.f32 %v1648, %v1674
    %v1691 = vadd.f32 %v1649, %v1675
    %v1692 = vadd.f32 %v1650, %v1676
    %s1693 = sld [smem:[#allocation5 + $0x4]]
    %v1694 = vstv %s1693
    %v1695 = vadd.f32 %v1685, %v1694
    %v1696 = vadd.f32 %v1686, %v1694
    %v1697 = vadd.f32 %v1687, %v1694
    %v1698 = vadd.f32 %v1688, %v1694
    %v1699 = vadd.f32 %v1689, %v1694
    %v1700 = vadd.f32 %v1690, %v1694
    %v1701 = vadd.f32 %v1691, %v1694
    %v1702 = vadd.f32 %v1692, %v1694
    %v1703 = vmax.f32 %v1695, 0.0
    %v1704 = vmax.f32 %v1696, 0.0
    %v1705 = vmax.f32 %v1697, 0.0
    %v1706 = vmax.f32 %v1698, 0.0
    %v1707 = vmax.f32 %v1699, 0.0
    %v1708 = vmax.f32 %v1700, 0.0
    %v1709 = vmax.f32 %v1701, 0.0
    %v1710 = vmax.f32 %v1702, 0.0
    %s1711 = sld [smem:[#allocation2 + $0x280]]
    %v1712 = vstv %s1711
    %v1713 = vmul.f32 %v93, %v1712
    %v1714 = vmul.f32 %v94, %v1712
    %v1715 = vmul.f32 %v95, %v1712
    %v1716 = vmul.f32 %v96, %v1712
    %v1717 = vmul.f32 %v97, %v1712
    %v1718 = vmul.f32 %v98, %v1712
    %v1719 = vmul.f32 %v99, %v1712
    %v1720 = vmul.f32 %v100, %v1712
    %s1721 = sld [smem:[#allocation2 + $0x281]]
    %v1722 = vstv %s1721
    %v1723 = vmul.f32 %v93, %v1722
    %v1724 = vmul.f32 %v94, %v1722
    %v1725 = vmul.f32 %v95, %v1722
    %v1726 = vmul.f32 %v96, %v1722
    %v1727 = vmul.f32 %v97, %v1722
    %v1728 = vmul.f32 %v98, %v1722
    %v1729 = vmul.f32 %v99, %v1722
    %v1730 = vmul.f32 %v100, %v1722
    %v1739 = vrot.slane %v1723, 1
    %v1740 = vrot.slane %v1724, 1
    %v1741 = vrot.slane %v1725, 1
    %v1742 = vrot.slane %v1726, 1
    %v1743 = vrot.slane %v1727, 1
    %v1744 = vrot.slane %v1728, 1
    %v1745 = vrot.slane %v1729, 1
    %v1746 = vrot.slane %v1730, 1
    %v1755 = vadd.f32 %v1713, %v1739
    %v1756 = vadd.f32 %v1714, %v1740
    %v1757 = vadd.f32 %v1715, %v1741
    %v1758 = vadd.f32 %v1716, %v1742
    %v1759 = vadd.f32 %v1717, %v1743
    %v1760 = vadd.f32 %v1718, %v1744
    %v1761 = vadd.f32 %v1719, %v1745
    %v1762 = vadd.f32 %v1720, %v1746
    %s1763 = sld [smem:[#allocation2 + $0x282]]
    %v1764 = vstv %s1763
    %v1765 = vmul.f32 %v93, %v1764
    %v1766 = vmul.f32 %v94, %v1764
    %v1767 = vmul.f32 %v95, %v1764
    %v1768 = vmul.f32 %v96, %v1764
    %v1769 = vmul.f32 %v97, %v1764
    %v1770 = vmul.f32 %v98, %v1764
    %v1771 = vmul.f32 %v99, %v1764
    %v1772 = vmul.f32 %v100, %v1764
    %v1781 = vrot.slane %v1765, 2
    %v1782 = vrot.slane %v1766, 2
    %v1783 = vrot.slane %v1767, 2
    %v1784 = vrot.slane %v1768, 2
    %v1785 = vrot.slane %v1769, 2
    %v1786 = vrot.slane %v1770, 2
    %v1787 = vrot.slane %v1771, 2
    %v1788 = vrot.slane %v1772, 2
    %v1797 = vadd.f32 %v1755, %v1781
    %v1798 = vadd.f32 %v1756, %v1782
    %v1799 = vadd.f32 %v1757, %v1783
    %v1800 = vadd.f32 %v1758, %v1784
    %v1801 = vadd.f32 %v1759, %v1785
    %v1802 = vadd.f32 %v1760, %v1786
    %v1803 = vadd.f32 %v1761, %v1787
    %v1804 = vadd.f32 %v1762, %v1788
    %s1805 = sld [smem:[#allocation2 + $0x283]]
    %v1806 = vstv %s1805
    %v1807 = vmul.f32 %v93, %v1806
    %v1808 = vmul.f32 %v94, %v1806
    %v1809 = vmul.f32 %v95, %v1806
    %v1810 = vmul.f32 %v96, %v1806
    %v1811 = vmul.f32 %v97, %v1806
    %v1812 = vmul.f32 %v98, %v1806
    %v1813 = vmul.f32 %v99, %v1806
    %v1814 = vmul.f32 %v100, %v1806
    %v1823 = vrot.slane %v1807, 3
    %v1824 = vrot.slane %v1808, 3
    %v1825 = vrot.slane %v1809, 3
    %v1826 = vrot.slane %v1810, 3
    %v1827 = vrot.slane %v1811, 3
    %v1828 = vrot.slane %v1812, 3
    %v1829 = vrot.slane %v1813, 3
    %v1830 = vrot.slane %v1814, 3
    %v1839 = vadd.f32 %v1797, %v1823
    %v1840 = vadd.f32 %v1798, %v1824
    %v1841 = vadd.f32 %v1799, %v1825
    %v1842 = vadd.f32 %v1800, %v1826
    %v1843 = vadd.f32 %v1801, %v1827
    %v1844 = vadd.f32 %v1802, %v1828
    %v1845 = vadd.f32 %v1803, %v1829
    %v1846 = vadd.f32 %v1804, %v1830
    %s1847 = sld [smem:[#allocation2 + $0x284]]
    %v1848 = vstv %s1847
    %v1849 = vmul.f32 %v93, %v1848
    %v1850 = vmul.f32 %v94, %v1848
    %v1851 = vmul.f32 %v95, %v1848
    %v1852 = vmul.f32 %v96, %v1848
    %v1853 = vmul.f32 %v97, %v1848
    %v1854 = vmul.f32 %v98, %v1848
    %v1855 = vmul.f32 %v99, %v1848
    %v1856 = vmul.f32 %v100, %v1848
    %v1865 = vrot.slane %v1849, 4
    %v1866 = vrot.slane %v1850, 4
    %v1867 = vrot.slane %v1851, 4
    %v1868 = vrot.slane %v1852, 4
    %v1869 = vrot.slane %v1853, 4
    %v1870 = vrot.slane %v1854, 4
    %v1871 = vrot.slane %v1855, 4
    %v1872 = vrot.slane %v1856, 4
    %v1881 = vadd.f32 %v1839, %v1865
    %v1882 = vadd.f32 %v1840, %v1866
    %v1883 = vadd.f32 %v1841, %v1867
    %v1884 = vadd.f32 %v1842, %v1868
    %v1885 = vadd.f32 %v1843, %v1869
    %v1886 = vadd.f32 %v1844, %v1870
    %v1887 = vadd.f32 %v1845, %v1871
    %v1888 = vadd.f32 %v1846, %v1872
    %s1889 = sld [smem:[#allocation2 + $0x285]]
    %v1890 = vstv %s1889
    %v1891 = vmul.f32 %v93, %v1890
    %v1892 = vmul.f32 %v94, %v1890
    %v1893 = vmul.f32 %v95, %v1890
    %v1894 = vmul.f32 %v96, %v1890
    %v1895 = vmul.f32 %v97, %v1890
    %v1896 = vmul.f32 %v98, %v1890
    %v1897 = vmul.f32 %v99, %v1890
    %v1898 = vmul.f32 %v100, %v1890
    %v1907 = vrot.slane %v1891, 5
    %v1908 = vrot.slane %v1892, 5
    %v1909 = vrot.slane %v1893, 5
    %v1910 = vrot.slane %v1894, 5
    %v1911 = vrot.slane %v1895, 5
    %v1912 = vrot.slane %v1896, 5
    %v1913 = vrot.slane %v1897, 5
    %v1914 = vrot.slane %v1898, 5
    %v1923 = vadd.f32 %v1881, %v1907
    %v1924 = vadd.f32 %v1882, %v1908
    %v1925 = vadd.f32 %v1883, %v1909
    %v1926 = vadd.f32 %v1884, %v1910
    %v1927 = vadd.f32 %v1885, %v1911
    %v1928 = vadd.f32 %v1886, %v1912
    %v1929 = vadd.f32 %v1887, %v1913
    %v1930 = vadd.f32 %v1888, %v1914
    %s1931 = sld [smem:[#allocation2 + $0x286]]
    %v1932 = vstv %s1931
    %v1933 = vmul.f32 %v93, %v1932
    %v1934 = vmul.f32 %v94, %v1932
    %v1935 = vmul.f32 %v95, %v1932
    %v1936 = vmul.f32 %v96, %v1932
    %v1937 = vmul.f32 %v97, %v1932
    %v1938 = vmul.f32 %v98, %v1932
    %v1939 = vmul.f32 %v99, %v1932
    %v1940 = vmul.f32 %v100, %v1932
    %v1949 = vrot.slane %v1933, 6
    %v1950 = vrot.slane %v1934, 6
    %v1951 = vrot.slane %v1935, 6
    %v1952 = vrot.slane %v1936, 6
    %v1953 = vrot.slane %v1937, 6
    %v1954 = vrot.slane %v1938, 6
    %v1955 = vrot.slane %v1939, 6
    %v1956 = vrot.slane %v1940, 6
    %v1965 = vadd.f32 %v1923, %v1949
    %v1966 = vadd.f32 %v1924, %v1950
    %v1967 = vadd.f32 %v1925, %v1951
    %v1968 = vadd.f32 %v1926, %v1952
    %v1969 = vadd.f32 %v1927, %v1953
    %v1970 = vadd.f32 %v1928, %v1954
    %v1971 = vadd.f32 %v1929, %v1955
    %v1972 = vadd.f32 %v1930, %v1956
    %s1973 = sld [smem:[#allocation2 + $0x287]]
    %v1974 = vstv %s1973
    %v1975 = vmul.f32 %v93, %v1974
    %v1976 = vmul.f32 %v94, %v1974
    %v1977 = vmul.f32 %v95, %v1974
    %v1978 = vmul.f32 %v96, %v1974
    %v1979 = vmul.f32 %v97, %v1974
    %v1980 = vmul.f32 %v98, %v1974
    %v1981 = vmul.f32 %v99, %v1974
    %v1982 = vmul.f32 %v100, %v1974
    %v1991 = vrot.slane %v1975, 7
    %v1992 = vrot.slane %v1976, 7
    %v1993 = vrot.slane %v1977, 7
    %v1994 = vrot.slane %v1978, 7
    %v1995 = vrot.slane %v1979, 7
    %v1996 = vrot.slane %v1980, 7
    %v1997 = vrot.slane %v1981, 7
    %v1998 = vrot.slane %v1982, 7
    %v2007 = vadd.f32 %v1965, %v1991
    %v2008 = vadd.f32 %v1966, %v1992
    %v2009 = vadd.f32 %v1967, %v1993
    %v2010 = vadd.f32 %v1968, %v1994
    %v2011 = vadd.f32 %v1969, %v1995
    %v2012 = vadd.f32 %v1970, %v1996
    %v2013 = vadd.f32 %v1971, %v1997
    %v2014 = vadd.f32 %v1972, %v1998
    %s2015 = sld [smem:[#allocation5 + $0x5]]
    %v2016 = vstv %s2015
    %v2017 = vadd.f32 %v2007, %v2016
    %v2018 = vadd.f32 %v2008, %v2016
    %v2019 = vadd.f32 %v2009, %v2016
    %v2020 = vadd.f32 %v2010, %v2016
    %v2021 = vadd.f32 %v2011, %v2016
    %v2022 = vadd.f32 %v2012, %v2016
    %v2023 = vadd.f32 %v2013, %v2016
    %v2024 = vadd.f32 %v2014, %v2016
    %v2025 = vmax.f32 %v2017, 0.0
    %v2026 = vmax.f32 %v2018, 0.0
    %v2027 = vmax.f32 %v2019, 0.0
    %v2028 = vmax.f32 %v2020, 0.0
    %v2029 = vmax.f32 %v2021, 0.0
    %v2030 = vmax.f32 %v2022, 0.0
    %v2031 = vmax.f32 %v2023, 0.0
    %v2032 = vmax.f32 %v2024, 0.0
    %s2033 = sld [smem:[#allocation2 + $0x300]]
    %v2034 = vstv %s2033
    %v2035 = vmul.f32 %v93, %v2034
    %v2036 = vmul.f32 %v94, %v2034
    %v2037 = vmul.f32 %v95, %v2034
    %v2038 = vmul.f32 %v96, %v2034
    %v2039 = vmul.f32 %v97, %v2034
    %v2040 = vmul.f32 %v98, %v2034
    %v2041 = vmul.f32 %v99, %v2034
    %v2042 = vmul.f32 %v100, %v2034
    %s2043 = sld [smem:[#allocation2 + $0x301]]
    %v2044 = vstv %s2043
    %v2045 = vmul.f32 %v93, %v2044
    %v2046 = vmul.f32 %v94, %v2044
    %v2047 = vmul.f32 %v95, %v2044
    %v2048 = vmul.f32 %v96, %v2044
    %v2049 = vmul.f32 %v97, %v2044
    %v2050 = vmul.f32 %v98, %v2044
    %v2051 = vmul.f32 %v99, %v2044
    %v2052 = vmul.f32 %v100, %v2044
    %v2061 = vrot.slane %v2045, 1
    %v2062 = vrot.slane %v2046, 1
    %v2063 = vrot.slane %v2047, 1
    %v2064 = vrot.slane %v2048, 1
    %v2065 = vrot.slane %v2049, 1
    %v2066 = vrot.slane %v2050, 1
    %v2067 = vrot.slane %v2051, 1
    %v2068 = vrot.slane %v2052, 1
    %v2077 = vadd.f32 %v2035, %v2061
    %v2078 = vadd.f32 %v2036, %v2062
    %v2079 = vadd.f32 %v2037, %v2063
    %v2080 = vadd.f32 %v2038, %v2064
    %v2081 = vadd.f32 %v2039, %v2065
    %v2082 = vadd.f32 %v2040, %v2066
    %v2083 = vadd.f32 %v2041, %v2067
    %v2084 = vadd.f32 %v2042, %v2068
    %s2085 = sld [smem:[#allocation2 + $0x302]]
    %v2086 = vstv %s2085
    %v2087 = vmul.f32 %v93, %v2086
    %v2088 = vmul.f32 %v94, %v2086
    %v2089 = vmul.f32 %v95, %v2086
    %v2090 = vmul.f32 %v96, %v2086
    %v2091 = vmul.f32 %v97, %v2086
    %v2092 = vmul.f32 %v98, %v2086
    %v2093 = vmul.f32 %v99, %v2086
    %v2094 = vmul.f32 %v100, %v2086
    %v2103 = vrot.slane %v2087, 2
    %v2104 = vrot.slane %v2088, 2
    %v2105 = vrot.slane %v2089, 2
    %v2106 = vrot.slane %v2090, 2
    %v2107 = vrot.slane %v2091, 2
    %v2108 = vrot.slane %v2092, 2
    %v2109 = vrot.slane %v2093, 2
    %v2110 = vrot.slane %v2094, 2
    %v2119 = vadd.f32 %v2077, %v2103
    %v2120 = vadd.f32 %v2078, %v2104
    %v2121 = vadd.f32 %v2079, %v2105
    %v2122 = vadd.f32 %v2080, %v2106
    %v2123 = vadd.f32 %v2081, %v2107
    %v2124 = vadd.f32 %v2082, %v2108
    %v2125 = vadd.f32 %v2083, %v2109
    %v2126 = vadd.f32 %v2084, %v2110
    %s2127 = sld [smem:[#allocation2 + $0x303]]
    %v2128 = vstv %s2127
    %v2129 = vmul.f32 %v93, %v2128
    %v2130 = vmul.f32 %v94, %v2128
    %v2131 = vmul.f32 %v95, %v2128
    %v2132 = vmul.f32 %v96, %v2128
    %v2133 = vmul.f32 %v97, %v2128
    %v2134 = vmul.f32 %v98, %v2128
    %v2135 = vmul.f32 %v99, %v2128
    %v2136 = vmul.f32 %v100, %v2128
    %v2145 = vrot.slane %v2129, 3
    %v2146 = vrot.slane %v2130, 3
    %v2147 = vrot.slane %v2131, 3
    %v2148 = vrot.slane %v2132, 3
    %v2149 = vrot.slane %v2133, 3
    %v2150 = vrot.slane %v2134, 3
    %v2151 = vrot.slane %v2135, 3
    %v2152 = vrot.slane %v2136, 3
    %v2161 = vadd.f32 %v2119, %v2145
    %v2162 = vadd.f32 %v2120, %v2146
    %v2163 = vadd.f32 %v2121, %v2147
    %v2164 = vadd.f32 %v2122, %v2148
    %v2165 = vadd.f32 %v2123, %v2149
    %v2166 = vadd.f32 %v2124, %v2150
    %v2167 = vadd.f32 %v2125, %v2151
    %v2168 = vadd.f32 %v2126, %v2152
    %s2169 = sld [smem:[#allocation2 + $0x304]]
    %v2170 = vstv %s2169
    %v2171 = vmul.f32 %v93, %v2170
    %v2172 = vmul.f32 %v94, %v2170
    %v2173 = vmul.f32 %v95, %v2170
    %v2174 = vmul.f32 %v96, %v2170
    %v2175 = vmul.f32 %v97, %v2170
    %v2176 = vmul.f32 %v98, %v2170
    %v2177 = vmul.f32 %v99, %v2170
    %v2178 = vmul.f32 %v100, %v2170
    %v2187 = vrot.slane %v2171, 4
    %v2188 = vrot.slane %v2172, 4
    %v2189 = vrot.slane %v2173, 4
    %v2190 = vrot.slane %v2174, 4
    %v2191 = vrot.slane %v2175, 4
    %v2192 = vrot.slane %v2176, 4
    %v2193 = vrot.slane %v2177, 4
    %v2194 = vrot.slane %v2178, 4
    %v2203 = vadd.f32 %v2161, %v2187
    %v2204 = vadd.f32 %v2162, %v2188
    %v2205 = vadd.f32 %v2163, %v2189
    %v2206 = vadd.f32 %v2164, %v2190
    %v2207 = vadd.f32 %v2165, %v2191
    %v2208 = vadd.f32 %v2166, %v2192
    %v2209 = vadd.f32 %v2167, %v2193
    %v2210 = vadd.f32 %v2168, %v2194
    %s2211 = sld [smem:[#allocation2 + $0x305]]
    %v2212 = vstv %s2211
    %v2213 = vmul.f32 %v93, %v2212
    %v2214 = vmul.f32 %v94, %v2212
    %v2215 = vmul.f32 %v95, %v2212
    %v2216 = vmul.f32 %v96, %v2212
    %v2217 = vmul.f32 %v97, %v2212
    %v2218 = vmul.f32 %v98, %v2212
    %v2219 = vmul.f32 %v99, %v2212
    %v2220 = vmul.f32 %v100, %v2212
    %v2229 = vrot.slane %v2213, 5
    %v2230 = vrot.slane %v2214, 5
    %v2231 = vrot.slane %v2215, 5
    %v2232 = vrot.slane %v2216, 5
    %v2233 = vrot.slane %v2217, 5
    %v2234 = vrot.slane %v2218, 5
    %v2235 = vrot.slane %v2219, 5
    %v2236 = vrot.slane %v2220, 5
    %v2245 = vadd.f32 %v2203, %v2229
    %v2246 = vadd.f32 %v2204, %v2230
    %v2247 = vadd.f32 %v2205, %v2231
    %v2248 = vadd.f32 %v2206, %v2232
    %v2249 = vadd.f32 %v2207, %v2233
    %v2250 = vadd.f32 %v2208, %v2234
    %v2251 = vadd.f32 %v2209, %v2235
    %v2252 = vadd.f32 %v2210, %v2236
    %s2253 = sld [smem:[#allocation2 + $0x306]]
    %v2254 = vstv %s2253
    %v2255 = vmul.f32 %v93, %v2254
    %v2256 = vmul.f32 %v94, %v2254
    %v2257 = vmul.f32 %v95, %v2254
    %v2258 = vmul.f32 %v96, %v2254
    %v2259 = vmul.f32 %v97, %v2254
    %v2260 = vmul.f32 %v98, %v2254
    %v2261 = vmul.f32 %v99, %v2254
    %v2262 = vmul.f32 %v100, %v2254
    %v2271 = vrot.slane %v2255, 6
    %v2272 = vrot.slane %v2256, 6
    %v2273 = vrot.slane %v2257, 6
    %v2274 = vrot.slane %v2258, 6
    %v2275 = vrot.slane %v2259, 6
    %v2276 = vrot.slane %v2260, 6
    %v2277 = vrot.slane %v2261, 6
    %v2278 = vrot.slane %v2262, 6
    %v2287 = vadd.f32 %v2245, %v2271
    %v2288 = vadd.f32 %v2246, %v2272
    %v2289 = vadd.f32 %v2247, %v2273
    %v2290 = vadd.f32 %v2248, %v2274
    %v2291 = vadd.f32 %v2249, %v2275
    %v2292 = vadd.f32 %v2250, %v2276
    %v2293 = vadd.f32 %v2251, %v2277
    %v2294 = vadd.f32 %v2252, %v2278
    %s2295 = sld [smem:[#allocation2 + $0x307]]
    %v2296 = vstv %s2295
    %v2297 = vmul.f32 %v93, %v2296
    %v2298 = vmul.f32 %v94, %v2296
    %v2299 = vmul.f32 %v95, %v2296
    %v2300 = vmul.f32 %v96, %v2296
    %v2301 = vmul.f32 %v97, %v2296
    %v2302 = vmul.f32 %v98, %v2296
    %v2303 = vmul.f32 %v99, %v2296
    %v2304 = vmul.f32 %v100, %v2296
    %v2313 = vrot.slane %v2297, 7
    %v2314 = vrot.slane %v2298, 7
    %v2315 = vrot.slane %v2299, 7
    %v2316 = vrot.slane %v2300, 7
    %v2317 = vrot.slane %v2301, 7
    %v2318 = vrot.slane %v2302, 7
    %v2319 = vrot.slane %v2303, 7
    %v2320 = vrot.slane %v2304, 7
    %v2329 = vadd.f32 %v2287, %v2313
    %v2330 = vadd.f32 %v2288, %v2314
    %v2331 = vadd.f32 %v2289, %v2315
    %v2332 = vadd.f32 %v2290, %v2316
    %v2333 = vadd.f32 %v2291, %v2317
    %v2334 = vadd.f32 %v2292, %v2318
    %v2335 = vadd.f32 %v2293, %v2319
    %v2336 = vadd.f32 %v2294, %v2320
    %s2337 = sld [smem:[#allocation5 + $0x6]]
    %v2338 = vstv %s2337
    %v2339 = vadd.f32 %v2329, %v2338
    %v2340 = vadd.f32 %v2330, %v2338
    %v2341 = vadd.f32 %v2331, %v2338
    %v2342 = vadd.f32 %v2332, %v2338
    %v2343 = vadd.f32 %v2333, %v2338
    %v2344 = vadd.f32 %v2334, %v2338
    %v2345 = vadd.f32 %v2335, %v2338
    %v2346 = vadd.f32 %v2336, %v2338
    %v2347 = vmax.f32 %v2339, 0.0
    %v2348 = vmax.f32 %v2340, 0.0
    %v2349 = vmax.f32 %v2341, 0.0
    %v2350 = vmax.f32 %v2342, 0.0
    %v2351 = vmax.f32 %v2343, 0.0
    %v2352 = vmax.f32 %v2344, 0.0
    %v2353 = vmax.f32 %v2345, 0.0
    %v2354 = vmax.f32 %v2346, 0.0
    %s2355 = sld [smem:[#allocation2 + $0x380]]
    %v2356 = vstv %s2355
    %v2357 = vmul.f32 %v93, %v2356
    %v2358 = vmul.f32 %v94, %v2356
    %v2359 = vmul.f32 %v95, %v2356
    %v2360 = vmul.f32 %v96, %v2356
    %v2361 = vmul.f32 %v97, %v2356
    %v2362 = vmul.f32 %v98, %v2356
    %v2363 = vmul.f32 %v99, %v2356
    %v2364 = vmul.f32 %v100, %v2356
    %s2365 = sld [smem:[#allocation2 + $0x381]]
    %v2366 = vstv %s2365
    %v2367 = vmul.f32 %v93, %v2366
    %v2368 = vmul.f32 %v94, %v2366
    %v2369 = vmul.f32 %v95, %v2366
    %v2370 = vmul.f32 %v96, %v2366
    %v2371 = vmul.f32 %v97, %v2366
    %v2372 = vmul.f32 %v98, %v2366
    %v2373 = vmul.f32 %v99, %v2366
    %v2374 = vmul.f32 %v100, %v2366
    %v2383 = vrot.slane %v2367, 1
    %v2384 = vrot.slane %v2368, 1
    %v2385 = vrot.slane %v2369, 1
    %v2386 = vrot.slane %v2370, 1
    %v2387 = vrot.slane %v2371, 1
    %v2388 = vrot.slane %v2372, 1
    %v2389 = vrot.slane %v2373, 1
    %v2390 = vrot.slane %v2374, 1
    %v2399 = vadd.f32 %v2357, %v2383
    %v2400 = vadd.f32 %v2358, %v2384
    %v2401 = vadd.f32 %v2359, %v2385
    %v2402 = vadd.f32 %v2360, %v2386
    %v2403 = vadd.f32 %v2361, %v2387
    %v2404 = vadd.f32 %v2362, %v2388
    %v2405 = vadd.f32 %v2363, %v2389
    %v2406 = vadd.f32 %v2364, %v2390
    %s2407 = sld [smem:[#allocation2 + $0x382]]
    %v2408 = vstv %s2407
    %v2409 = vmul.f32 %v93, %v2408
    %v2410 = vmul.f32 %v94, %v2408
    %v2411 = vmul.f32 %v95, %v2408
    %v2412 = vmul.f32 %v96, %v2408
    %v2413 = vmul.f32 %v97, %v2408
    %v2414 = vmul.f32 %v98, %v2408
    %v2415 = vmul.f32 %v99, %v2408
    %v2416 = vmul.f32 %v100, %v2408
    %v2425 = vrot.slane %v2409, 2
    %v2426 = vrot.slane %v2410, 2
    %v2427 = vrot.slane %v2411, 2
    %v2428 = vrot.slane %v2412, 2
    %v2429 = vrot.slane %v2413, 2
    %v2430 = vrot.slane %v2414, 2
    %v2431 = vrot.slane %v2415, 2
    %v2432 = vrot.slane %v2416, 2
    %v2441 = vadd.f32 %v2399, %v2425
    %v2442 = vadd.f32 %v2400, %v2426
    %v2443 = vadd.f32 %v2401, %v2427
    %v2444 = vadd.f32 %v2402, %v2428
    %v2445 = vadd.f32 %v2403, %v2429
    %v2446 = vadd.f32 %v2404, %v2430
    %v2447 = vadd.f32 %v2405, %v2431
    %v2448 = vadd.f32 %v2406, %v2432
    %s2449 = sld [smem:[#allocation2 + $0x383]]
    %v2450 = vstv %s2449
    %v2451 = vmul.f32 %v93, %v2450
    %v2452 = vmul.f32 %v94, %v2450
    %v2453 = vmul.f32 %v95, %v2450
    %v2454 = vmul.f32 %v96, %v2450
    %v2455 = vmul.f32 %v97, %v2450
    %v2456 = vmul.f32 %v98, %v2450
    %v2457 = vmul.f32 %v99, %v2450
    %v2458 = vmul.f32 %v100, %v2450
    %v2467 = vrot.slane %v2451, 3
    %v2468 = vrot.slane %v2452, 3
    %v2469 = vrot.slane %v2453, 3
    %v2470 = vrot.slane %v2454, 3
    %v2471 = vrot.slane %v2455, 3
    %v2472 = vrot.slane %v2456, 3
    %v2473 = vrot.slane %v2457, 3
    %v2474 = vrot.slane %v2458, 3
    %v2483 = vadd.f32 %v2441, %v2467
    %v2484 = vadd.f32 %v2442, %v2468
    %v2485 = vadd.f32 %v2443, %v2469
    %v2486 = vadd.f32 %v2444, %v2470
    %v2487 = vadd.f32 %v2445, %v2471
    %v2488 = vadd.f32 %v2446, %v2472
    %v2489 = vadd.f32 %v2447, %v2473
    %v2490 = vadd.f32 %v2448, %v2474
    %s2491 = sld [smem:[#allocation2 + $0x384]]
    %v2492 = vstv %s2491
    %v2493 = vmul.f32 %v93, %v2492
    %v2494 = vmul.f32 %v94, %v2492
    %v2495 = vmul.f32 %v95, %v2492
    %v2496 = vmul.f32 %v96, %v2492
    %v2497 = vmul.f32 %v97, %v2492
    %v2498 = vmul.f32 %v98, %v2492
    %v2499 = vmul.f32 %v99, %v2492
    %v2500 = vmul.f32 %v100, %v2492
    %v2509 = vrot.slane %v2493, 4
    %v2510 = vrot.slane %v2494, 4
    %v2511 = vrot.slane %v2495, 4
    %v2512 = vrot.slane %v2496, 4
    %v2513 = vrot.slane %v2497, 4
    %v2514 = vrot.slane %v2498, 4
    %v2515 = vrot.slane %v2499, 4
    %v2516 = vrot.slane %v2500, 4
    %v2525 = vadd.f32 %v2483, %v2509
    %v2526 = vadd.f32 %v2484, %v2510
    %v2527 = vadd.f32 %v2485, %v2511
    %v2528 = vadd.f32 %v2486, %v2512
    %v2529 = vadd.f32 %v2487, %v2513
    %v2530 = vadd.f32 %v2488, %v2514
    %v2531 = vadd.f32 %v2489, %v2515
    %v2532 = vadd.f32 %v2490, %v2516
    %s2533 = sld [smem:[#allocation2 + $0x385]]
    %v2534 = vstv %s2533
    %v2535 = vmul.f32 %v93, %v2534
    %v2536 = vmul.f32 %v94, %v2534
    %v2537 = vmul.f32 %v95, %v2534
    %v2538 = vmul.f32 %v96, %v2534
    %v2539 = vmul.f32 %v97, %v2534
    %v2540 = vmul.f32 %v98, %v2534
    %v2541 = vmul.f32 %v99, %v2534
    %v2542 = vmul.f32 %v100, %v2534
    %v2551 = vrot.slane %v2535, 5
    %v2552 = vrot.slane %v2536, 5
    %v2553 = vrot.slane %v2537, 5
    %v2554 = vrot.slane %v2538, 5
    %v2555 = vrot.slane %v2539, 5
    %v2556 = vrot.slane %v2540, 5
    %v2557 = vrot.slane %v2541, 5
    %v2558 = vrot.slane %v2542, 5
    %v2567 = vadd.f32 %v2525, %v2551
    %v2568 = vadd.f32 %v2526, %v2552
    %v2569 = vadd.f32 %v2527, %v2553
    %v2570 = vadd.f32 %v2528, %v2554
    %v2571 = vadd.f32 %v2529, %v2555
    %v2572 = vadd.f32 %v2530, %v2556
    %v2573 = vadd.f32 %v2531, %v2557
    %v2574 = vadd.f32 %v2532, %v2558
    %s2575 = sld [smem:[#allocation2 + $0x386]]
    %v2576 = vstv %s2575
    %v2577 = vmul.f32 %v93, %v2576
    %v2578 = vmul.f32 %v94, %v2576
    %v2579 = vmul.f32 %v95, %v2576
    %v2580 = vmul.f32 %v96, %v2576
    %v2581 = vmul.f32 %v97, %v2576
    %v2582 = vmul.f32 %v98, %v2576
    %v2583 = vmul.f32 %v99, %v2576
    %v2584 = vmul.f32 %v100, %v2576
    %v2593 = vrot.slane %v2577, 6
    %v2594 = vrot.slane %v2578, 6
    %v2595 = vrot.slane %v2579, 6
    %v2596 = vrot.slane %v2580, 6
    %v2597 = vrot.slane %v2581, 6
    %v2598 = vrot.slane %v2582, 6
    %v2599 = vrot.slane %v2583, 6
    %v2600 = vrot.slane %v2584, 6
    %v2609 = vadd.f32 %v2567, %v2593
    %v2610 = vadd.f32 %v2568, %v2594
    %v2611 = vadd.f32 %v2569, %v2595
    %v2612 = vadd.f32 %v2570, %v2596
    %v2613 = vadd.f32 %v2571, %v2597
    %v2614 = vadd.f32 %v2572, %v2598
    %v2615 = vadd.f32 %v2573, %v2599
    %v2616 = vadd.f32 %v2574, %v2600
    %s2617 = sld [smem:[#allocation2 + $0x387]]
    %v2618 = vstv %s2617
    %v2619 = vmul.f32 %v93, %v2618
    %v2620 = vmul.f32 %v94, %v2618
    %v2621 = vmul.f32 %v95, %v2618
    %v2622 = vmul.f32 %v96, %v2618
    %v2623 = vmul.f32 %v97, %v2618
    %v2624 = vmul.f32 %v98, %v2618
    %v2625 = vmul.f32 %v99, %v2618
    %v2626 = vmul.f32 %v100, %v2618
    %v2635 = vrot.slane %v2619, 7
    %v2636 = vrot.slane %v2620, 7
    %v2637 = vrot.slane %v2621, 7
    %v2638 = vrot.slane %v2622, 7
    %v2639 = vrot.slane %v2623, 7
    %v2640 = vrot.slane %v2624, 7
    %v2641 = vrot.slane %v2625, 7
    %v2642 = vrot.slane %v2626, 7
    %v2651 = vadd.f32 %v2609, %v2635
    %v2652 = vadd.f32 %v2610, %v2636
    %v2653 = vadd.f32 %v2611, %v2637
    %v2654 = vadd.f32 %v2612, %v2638
    %v2655 = vadd.f32 %v2613, %v2639
    %v2656 = vadd.f32 %v2614, %v2640
    %v2657 = vadd.f32 %v2615, %v2641
    %v2658 = vadd.f32 %v2616, %v2642
    %s2659 = sld [smem:[#allocation5 + $0x7]]
    %v2660 = vstv %s2659
    %v2661 = vadd.f32 %v2651, %v2660
    %v2662 = vadd.f32 %v2652, %v2660
    %v2663 = vadd.f32 %v2653, %v2660
    %v2664 = vadd.f32 %v2654, %v2660
    %v2665 = vadd.f32 %v2655, %v2660
    %v2666 = vadd.f32 %v2656, %v2660
    %v2667 = vadd.f32 %v2657, %v2660
    %v2668 = vadd.f32 %v2658, %v2660
    %v2669 = vmax.f32 %v2661, 0.0
    %v2670 = vmax.f32 %v2662, 0.0
    %v2671 = vmax.f32 %v2663, 0.0
    %v2672 = vmax.f32 %v2664, 0.0
    %v2673 = vmax.f32 %v2665, 0.0
    %v2674 = vmax.f32 %v2666, 0.0
    %v2675 = vmax.f32 %v2667, 0.0
    %v2676 = vmax.f32 %v2668, 0.0
    %s2677 = sld [smem:[#allocation7]]
    %v2678 = vstv %s2677
    %v2679 = vmul.f32 %v415, %v2678
    %v2680 = vmul.f32 %v416, %v2678
    %v2681 = vmul.f32 %v417, %v2678
    %v2682 = vmul.f32 %v418, %v2678
    %v2683 = vmul.f32 %v419, %v2678
    %v2684 = vmul.f32 %v420, %v2678
    %v2685 = vmul.f32 %v421, %v2678
    %v2686 = vmul.f32 %v422, %v2678
    %s2687 = sld [smem:[#allocation7 + $0x1]]
    %v2688 = vstv %s2687
    %v2689 = vmul.f32 %v737, %v2688
    %v2690 = vmul.f32 %v738, %v2688
    %v2691 = vmul.f32 %v739, %v2688
    %v2692 = vmul.f32 %v740, %v2688
    %v2693 = vmul.f32 %v741, %v2688
    %v2694 = vmul.f32 %v742, %v2688
    %v2695 = vmul.f32 %v743, %v2688
    %v2696 = vmul.f32 %v744, %v2688
    %v2697 = vadd.f32 %v2679, %v2689
    %v2698 = vadd.f32 %v2680, %v2690
    %v2699 = vadd.f32 %v2681, %v2691
    %v2700 = vadd.f32 %v2682, %v2692
    %v2701 = vadd.f32 %v2683, %v2693
    %v2702 = vadd.f32 %v2684, %v2694
    %v2703 = vadd.f32 %v2685, %v2695
    %v2704 = vadd.f32 %v2686, %v2696
    %s2705 = sld [smem:[#allocation7 + $0x2]]
    %v2706 = vstv %s2705
    %v2707 = vmul.f32 %v1059, %v2706
    %v2708 = vmul.f32 %v1060, %v2706
    %v2709 = vmul.f32 %v1061, %v2706
    %v2710 = vmul.f32 %v1062, %v2706
    %v2711 = vmul.f32 %v1063, %v2706
    %v2712 = vmul.f32 %v1064, %v2706
    %v2713 = vmul.f32 %v1065, %v2706
    %v2714 = vmul.f32 %v1066, %v2706
    %v2715 = vadd.f32 %v2697, %v2707
    %v2716 = vadd.f32 %v2698, %v2708
    %v2717 = vadd.f32 %v2699, %v2709
    %v2718 = vadd.f32 %v2700, %v2710
    %v2719 = vadd.f32 %v2701, %v2711
    %v2720 = vadd.f32 %v2702, %v2712
    %v2721 = vadd.f32 %v2703, %v2713
    %v2722 = vadd.f32 %v2704, %v2714
    %s2723 = sld [smem:[#allocation7 + $0x3]]
    %v2724 = vstv %s2723
    %v2725 = vmul.f32 %v1381, %v2724
    %v2726 = vmul.f32 %v1382, %v2724
    %v2727 = vmul.f32 %v1383, %v2724
    %v2728 = vmul.f32 %v1384, %v2724
    %v2729 = vmul.f32 %v1385, %v2724
    %v2730 = vmul.f32 %v1386, %v2724
    %v2731 = vmul.f32 %v1387, %v2724
    %v2732 = vmul.f32 %v1388, %v2724
    %v2733 = vadd.f32 %v2715, %v2725
    %v2734 = vadd.f32 %v2716, %v2726
    %v2735 = vadd.f32 %v2717, %v2727
    %v2736 = vadd.f32 %v2718, %v2728
    %v2737 = vadd.f32 %v2719, %v2729
    %v2738 = vadd.f32 %v2720, %v2730
    %v2739 = vadd.f32 %v2721, %v2731
    %v2740 = vadd.f32 %v2722, %v2732
    %s2741 = sld [smem:[#allocation7 + $0x4]]
    %v2742 = vstv %s2741
    %v2743 = vmul.f32 %v1703, %v2742
    %v2744 = vmul.f32 %v1704, %v2742
    %v2745 = vmul.f32 %v1705, %v2742
    %v2746 = vmul.f32 %v1706, %v2742
    %v2747 = vmul.f32 %v1707, %v2742
    %v2748 = vmul.f32 %v1708, %v2742
    %v2749 = vmul.f32 %v1709, %v2742
    %v2750 = vmul.f32 %v1710, %v2742
    %v2751 = vadd.f32 %v2733, %v2743
    %v2752 = vadd.f32 %v2734, %v2744
    %v2753 = vadd.f32 %v2735, %v2745
    %v2754 = vadd.f32 %v2736, %v2746
    %v2755 = vadd.f32 %v2737, %v2747
    %v2756 = vadd.f32 %v2738, %v2748
    %v2757 = vadd.f32 %v2739, %v2749
    %v2758 = vadd.f32 %v2740, %v2750
    %s2759 = sld [smem:[#allocation7 + $0x5]]
    %v2760 = vstv %s2759
    %v2761 = vmul.f32 %v2025, %v2760
    %v2762 = vmul.f32 %v2026, %v2760
    %v2763 = vmul.f32 %v2027, %v2760
    %v2764 = vmul.f32 %v2028, %v2760
    %v2765 = vmul.f32 %v2029, %v2760
    %v2766 = vmul.f32 %v2030, %v2760
    %v2767 = vmul.f32 %v2031, %v2760
    %v2768 = vmul.f32 %v2032, %v2760
    %v2769 = vadd.f32 %v2751, %v2761
    %v2770 = vadd.f32 %v2752, %v2762
    %v2771 = vadd.f32 %v2753, %v2763
    %v2772 = vadd.f32 %v2754, %v2764
    %v2773 = vadd.f32 %v2755, %v2765
    %v2774 = vadd.f32 %v2756, %v2766
    %v2775 = vadd.f32 %v2757, %v2767
    %v2776 = vadd.f32 %v2758, %v2768
    %s2777 = sld [smem:[#allocation7 + $0x6]]
    %v2778 = vstv %s2777
    %v2779 = vmul.f32 %v2347, %v2778
    %v2780 = vmul.f32 %v2348, %v2778
    %v2781 = vmul.f32 %v2349, %v2778
    %v2782 = vmul.f32 %v2350, %v2778
    %v2783 = vmul.f32 %v2351, %v2778
    %v2784 = vmul.f32 %v2352, %v2778
    %v2785 = vmul.f32 %v2353, %v2778
    %v2786 = vmul.f32 %v2354, %v2778
    %v2787 = vadd.f32 %v2769, %v2779
    %v2788 = vadd.f32 %v2770, %v2780
    %v2789 = vadd.f32 %v2771, %v2781
    %v2790 = vadd.f32 %v2772, %v2782
    %v2791 = vadd.f32 %v2773, %v2783
    %v2792 = vadd.f32 %v2774, %v2784
    %v2793 = vadd.f32 %v2775, %v2785
    %v2794 = vadd.f32 %v2776, %v2786
    %s2795 = sld [smem:[#allocation7 + $0x7]]
    %v2796 = vstv %s2795
    %v2797 = vmul.f32 %v2669, %v2796
    %v2798 = vmul.f32 %v2670, %v2796
    %v2799 = vmul.f32 %v2671, %v2796
    %v2800 = vmul.f32 %v2672, %v2796
    %v2801 = vmul.f32 %v2673, %v2796
    %v2802 = vmul.f32 %v2674, %v2796
    %v2803 = vmul.f32 %v2675, %v2796
    %v2804 = vmul.f32 %v2676, %v2796
    %v2805 = vadd.f32 %v2787, %v2797
    %v2806 = vadd.f32 %v2788, %v2798
    %v2807 = vadd.f32 %v2789, %v2799
    %v2808 = vadd.f32 %v2790, %v2800
    %v2809 = vadd.f32 %v2791, %v2801
    %v2810 = vadd.f32 %v2792, %v2802
    %v2811 = vadd.f32 %v2793, %v2803
    %v2812 = vadd.f32 %v2794, %v2804
    %s2813 = sld [smem:[#allocation8]]
    %v2814 = vstv %s2813
    %v2815 = vadd.f32 %v2805, %v2814
    %v2816 = vadd.f32 %v2806, %v2814
    %v2817 = vadd.f32 %v2807, %v2814
    %v2818 = vadd.f32 %v2808, %v2814
    %v2819 = vadd.f32 %v2809, %v2814
    %v2820 = vadd.f32 %v2810, %v2814
    %v2821 = vadd.f32 %v2811, %v2814
    %v2822 = vadd.f32 %v2812, %v2814
    %v2823 = vadd.f32 %v2815, %v93
    %v2824 = vadd.f32 %v2816, %v94
    %v2825 = vadd.f32 %v2817, %v95
    %v2826 = vadd.f32 %v2818, %v96
    %v2827 = vadd.f32 %v2819, %v97
    %v2828 = vadd.f32 %v2820, %v98
    %v2829 = vadd.f32 %v2821, %v99
    %v2830 = vadd.f32 %v2822, %v100
    %s2831 = sld [smem:[#allocation7 + $0x80]]
    %v2832 = vstv %s2831
    %v2833 = vmul.f32 %v415, %v2832
    %v2834 = vmul.f32 %v416, %v2832
    %v2835 = vmul.f32 %v417, %v2832
    %v2836 = vmul.f32 %v418, %v2832
    %v2837 = vmul.f32 %v419, %v2832
    %v2838 = vmul.f32 %v420, %v2832
    %v2839 = vmul.f32 %v421, %v2832
    %v2840 = vmul.f32 %v422, %v2832
    %s2841 = sld [smem:[#allocation7 + $0x81]]
    %v2842 = vstv %s2841
    %v2843 = vmul.f32 %v737, %v2842
    %v2844 = vmul.f32 %v738, %v2842
    %v2845 = vmul.f32 %v739, %v2842
    %v2846 = vmul.f32 %v740, %v2842
    %v2847 = vmul.f32 %v741, %v2842
    %v2848 = vmul.f32 %v742, %v2842
    %v2849 = vmul.f32 %v743, %v2842
    %v2850 = vmul.f32 %v744, %v2842
    %v2851 = vadd.f32 %v2833, %v2843
    %v2852 = vadd.f32 %v2834, %v2844
    %v2853 = vadd.f32 %v2835, %v2845
    %v2854 = vadd.f32 %v2836, %v2846
    %v2855 = vadd.f32 %v2837, %v2847
    %v2856 = vadd.f32 %v2838, %v2848
    %v2857 = vadd.f32 %v2839, %v2849
    %v2858 = vadd.f32 %v2840, %v2850
    %s2859 = sld [smem:[#allocation7 + $0x82]]
    %v2860 = vstv %s2859
    %v2861 = vmul.f32 %v1059, %v2860
    %v2862 = vmul.f32 %v1060, %v2860
    %v2863 = vmul.f32 %v1061, %v2860
    %v2864 = vmul.f32 %v1062, %v2860
    %v2865 = vmul.f32 %v1063, %v2860
    %v2866 = vmul.f32 %v1064, %v2860
    %v2867 = vmul.f32 %v1065, %v2860
    %v2868 = vmul.f32 %v1066, %v2860
    %v2869 = vadd.f32 %v2851, %v2861
    %v2870 = vadd.f32 %v2852, %v2862
    %v2871 = vadd.f32 %v2853, %v2863
    %v2872 = vadd.f32 %v2854, %v2864
    %v2873 = vadd.f32 %v2855, %v2865
    %v2874 = vadd.f32 %v2856, %v2866
    %v2875 = vadd.f32 %v2857, %v2867
    %v2876 = vadd.f32 %v2858, %v2868
    %s2877 = sld [smem:[#allocation7 + $0x83]]
    %v2878 = vstv %s2877
    %v2879 = vmul.f32 %v1381, %v2878
    %v2880 = vmul.f32 %v1382, %v2878
    %v2881 = vmul.f32 %v1383, %v2878
    %v2882 = vmul.f32 %v1384, %v2878
    %v2883 = vmul.f32 %v1385, %v2878
    %v2884 = vmul.f32 %v1386, %v2878
    %v2885 = vmul.f32 %v1387, %v2878
    %v2886 = vmul.f32 %v1388, %v2878
    %v2887 = vadd.f32 %v2869, %v2879
    %v2888 = vadd.f32 %v2870, %v2880
    %v2889 = vadd.f32 %v2871, %v2881
    %v2890 = vadd.f32 %v2872, %v2882
    %v2891 = vadd.f32 %v2873, %v2883
    %v2892 = vadd.f32 %v2874, %v2884
    %v2893 = vadd.f32 %v2875, %v2885
    %v2894 = vadd.f32 %v2876, %v2886
    %s2895 = sld [smem:[#allocation7 + $0x84]]
    %v2896 = vstv %s2895
    %v2897 = vmul.f32 %v1703, %v2896
    %v2898 = vmul.f32 %v1704, %v2896
    %v2899 = vmul.f32 %v1705, %v2896
    %v2900 = vmul.f32 %v1706, %v2896
    %v2901 = vmul.f32 %v1707, %v2896
    %v2902 = vmul.f32 %v1708, %v2896
    %v2903 = vmul.f32 %v1709, %v2896
    %v2904 = vmul.f32 %v1710, %v2896
    %v2905 = vadd.f32 %v2887, %v2897
    %v2906 = vadd.f32 %v2888, %v2898
    %v2907 = vadd.f32 %v2889, %v2899
    %v2908 = vadd.f32 %v2890, %v2900
    %v2909 = vadd.f32 %v2891, %v2901
    %v2910 = vadd.f32 %v2892, %v2902
    %v2911 = vadd.f32 %v2893, %v2903
    %v2912 = vadd.f32 %v2894, %v2904
    %s2913 = sld [smem:[#allocation7 + $0x85]]
    %v2914 = vstv %s2913
    %v2915 = vmul.f32 %v2025, %v2914
    %v2916 = vmul.f32 %v2026, %v2914
    %v2917 = vmul.f32 %v2027, %v2914
    %v2918 = vmul.f32 %v2028, %v2914
    %v2919 = vmul.f32 %v2029, %v2914
    %v2920 = vmul.f32 %v2030, %v2914
    %v2921 = vmul.f32 %v2031, %v2914
    %v2922 = vmul.f32 %v2032, %v2914
    %v2923 = vadd.f32 %v2905, %v2915
    %v2924 = vadd.f32 %v2906, %v2916
    %v2925 = vadd.f32 %v2907, %v2917
    %v2926 = vadd.f32 %v2908, %v2918
    %v2927 = vadd.f32 %v2909, %v2919
    %v2928 = vadd.f32 %v2910, %v2920
    %v2929 = vadd.f32 %v2911, %v2921
    %v2930 = vadd.f32 %v2912, %v2922
    %s2931 = sld [smem:[#allocation7 + $0x86]]
    %v2932 = vstv %s2931
    %v2933 = vmul.f32 %v2347, %v2932
    %v2934 = vmul.f32 %v2348, %v2932
    %v2935 = vmul.f32 %v2349, %v2932
    %v2936 = vmul.f32 %v2350, %v2932
    %v2937 = vmul.f32 %v2351, %v2932
    %v2938 = vmul.f32 %v2352, %v2932
    %v2939 = vmul.f32 %v2353, %v2932
    %v2940 = vmul.f32 %v2354, %v2932
    %v2941 = vadd.f32 %v2923, %v2933
    %v2942 = vadd.f32 %v2924, %v2934
    %v2943 = vadd.f32 %v2925, %v2935
    %v2944 = vadd.f32 %v2926, %v2936
    %v2945 = vadd.f32 %v2927, %v2937
    %v2946 = vadd.f32 %v2928, %v2938
    %v2947 = vadd.f32 %v2929, %v2939
    %v2948 = vadd.f32 %v2930, %v2940
    %s2949 = sld [smem:[#allocation7 + $0x87]]
    %v2950 = vstv %s2949
    %v2951 = vmul.f32 %v2669, %v2950
    %v2952 = vmul.f32 %v2670, %v2950
    %v2953 = vmul.f32 %v2671, %v2950
    %v2954 = vmul.f32 %v2672, %v2950
    %v2955 = vmul.f32 %v2673, %v2950
    %v2956 = vmul.f32 %v2674, %v2950
    %v2957 = vmul.f32 %v2675, %v2950
    %v2958 = vmul.f32 %v2676, %v2950
    %v2959 = vadd.f32 %v2941, %v2951
    %v2960 = vadd.f32 %v2942, %v2952
    %v2961 = vadd.f32 %v2943, %v2953
    %v2962 = vadd.f32 %v2944, %v2954
    %v2963 = vadd.f32 %v2945, %v2955
    %v2964 = vadd.f32 %v2946, %v2956
    %v2965 = vadd.f32 %v2947, %v2957
    %v2966 = vadd.f32 %v2948, %v2958
    %s2967 = sld [smem:[#allocation8 + $0x1]]
    %v2968 = vstv %s2967
    %v2969 = vadd.f32 %v2959, %v2968
    %v2970 = vadd.f32 %v2960, %v2968
    %v2971 = vadd.f32 %v2961, %v2968
    %v2972 = vadd.f32 %v2962, %v2968
    %v2973 = vadd.f32 %v2963, %v2968
    %v2974 = vadd.f32 %v2964, %v2968
    %v2975 = vadd.f32 %v2965, %v2968
    %v2976 = vadd.f32 %v2966, %v2968
    %v2985 = vrot.slane %v93, 1
    %v2986 = vrot.slane %v94, 1
    %v2987 = vrot.slane %v95, 1
    %v2988 = vrot.slane %v96, 1
    %v2989 = vrot.slane %v97, 1
    %v2990 = vrot.slane %v98, 1
    %v2991 = vrot.slane %v99, 1
    %v2992 = vrot.slane %v100, 1
    %v3001 = vadd.f32 %v2969, %v2985
    %v3002 = vadd.f32 %v2970, %v2986
    %v3003 = vadd.f32 %v2971, %v2987
    %v3004 = vadd.f32 %v2972, %v2988
    %v3005 = vadd.f32 %v2973, %v2989
    %v3006 = vadd.f32 %v2974, %v2990
    %v3007 = vadd.f32 %v2975, %v2991
    %v3008 = vadd.f32 %v2976, %v2992
    %s3009 = sld [smem:[#allocation7 + $0x100]]
    %v3010 = vstv %s3009
    %v3011 = vmul.f32 %v415, %v3010
    %v3012 = vmul.f32 %v416, %v3010
    %v3013 = vmul.f32 %v417, %v3010
    %v3014 = vmul.f32 %v418, %v3010
    %v3015 = vmul.f32 %v419, %v3010
    %v3016 = vmul.f32 %v420, %v3010
    %v3017 = vmul.f32 %v421, %v3010
    %v3018 = vmul.f32 %v422, %v3010
    %s3019 = sld [smem:[#allocation7 + $0x101]]
    %v3020 = vstv %s3019
    %v3021 = vmul.f32 %v737, %v3020
    %v3022 = vmul.f32 %v738, %v3020
    %v3023 = vmul.f32 %v739, %v3020
    %v3024 = vmul.f32 %v740, %v3020
    %v3025 = vmul.f32 %v741, %v3020
    %v3026 = vmul.f32 %v742, %v3020
    %v3027 = vmul.f32 %v743, %v3020
    %v3028 = vmul.f32 %v744, %v3020
    %v3029 = vadd.f32 %v3011, %v3021
    %v3030 = vadd.f32 %v3012, %v3022
    %v3031 = vadd.f32 %v3013, %v3023
    %v3032 = vadd.f32 %v3014, %v3024
    %v3033 = vadd.f32 %v3015, %v3025
    %v3034 = vadd.f32 %v3016, %v3026
    %v3035 = vadd.f32 %v3017, %v3027
    %v3036 = vadd.f32 %v3018, %v3028
    %s3037 = sld [smem:[#allocation7 + $0x102]]
    %v3038 = vstv %s3037
    %v3039 = vmul.f32 %v1059, %v3038
    %v3040 = vmul.f32 %v1060, %v3038
    %v3041 = vmul.f32 %v1061, %v3038
    %v3042 = vmul.f32 %v1062, %v3038
    %v3043 = vmul.f32 %v1063, %v3038
    %v3044 = vmul.f32 %v1064, %v3038
    %v3045 = vmul.f32 %v1065, %v3038
    %v3046 = vmul.f32 %v1066, %v3038
    %v3047 = vadd.f32 %v3029, %v3039
    %v3048 = vadd.f32 %v3030, %v3040
    %v3049 = vadd.f32 %v3031, %v3041
    %v3050 = vadd.f32 %v3032, %v3042
    %v3051 = vadd.f32 %v3033, %v3043
    %v3052 = vadd.f32 %v3034, %v3044
    %v3053 = vadd.f32 %v3035, %v3045
    %v3054 = vadd.f32 %v3036, %v3046
    %s3055 = sld [smem:[#allocation7 + $0x103]]
    %v3056 = vstv %s3055
    %v3057 = vmul.f32 %v1381, %v3056
    %v3058 = vmul.f32 %v1382, %v3056
    %v3059 = vmul.f32 %v1383, %v3056
    %v3060 = vmul.f32 %v1384, %v3056
    %v3061 = vmul.f32 %v1385, %v3056
    %v3062 = vmul.f32 %v1386, %v3056
    %v3063 = vmul.f32 %v1387, %v3056
    %v3064 = vmul.f32 %v1388, %v3056
    %v3065 = vadd.f32 %v3047, %v3057
    %v3066 = vadd.f32 %v3048, %v3058
    %v3067 = vadd.f32 %v3049, %v3059
    %v3068 = vadd.f32 %v3050, %v3060
    %v3069 = vadd.f32 %v3051, %v3061
    %v3070 = vadd.f32 %v3052, %v3062
    %v3071 = vadd.f32 %v3053, %v3063
    %v3072 = vadd.f32 %v3054, %v3064
    %s3073 = sld [smem:[#allocation7 + $0x104]]
    %v3074 = vstv %s3073
    %v3075 = vmul.f32 %v1703, %v3074
    %v3076 = vmul.f32 %v1704, %v3074
    %v3077 = vmul.f32 %v1705, %v3074
    %v3078 = vmul.f32 %v1706, %v3074
    %v3079 = vmul.f32 %v1707, %v3074
    %v3080 = vmul.f32 %v1708, %v3074
    %v3081 = vmul.f32 %v1709, %v3074
    %v3082 = vmul.f32 %v1710, %v3074
    %v3083 = vadd.f32 %v3065, %v3075
    %v3084 = vadd.f32 %v3066, %v3076
    %v3085 = vadd.f32 %v3067, %v3077
    %v3086 = vadd.f32 %v3068, %v3078
    %v3087 = vadd.f32 %v3069, %v3079
    %v3088 = vadd.f32 %v3070, %v3080
    %v3089 = vadd.f32 %v3071, %v3081
    %v3090 = vadd.f32 %v3072, %v3082
    %s3091 = sld [smem:[#allocation7 + $0x105]]
    %v3092 = vstv %s3091
    %v3093 = vmul.f32 %v2025, %v3092
    %v3094 = vmul.f32 %v2026, %v3092
    %v3095 = vmul.f32 %v2027, %v3092
    %v3096 = vmul.f32 %v2028, %v3092
    %v3097 = vmul.f32 %v2029, %v3092
    %v3098 = vmul.f32 %v2030, %v3092
    %v3099 = vmul.f32 %v2031, %v3092
    %v3100 = vmul.f32 %v2032, %v3092
    %v3101 = vadd.f32 %v3083, %v3093
    %v3102 = vadd.f32 %v3084, %v3094
    %v3103 = vadd.f32 %v3085, %v3095
    %v3104 = vadd.f32 %v3086, %v3096
    %v3105 = vadd.f32 %v3087, %v3097
    %v3106 = vadd.f32 %v3088, %v3098
    %v3107 = vadd.f32 %v3089, %v3099
    %v3108 = vadd.f32 %v3090, %v3100
    %s3109 = sld [smem:[#allocation7 + $0x106]]
    %v3110 = vstv %s3109
    %v3111 = vmul.f32 %v2347, %v3110
    %v3112 = vmul.f32 %v2348, %v3110
    %v3113 = vmul.f32 %v2349, %v3110
    %v3114 = vmul.f32 %v2350, %v3110
    %v3115 = vmul.f32 %v2351, %v3110
    %v3116 = vmul.f32 %v2352, %v3110
    %v3117 = vmul.f32 %v2353, %v3110
    %v3118 = vmul.f32 %v2354, %v3110
    %v3119 = vadd.f32 %v3101, %v3111
    %v3120 = vadd.f32 %v3102, %v3112
    %v3121 = vadd.f32 %v3103, %v3113
    %v3122 = vadd.f32 %v3104, %v3114
    %v3123 = vadd.f32 %v3105, %v3115
    %v3124 = vadd.f32 %v3106, %v3116
    %v3125 = vadd.f32 %v3107, %v3117
    %v3126 = vadd.f32 %v3108, %v3118
    %s3127 = sld [smem:[#allocation7 + $0x107]]
    %v3128 = vstv %s3127
    %v3129 = vmul.f32 %v2669, %v3128
    %v3130 = vmul.f32 %v2670, %v3128
    %v3131 = vmul.f32 %v2671, %v3128
    %v3132 = vmul.f32 %v2672, %v3128
    %v3133 = vmul.f32 %v2673, %v3128
    %v3134 = vmul.f32 %v2674, %v3128
    %v3135 = vmul.f32 %v2675, %v3128
    %v3136 = vmul.f32 %v2676, %v3128
    %v3137 = vadd.f32 %v3119, %v3129
    %v3138 = vadd.f32 %v3120, %v3130
    %v3139 = vadd.f32 %v3121, %v3131
    %v3140 = vadd.f32 %v3122, %v3132
    %v3141 = vadd.f32 %v3123, %v3133
    %v3142 = vadd.f32 %v3124, %v3134
    %v3143 = vadd.f32 %v3125, %v3135
    %v3144 = vadd.f32 %v3126, %v3136
    %s3145 = sld [smem:[#allocation8 + $0x2]]
    %v3146 = vstv %s3145
    %v3147 = vadd.f32 %v3137, %v3146
    %v3148 = vadd.f32 %v3138, %v3146
    %v3149 = vadd.f32 %v3139, %v3146
    %v3150 = vadd.f32 %v3140, %v3146
    %v3151 = vadd.f32 %v3141, %v3146
    %v3152 = vadd.f32 %v3142, %v3146
    %v3153 = vadd.f32 %v3143, %v3146
    %v3154 = vadd.f32 %v3144, %v3146
    %v3155 = vrot.slane %v93, 2
    %v3156 = vrot.slane %v94, 2
    %v3157 = vrot.slane %v95, 2
    %v3158 = vrot.slane %v96, 2
    %v3159 = vrot.slane %v97, 2
    %v3160 = vrot.slane %v98, 2
    %v3161 = vrot.slane %v99, 2
    %v3162 = vrot.slane %v100, 2
    %v3171 = vadd.f32 %v3147, %v3155
    %v3172 = vadd.f32 %v3148, %v3156
    %v3173 = vadd.f32 %v3149, %v3157
    %v3174 = vadd.f32 %v3150, %v3158
    %v3175 = vadd.f32 %v3151, %v3159
    %v3176 = vadd.f32 %v3152, %v3160
    %v3177 = vadd.f32 %v3153, %v3161
    %v3178 = vadd.f32 %v3154, %v3162
    %s3179 = sld [smem:[#allocation7 + $0x180]]
    %v3180 = vstv %s3179
    %v3181 = vmul.f32 %v415, %v3180
    %v3182 = vmul.f32 %v416, %v3180
    %v3183 = vmul.f32 %v417, %v3180
    %v3184 = vmul.f32 %v418, %v3180
    %v3185 = vmul.f32 %v419, %v3180
    %v3186 = vmul.f32 %v420, %v3180
    %v3187 = vmul.f32 %v421, %v3180
    %v3188 = vmul.f32 %v422, %v3180
    %s3189 = sld [smem:[#allocation7 + $0x181]]
    %v3190 = vstv %s3189
    %v3191 = vmul.f32 %v737, %v3190
    %v3192 = vmul.f32 %v738, %v3190
    %v3193 = vmul.f32 %v739, %v3190
    %v3194 = vmul.f32 %v740, %v3190
    %v3195 = vmul.f32 %v741, %v3190
    %v3196 = vmul.f32 %v742, %v3190
    %v3197 = vmul.f32 %v743, %v3190
    %v3198 = vmul.f32 %v744, %v3190
    %v3199 = vadd.f32 %v3181, %v3191
    %v3200 = vadd.f32 %v3182, %v3192
    %v3201 = vadd.f32 %v3183, %v3193
    %v3202 = vadd.f32 %v3184, %v3194
    %v3203 = vadd.f32 %v3185, %v3195
    %v3204 = vadd.f32 %v3186, %v3196
    %v3205 = vadd.f32 %v3187, %v3197
    %v3206 = vadd.f32 %v3188, %v3198
    %s3207 = sld [smem:[#allocation7 + $0x182]]
    %v3208 = vstv %s3207
    %v3209 = vmul.f32 %v1059, %v3208
    %v3210 = vmul.f32 %v1060, %v3208
    %v3211 = vmul.f32 %v1061, %v3208
    %v3212 = vmul.f32 %v1062, %v3208
    %v3213 = vmul.f32 %v1063, %v3208
    %v3214 = vmul.f32 %v1064, %v3208
    %v3215 = vmul.f32 %v1065, %v3208
    %v3216 = vmul.f32 %v1066, %v3208
    %v3217 = vadd.f32 %v3199, %v3209
    %v3218 = vadd.f32 %v3200, %v3210
    %v3219 = vadd.f32 %v3201, %v3211
    %v3220 = vadd.f32 %v3202, %v3212
    %v3221 = vadd.f32 %v3203, %v3213
    %v3222 = vadd.f32 %v3204, %v3214
    %v3223 = vadd.f32 %v3205, %v3215
    %v3224 = vadd.f32 %v3206, %v3216
    %s3225 = sld [smem:[#allocation7 + $0x183]]
    %v3226 = vstv %s3225
    %v3227 = vmul.f32 %v1381, %v3226
    %v3228 = vmul.f32 %v1382, %v3226
    %v3229 = vmul.f32 %v1383, %v3226
    %v3230 = vmul.f32 %v1384, %v3226
    %v3231 = vmul.f32 %v1385, %v3226
    %v3232 = vmul.f32 %v1386, %v3226
    %v3233 = vmul.f32 %v1387, %v3226
    %v3234 = vmul.f32 %v1388, %v3226
    %v3235 = vadd.f32 %v3217, %v3227
    %v3236 = vadd.f32 %v3218, %v3228
    %v3237 = vadd.f32 %v3219, %v3229
    %v3238 = vadd.f32 %v3220, %v3230
    %v3239 = vadd.f32 %v3221, %v3231
    %v3240 = vadd.f32 %v3222, %v3232
    %v3241 = vadd.f32 %v3223, %v3233
    %v3242 = vadd.f32 %v3224, %v3234
    %s3243 = sld [smem:[#allocation7 + $0x184]]
    %v3244 = vstv %s3243
    %v3245 = vmul.f32 %v1703, %v3244
    %v3246 = vmul.f32 %v1704, %v3244
    %v3247 = vmul.f32 %v1705, %v3244
    %v3248 = vmul.f32 %v1706, %v3244
    %v3249 = vmul.f32 %v1707, %v3244
    %v3250 = vmul.f32 %v1708, %v3244
    %v3251 = vmul.f32 %v1709, %v3244
    %v3252 = vmul.f32 %v1710, %v3244
    %v3253 = vadd.f32 %v3235, %v3245
    %v3254 = vadd.f32 %v3236, %v3246
    %v3255 = vadd.f32 %v3237, %v3247
    %v3256 = vadd.f32 %v3238, %v3248
    %v3257 = vadd.f32 %v3239, %v3249
    %v3258 = vadd.f32 %v3240, %v3250
    %v3259 = vadd.f32 %v3241, %v3251
    %v3260 = vadd.f32 %v3242, %v3252
    %s3261 = sld [smem:[#allocation7 + $0x185]]
    %v3262 = vstv %s3261
    %v3263 = vmul.f32 %v2025, %v3262
    %v3264 = vmul.f32 %v2026, %v3262
    %v3265 = vmul.f32 %v2027, %v3262
    %v3266 = vmul.f32 %v2028, %v3262
    %v3267 = vmul.f32 %v2029, %v3262
    %v3268 = vmul.f32 %v2030, %v3262
    %v3269 = vmul.f32 %v2031, %v3262
    %v3270 = vmul.f32 %v2032, %v3262
    %v3271 = vadd.f32 %v3253, %v3263
    %v3272 = vadd.f32 %v3254, %v3264
    %v3273 = vadd.f32 %v3255, %v3265
    %v3274 = vadd.f32 %v3256, %v3266
    %v3275 = vadd.f32 %v3257, %v3267
    %v3276 = vadd.f32 %v3258, %v3268
    %v3277 = vadd.f32 %v3259, %v3269
    %v3278 = vadd.f32 %v3260, %v3270
    %s3279 = sld [smem:[#allocation7 + $0x186]]
    %v3280 = vstv %s3279
    %v3281 = vmul.f32 %v2347, %v3280
    %v3282 = vmul.f32 %v2348, %v3280
    %v3283 = vmul.f32 %v2349, %v3280
    %v3284 = vmul.f32 %v2350, %v3280
    %v3285 = vmul.f32 %v2351, %v3280
    %v3286 = vmul.f32 %v2352, %v3280
    %v3287 = vmul.f32 %v2353, %v3280
    %v3288 = vmul.f32 %v2354, %v3280
    %v3289 = vadd.f32 %v3271, %v3281
    %v3290 = vadd.f32 %v3272, %v3282
    %v3291 = vadd.f32 %v3273, %v3283
    %v3292 = vadd.f32 %v3274, %v3284
    %v3293 = vadd.f32 %v3275, %v3285
    %v3294 = vadd.f32 %v3276, %v3286
    %v3295 = vadd.f32 %v3277, %v3287
    %v3296 = vadd.f32 %v3278, %v3288
    %s3297 = sld [smem:[#allocation7 + $0x187]]
    %v3298 = vstv %s3297
    %v3299 = vmul.f32 %v2669, %v3298
    %v3300 = vmul.f32 %v2670, %v3298
    %v3301 = vmul.f32 %v2671, %v3298
    %v3302 = vmul.f32 %v2672, %v3298
    %v3303 = vmul.f32 %v2673, %v3298
    %v3304 = vmul.f32 %v2674, %v3298
    %v3305 = vmul.f32 %v2675, %v3298
    %v3306 = vmul.f32 %v2676, %v3298
    %v3307 = vadd.f32 %v3289, %v3299
    %v3308 = vadd.f32 %v3290, %v3300
    %v3309 = vadd.f32 %v3291, %v3301
    %v3310 = vadd.f32 %v3292, %v3302
    %v3311 = vadd.f32 %v3293, %v3303
    %v3312 = vadd.f32 %v3294, %v3304
    %v3313 = vadd.f32 %v3295, %v3305
    %v3314 = vadd.f32 %v3296, %v3306
    %s3315 = sld [smem:[#allocation8 + $0x3]]
    %v3316 = vstv %s3315
    %v3317 = vadd.f32 %v3307, %v3316
    %v3318 = vadd.f32 %v3308, %v3316
    %v3319 = vadd.f32 %v3309, %v3316
    %v3320 = vadd.f32 %v3310, %v3316
    %v3321 = vadd.f32 %v3311, %v3316
    %v3322 = vadd.f32 %v3312, %v3316
    %v3323 = vadd.f32 %v3313, %v3316
    %v3324 = vadd.f32 %v3314, %v3316
    %v3325 = vrot.slane %v93, 3
    %v3326 = vrot.slane %v94, 3
    %v3327 = vrot.slane %v95, 3
    %v3328 = vrot.slane %v96, 3
    %v3329 = vrot.slane %v97, 3
    %v3330 = vrot.slane %v98, 3
    %v3331 = vrot.slane %v99, 3
    %v3332 = vrot.slane %v100, 3
    %v3341 = vadd.f32 %v3317, %v3325
    %v3342 = vadd.f32 %v3318, %v3326
    %v3343 = vadd.f32 %v3319, %v3327
    %v3344 = vadd.f32 %v3320, %v3328
    %v3345 = vadd.f32 %v3321, %v3329
    %v3346 = vadd.f32 %v3322, %v3330
    %v3347 = vadd.f32 %v3323, %v3331
    %v3348 = vadd.f32 %v3324, %v3332
    %s3349 = sld [smem:[#allocation7 + $0x200]]
    %v3350 = vstv %s3349
    %v3351 = vmul.f32 %v415, %v3350
    %v3352 = vmul.f32 %v416, %v3350
    %v3353 = vmul.f32 %v417, %v3350
    %v3354 = vmul.f32 %v418, %v3350
    %v3355 = vmul.f32 %v419, %v3350
    %v3356 = vmul.f32 %v420, %v3350
    %v3357 = vmul.f32 %v421, %v3350
    %v3358 = vmul.f32 %v422, %v3350
    %s3359 = sld [smem:[#allocation7 + $0x201]]
    %v3360 = vstv %s3359
    %v3361 = vmul.f32 %v737, %v3360
    %v3362 = vmul.f32 %v738, %v3360
    %v3363 = vmul.f32 %v739, %v3360
    %v3364 = vmul.f32 %v740, %v3360
    %v3365 = vmul.f32 %v741, %v3360
    %v3366 = vmul.f32 %v742, %v3360
    %v3367 = vmul.f32 %v743, %v3360
    %v3368 = vmul.f32 %v744, %v3360
    %v3369 = vadd.f32 %v3351, %v3361
    %v3370 = vadd.f32 %v3352, %v3362
    %v3371 = vadd.f32 %v3353, %v3363
    %v3372 = vadd.f32 %v3354, %v3364
    %v3373 = vadd.f32 %v3355, %v3365
    %v3374 = vadd.f32 %v3356, %v3366
    %v3375 = vadd.f32 %v3357, %v3367
    %v3376 = vadd.f32 %v3358, %v3368
    %s3377 = sld [smem:[#allocation7 + $0x202]]
    %v3378 = vstv %s3377
    %v3379 = vmul.f32 %v1059, %v3378
    %v3380 = vmul.f32 %v1060, %v3378
    %v3381 = vmul.f32 %v1061, %v3378
    %v3382 = vmul.f32 %v1062, %v3378
    %v3383 = vmul.f32 %v1063, %v3378
    %v3384 = vmul.f32 %v1064, %v3378
    %v3385 = vmul.f32 %v1065, %v3378
    %v3386 = vmul.f32 %v1066, %v3378
    %v3387 = vadd.f32 %v3369, %v3379
    %v3388 = vadd.f32 %v3370, %v3380
    %v3389 = vadd.f32 %v3371, %v3381
    %v3390 = vadd.f32 %v3372, %v3382
    %v3391 = vadd.f32 %v3373, %v3383
    %v3392 = vadd.f32 %v3374, %v3384
    %v3393 = vadd.f32 %v3375, %v3385
    %v3394 = vadd.f32 %v3376, %v3386
    %s3395 = sld [smem:[#allocation7 + $0x203]]
    %v3396 = vstv %s3395
    %v3397 = vmul.f32 %v1381, %v3396
    %v3398 = vmul.f32 %v1382, %v3396
    %v3399 = vmul.f32 %v1383, %v3396
    %v3400 = vmul.f32 %v1384, %v3396
    %v3401 = vmul.f32 %v1385, %v3396
    %v3402 = vmul.f32 %v1386, %v3396
    %v3403 = vmul.f32 %v1387, %v3396
    %v3404 = vmul.f32 %v1388, %v3396
    %v3405 = vadd.f32 %v3387, %v3397
    %v3406 = vadd.f32 %v3388, %v3398
    %v3407 = vadd.f32 %v3389, %v3399
    %v3408 = vadd.f32 %v3390, %v3400
    %v3409 = vadd.f32 %v3391, %v3401
    %v3410 = vadd.f32 %v3392, %v3402
    %v3411 = vadd.f32 %v3393, %v3403
    %v3412 = vadd.f32 %v3394, %v3404
    %s3413 = sld [smem:[#allocation7 + $0x204]]
    %v3414 = vstv %s3413
    %v3415 = vmul.f32 %v1703, %v3414
    %v3416 = vmul.f32 %v1704, %v3414
    %v3417 = vmul.f32 %v1705, %v3414
    %v3418 = vmul.f32 %v1706, %v3414
    %v3419 = vmul.f32 %v1707, %v3414
    %v3420 = vmul.f32 %v1708, %v3414
    %v3421 = vmul.f32 %v1709, %v3414
    %v3422 = vmul.f32 %v1710, %v3414
    %v3423 = vadd.f32 %v3405, %v3415
    %v3424 = vadd.f32 %v3406, %v3416
    %v3425 = vadd.f32 %v3407, %v3417
    %v3426 = vadd.f32 %v3408, %v3418
    %v3427 = vadd.f32 %v3409, %v3419
    %v3428 = vadd.f32 %v3410, %v3420
    %v3429 = vadd.f32 %v3411, %v3421
    %v3430 = vadd.f32 %v3412, %v3422
    %s3431 = sld [smem:[#allocation7 + $0x205]]
    %v3432 = vstv %s3431
    %v3433 = vmul.f32 %v2025, %v3432
    %v3434 = vmul.f32 %v2026, %v3432
    %v3435 = vmul.f32 %v2027, %v3432
    %v3436 = vmul.f32 %v2028, %v3432
    %v3437 = vmul.f32 %v2029, %v3432
    %v3438 = vmul.f32 %v2030, %v3432
    %v3439 = vmul.f32 %v2031, %v3432
    %v3440 = vmul.f32 %v2032, %v3432
    %v3441 = vadd.f32 %v3423, %v3433
    %v3442 = vadd.f32 %v3424, %v3434
    %v3443 = vadd.f32 %v3425, %v3435
    %v3444 = vadd.f32 %v3426, %v3436
    %v3445 = vadd.f32 %v3427, %v3437
    %v3446 = vadd.f32 %v3428, %v3438
    %v3447 = vadd.f32 %v3429, %v3439
    %v3448 = vadd.f32 %v3430, %v3440
    %s3449 = sld [smem:[#allocation7 + $0x206]]
    %v3450 = vstv %s3449
    %v3451 = vmul.f32 %v2347, %v3450
    %v3452 = vmul.f32 %v2348, %v3450
    %v3453 = vmul.f32 %v2349, %v3450
    %v3454 = vmul.f32 %v2350, %v3450
    %v3455 = vmul.f32 %v2351, %v3450
    %v3456 = vmul.f32 %v2352, %v3450
    %v3457 = vmul.f32 %v2353, %v3450
    %v3458 = vmul.f32 %v2354, %v3450
    %v3459 = vadd.f32 %v3441, %v3451
    %v3460 = vadd.f32 %v3442, %v3452
    %v3461 = vadd.f32 %v3443, %v3453
    %v3462 = vadd.f32 %v3444, %v3454
    %v3463 = vadd.f32 %v3445, %v3455
    %v3464 = vadd.f32 %v3446, %v3456
    %v3465 = vadd.f32 %v3447, %v3457
    %v3466 = vadd.f32 %v3448, %v3458
    %s3467 = sld [smem:[#allocation7 + $0x207]]
    %v3468 = vstv %s3467
    %v3469 = vmul.f32 %v2669, %v3468
    %v3470 = vmul.f32 %v2670, %v3468
    %v3471 = vmul.f32 %v2671, %v3468
    %v3472 = vmul.f32 %v2672, %v3468
    %v3473 = vmul.f32 %v2673, %v3468
    %v3474 = vmul.f32 %v2674, %v3468
    %v3475 = vmul.f32 %v2675, %v3468
    %v3476 = vmul.f32 %v2676, %v3468
    %v3477 = vadd.f32 %v3459, %v3469
    %v3478 = vadd.f32 %v3460, %v3470
    %v3479 = vadd.f32 %v3461, %v3471
    %v3480 = vadd.f32 %v3462, %v3472
    %v3481 = vadd.f32 %v3463, %v3473
    %v3482 = vadd.f32 %v3464, %v3474
    %v3483 = vadd.f32 %v3465, %v3475
    %v3484 = vadd.f32 %v3466, %v3476
    %s3485 = sld [smem:[#allocation8 + $0x4]]
    %v3486 = vstv %s3485
    %v3487 = vadd.f32 %v3477, %v3486
    %v3488 = vadd.f32 %v3478, %v3486
    %v3489 = vadd.f32 %v3479, %v3486
    %v3490 = vadd.f32 %v3480, %v3486
    %v3491 = vadd.f32 %v3481, %v3486
    %v3492 = vadd.f32 %v3482, %v3486
    %v3493 = vadd.f32 %v3483, %v3486
    %v3494 = vadd.f32 %v3484, %v3486
    %v3495 = vrot.slane %v93, 4
    %v3496 = vrot.slane %v94, 4
    %v3497 = vrot.slane %v95, 4
    %v3498 = vrot.slane %v96, 4
    %v3499 = vrot.slane %v97, 4
    %v3500 = vrot.slane %v98, 4
    %v3501 = vrot.slane %v99, 4
    %v3502 = vrot.slane %v100, 4
    %v3511 = vadd.f32 %v3487, %v3495
    %v3512 = vadd.f32 %v3488, %v3496
    %v3513 = vadd.f32 %v3489, %v3497
    %v3514 = vadd.f32 %v3490, %v3498
    %v3515 = vadd.f32 %v3491, %v3499
    %v3516 = vadd.f32 %v3492, %v3500
    %v3517 = vadd.f32 %v3493, %v3501
    %v3518 = vadd.f32 %v3494, %v3502
    %s3519 = sld [smem:[#allocation7 + $0x280]]
    %v3520 = vstv %s3519
    %v3521 = vmul.f32 %v415, %v3520
    %v3522 = vmul.f32 %v416, %v3520
    %v3523 = vmul.f32 %v417, %v3520
    %v3524 = vmul.f32 %v418, %v3520
    %v3525 = vmul.f32 %v419, %v3520
    %v3526 = vmul.f32 %v420, %v3520
    %v3527 = vmul.f32 %v421, %v3520
    %v3528 = vmul.f32 %v422, %v3520
    %s3529 = sld [smem:[#allocation7 + $0x281]]
    %v3530 = vstv %s3529
    %v3531 = vmul.f32 %v737, %v3530
    %v3532 = vmul.f32 %v738, %v3530
    %v3533 = vmul.f32 %v739, %v3530
    %v3534 = vmul.f32 %v740, %v3530
    %v3535 = vmul.f32 %v741, %v3530
    %v3536 = vmul.f32 %v742, %v3530
    %v3537 = vmul.f32 %v743, %v3530
    %v3538 = vmul.f32 %v744, %v3530
    %v3539 = vadd.f32 %v3521, %v3531
    %v3540 = vadd.f32 %v3522, %v3532
    %v3541 = vadd.f32 %v3523, %v3533
    %v3542 = vadd.f32 %v3524, %v3534
    %v3543 = vadd.f32 %v3525, %v3535
    %v3544 = vadd.f32 %v3526, %v3536
    %v3545 = vadd.f32 %v3527, %v3537
    %v3546 = vadd.f32 %v3528, %v3538
    %s3547 = sld [smem:[#allocation7 + $0x282]]
    %v3548 = vstv %s3547
    %v3549 = vmul.f32 %v1059, %v3548
    %v3550 = vmul.f32 %v1060, %v3548
    %v3551 = vmul.f32 %v1061, %v3548
    %v3552 = vmul.f32 %v1062, %v3548
    %v3553 = vmul.f32 %v1063, %v3548
    %v3554 = vmul.f32 %v1064, %v3548
    %v3555 = vmul.f32 %v1065, %v3548
    %v3556 = vmul.f32 %v1066, %v3548
    %v3557 = vadd.f32 %v3539, %v3549
    %v3558 = vadd.f32 %v3540, %v3550
    %v3559 = vadd.f32 %v3541, %v3551
    %v3560 = vadd.f32 %v3542, %v3552
    %v3561 = vadd.f32 %v3543, %v3553
    %v3562 = vadd.f32 %v3544, %v3554
    %v3563 = vadd.f32 %v3545, %v3555
    %v3564 = vadd.f32 %v3546, %v3556
    %s3565 = sld [smem:[#allocation7 + $0x283]]
    %v3566 = vstv %s3565
    %v3567 = vmul.f32 %v1381, %v3566
    %v3568 = vmul.f32 %v1382, %v3566
    %v3569 = vmul.f32 %v1383, %v3566
    %v3570 = vmul.f32 %v1384, %v3566
    %v3571 = vmul.f32 %v1385, %v3566
    %v3572 = vmul.f32 %v1386, %v3566
    %v3573 = vmul.f32 %v1387, %v3566
    %v3574 = vmul.f32 %v1388, %v3566
    %v3575 = vadd.f32 %v3557, %v3567
    %v3576 = vadd.f32 %v3558, %v3568
    %v3577 = vadd.f32 %v3559, %v3569
    %v3578 = vadd.f32 %v3560, %v3570
    %v3579 = vadd.f32 %v3561, %v3571
    %v3580 = vadd.f32 %v3562, %v3572
    %v3581 = vadd.f32 %v3563, %v3573
    %v3582 = vadd.f32 %v3564, %v3574
    %s3583 = sld [smem:[#allocation7 + $0x284]]
    %v3584 = vstv %s3583
    %v3585 = vmul.f32 %v1703, %v3584
    %v3586 = vmul.f32 %v1704, %v3584
    %v3587 = vmul.f32 %v1705, %v3584
    %v3588 = vmul.f32 %v1706, %v3584
    %v3589 = vmul.f32 %v1707, %v3584
    %v3590 = vmul.f32 %v1708, %v3584
    %v3591 = vmul.f32 %v1709, %v3584
    %v3592 = vmul.f32 %v1710, %v3584
    %v3593 = vadd.f32 %v3575, %v3585
    %v3594 = vadd.f32 %v3576, %v3586
    %v3595 = vadd.f32 %v3577, %v3587
    %v3596 = vadd.f32 %v3578, %v3588
    %v3597 = vadd.f32 %v3579, %v3589
    %v3598 = vadd.f32 %v3580, %v3590
    %v3599 = vadd.f32 %v3581, %v3591
    %v3600 = vadd.f32 %v3582, %v3592
    %s3601 = sld [smem:[#allocation7 + $0x285]]
    %v3602 = vstv %s3601
    %v3603 = vmul.f32 %v2025, %v3602
    %v3604 = vmul.f32 %v2026, %v3602
    %v3605 = vmul.f32 %v2027, %v3602
    %v3606 = vmul.f32 %v2028, %v3602
    %v3607 = vmul.f32 %v2029, %v3602
    %v3608 = vmul.f32 %v2030, %v3602
    %v3609 = vmul.f32 %v2031, %v3602
    %v3610 = vmul.f32 %v2032, %v3602
    %v3611 = vadd.f32 %v3593, %v3603
    %v3612 = vadd.f32 %v3594, %v3604
    %v3613 = vadd.f32 %v3595, %v3605
    %v3614 = vadd.f32 %v3596, %v3606
    %v3615 = vadd.f32 %v3597, %v3607
    %v3616 = vadd.f32 %v3598, %v3608
    %v3617 = vadd.f32 %v3599, %v3609
    %v3618 = vadd.f32 %v3600, %v3610
    %s3619 = sld [smem:[#allocation7 + $0x286]]
    %v3620 = vstv %s3619
    %v3621 = vmul.f32 %v2347, %v3620
    %v3622 = vmul.f32 %v2348, %v3620
    %v3623 = vmul.f32 %v2349, %v3620
    %v3624 = vmul.f32 %v2350, %v3620
    %v3625 = vmul.f32 %v2351, %v3620
    %v3626 = vmul.f32 %v2352, %v3620
    %v3627 = vmul.f32 %v2353, %v3620
    %v3628 = vmul.f32 %v2354, %v3620
    %v3629 = vadd.f32 %v3611, %v3621
    %v3630 = vadd.f32 %v3612, %v3622
    %v3631 = vadd.f32 %v3613, %v3623
    %v3632 = vadd.f32 %v3614, %v3624
    %v3633 = vadd.f32 %v3615, %v3625
    %v3634 = vadd.f32 %v3616, %v3626
    %v3635 = vadd.f32 %v3617, %v3627
    %v3636 = vadd.f32 %v3618, %v3628
    %s3637 = sld [smem:[#allocation7 + $0x287]]
    %v3638 = vstv %s3637
    %v3639 = vmul.f32 %v2669, %v3638
    %v3640 = vmul.f32 %v2670, %v3638
    %v3641 = vmul.f32 %v2671, %v3638
    %v3642 = vmul.f32 %v2672, %v3638
    %v3643 = vmul.f32 %v2673, %v3638
    %v3644 = vmul.f32 %v2674, %v3638
    %v3645 = vmul.f32 %v2675, %v3638
    %v3646 = vmul.f32 %v2676, %v3638
    %v3647 = vadd.f32 %v3629, %v3639
    %v3648 = vadd.f32 %v3630, %v3640
    %v3649 = vadd.f32 %v3631, %v3641
    %v3650 = vadd.f32 %v3632, %v3642
    %v3651 = vadd.f32 %v3633, %v3643
    %v3652 = vadd.f32 %v3634, %v3644
    %v3653 = vadd.f32 %v3635, %v3645
    %v3654 = vadd.f32 %v3636, %v3646
    %s3655 = sld [smem:[#allocation8 + $0x5]]
    %v3656 = vstv %s3655
    %v3657 = vadd.f32 %v3647, %v3656
    %v3658 = vadd.f32 %v3648, %v3656
    %v3659 = vadd.f32 %v3649, %v3656
    %v3660 = vadd.f32 %v3650, %v3656
    %v3661 = vadd.f32 %v3651, %v3656
    %v3662 = vadd.f32 %v3652, %v3656
    %v3663 = vadd.f32 %v3653, %v3656
    %v3664 = vadd.f32 %v3654, %v3656
    %v3665 = vrot.slane %v93, 5
    %v3666 = vrot.slane %v94, 5
    %v3667 = vrot.slane %v95, 5
    %v3668 = vrot.slane %v96, 5
    %v3669 = vrot.slane %v97, 5
    %v3670 = vrot.slane %v98, 5
    %v3671 = vrot.slane %v99, 5
    %v3672 = vrot.slane %v100, 5
    %v3681 = vadd.f32 %v3657, %v3665
    %v3682 = vadd.f32 %v3658, %v3666
    %v3683 = vadd.f32 %v3659, %v3667
    %v3684 = vadd.f32 %v3660, %v3668
    %v3685 = vadd.f32 %v3661, %v3669
    %v3686 = vadd.f32 %v3662, %v3670
    %v3687 = vadd.f32 %v3663, %v3671
    %v3688 = vadd.f32 %v3664, %v3672
    %s3689 = sld [smem:[#allocation7 + $0x300]]
    %v3690 = vstv %s3689
    %v3691 = vmul.f32 %v415, %v3690
    %v3692 = vmul.f32 %v416, %v3690
    %v3693 = vmul.f32 %v417, %v3690
    %v3694 = vmul.f32 %v418, %v3690
    %v3695 = vmul.f32 %v419, %v3690
    %v3696 = vmul.f32 %v420, %v3690
    %v3697 = vmul.f32 %v421, %v3690
    %v3698 = vmul.f32 %v422, %v3690
    %s3699 = sld [smem:[#allocation7 + $0x301]]
    %v3700 = vstv %s3699
    %v3701 = vmul.f32 %v737, %v3700
    %v3702 = vmul.f32 %v738, %v3700
    %v3703 = vmul.f32 %v739, %v3700
    %v3704 = vmul.f32 %v740, %v3700
    %v3705 = vmul.f32 %v741, %v3700
    %v3706 = vmul.f32 %v742, %v3700
    %v3707 = vmul.f32 %v743, %v3700
    %v3708 = vmul.f32 %v744, %v3700
    %v3709 = vadd.f32 %v3691, %v3701
    %v3710 = vadd.f32 %v3692, %v3702
    %v3711 = vadd.f32 %v3693, %v3703
    %v3712 = vadd.f32 %v3694, %v3704
    %v3713 = vadd.f32 %v3695, %v3705
    %v3714 = vadd.f32 %v3696, %v3706
    %v3715 = vadd.f32 %v3697, %v3707
    %v3716 = vadd.f32 %v3698, %v3708
    %s3717 = sld [smem:[#allocation7 + $0x302]]
    %v3718 = vstv %s3717
    %v3719 = vmul.f32 %v1059, %v3718
    %v3720 = vmul.f32 %v1060, %v3718
    %v3721 = vmul.f32 %v1061, %v3718
    %v3722 = vmul.f32 %v1062, %v3718
    %v3723 = vmul.f32 %v1063, %v3718
    %v3724 = vmul.f32 %v1064, %v3718
    %v3725 = vmul.f32 %v1065, %v3718
    %v3726 = vmul.f32 %v1066, %v3718
    %v3727 = vadd.f32 %v3709, %v3719
    %v3728 = vadd.f32 %v3710, %v3720
    %v3729 = vadd.f32 %v3711, %v3721
    %v3730 = vadd.f32 %v3712, %v3722
    %v3731 = vadd.f32 %v3713, %v3723
    %v3732 = vadd.f32 %v3714, %v3724
    %v3733 = vadd.f32 %v3715, %v3725
    %v3734 = vadd.f32 %v3716, %v3726
    %s3735 = sld [smem:[#allocation7 + $0x303]]
    %v3736 = vstv %s3735
    %v3737 = vmul.f32 %v1381, %v3736
    %v3738 = vmul.f32 %v1382, %v3736
    %v3739 = vmul.f32 %v1383, %v3736
    %v3740 = vmul.f32 %v1384, %v3736
    %v3741 = vmul.f32 %v1385, %v3736
    %v3742 = vmul.f32 %v1386, %v3736
    %v3743 = vmul.f32 %v1387, %v3736
    %v3744 = vmul.f32 %v1388, %v3736
    %v3745 = vadd.f32 %v3727, %v3737
    %v3746 = vadd.f32 %v3728, %v3738
    %v3747 = vadd.f32 %v3729, %v3739
    %v3748 = vadd.f32 %v3730, %v3740
    %v3749 = vadd.f32 %v3731, %v3741
    %v3750 = vadd.f32 %v3732, %v3742
    %v3751 = vadd.f32 %v3733, %v3743
    %v3752 = vadd.f32 %v3734, %v3744
    %s3753 = sld [smem:[#allocation7 + $0x304]]
    %v3754 = vstv %s3753
    %v3755 = vmul.f32 %v1703, %v3754
    %v3756 = vmul.f32 %v1704, %v3754
    %v3757 = vmul.f32 %v1705, %v3754
    %v3758 = vmul.f32 %v1706, %v3754
    %v3759 = vmul.f32 %v1707, %v3754
    %v3760 = vmul.f32 %v1708, %v3754
    %v3761 = vmul.f32 %v1709, %v3754
    %v3762 = vmul.f32 %v1710, %v3754
    %v3763 = vadd.f32 %v3745, %v3755
    %v3764 = vadd.f32 %v3746, %v3756
    %v3765 = vadd.f32 %v3747, %v3757
    %v3766 = vadd.f32 %v3748, %v3758
    %v3767 = vadd.f32 %v3749, %v3759
    %v3768 = vadd.f32 %v3750, %v3760
    %v3769 = vadd.f32 %v3751, %v3761
    %v3770 = vadd.f32 %v3752, %v3762
    %s3771 = sld [smem:[#allocation7 + $0x305]]
    %v3772 = vstv %s3771
    %v3773 = vmul.f32 %v2025, %v3772
    %v3774 = vmul.f32 %v2026, %v3772
    %v3775 = vmul.f32 %v2027, %v3772
    %v3776 = vmul.f32 %v2028, %v3772
    %v3777 = vmul.f32 %v2029, %v3772
    %v3778 = vmul.f32 %v2030, %v3772
    %v3779 = vmul.f32 %v2031, %v3772
    %v3780 = vmul.f32 %v2032, %v3772
    %v3781 = vadd.f32 %v3763, %v3773
    %v3782 = vadd.f32 %v3764, %v3774
    %v3783 = vadd.f32 %v3765, %v3775
    %v3784 = vadd.f32 %v3766, %v3776
    %v3785 = vadd.f32 %v3767, %v3777
    %v3786 = vadd.f32 %v3768, %v3778
    %v3787 = vadd.f32 %v3769, %v3779
    %v3788 = vadd.f32 %v3770, %v3780
    %s3789 = sld [smem:[#allocation7 + $0x306]]
    %v3790 = vstv %s3789
    %v3791 = vmul.f32 %v2347, %v3790
    %v3792 = vmul.f32 %v2348, %v3790
    %v3793 = vmul.f32 %v2349, %v3790
    %v3794 = vmul.f32 %v2350, %v3790
    %v3795 = vmul.f32 %v2351, %v3790
    %v3796 = vmul.f32 %v2352, %v3790
    %v3797 = vmul.f32 %v2353, %v3790
    %v3798 = vmul.f32 %v2354, %v3790
    %v3799 = vadd.f32 %v3781, %v3791
    %v3800 = vadd.f32 %v3782, %v3792
    %v3801 = vadd.f32 %v3783, %v3793
    %v3802 = vadd.f32 %v3784, %v3794
    %v3803 = vadd.f32 %v3785, %v3795
    %v3804 = vadd.f32 %v3786, %v3796
    %v3805 = vadd.f32 %v3787, %v3797
    %v3806 = vadd.f32 %v3788, %v3798
    %s3807 = sld [smem:[#allocation7 + $0x307]]
    %v3808 = vstv %s3807
    %v3809 = vmul.f32 %v2669, %v3808
    %v3810 = vmul.f32 %v2670, %v3808
    %v3811 = vmul.f32 %v2671, %v3808
    %v3812 = vmul.f32 %v2672, %v3808
    %v3813 = vmul.f32 %v2673, %v3808
    %v3814 = vmul.f32 %v2674, %v3808
    %v3815 = vmul.f32 %v2675, %v3808
    %v3816 = vmul.f32 %v2676, %v3808
    %v3817 = vadd.f32 %v3799, %v3809
    %v3818 = vadd.f32 %v3800, %v3810
    %v3819 = vadd.f32 %v3801, %v3811
    %v3820 = vadd.f32 %v3802, %v3812
    %v3821 = vadd.f32 %v3803, %v3813
    %v3822 = vadd.f32 %v3804, %v3814
    %v3823 = vadd.f32 %v3805, %v3815
    %v3824 = vadd.f32 %v3806, %v3816
    %s3825 = sld [smem:[#allocation8 + $0x6]]
    %v3826 = vstv %s3825
    %v3827 = vadd.f32 %v3817, %v3826
    %v3828 = vadd.f32 %v3818, %v3826
    %v3829 = vadd.f32 %v3819, %v3826
    %v3830 = vadd.f32 %v3820, %v3826
    %v3831 = vadd.f32 %v3821, %v3826
    %v3832 = vadd.f32 %v3822, %v3826
    %v3833 = vadd.f32 %v3823, %v3826
    %v3834 = vadd.f32 %v3824, %v3826
    %v3835 = vrot.slane %v93, 6
    %v3836 = vrot.slane %v94, 6
    %v3837 = vrot.slane %v95, 6
    %v3838 = vrot.slane %v96, 6
    %v3839 = vrot.slane %v97, 6
    %v3840 = vrot.slane %v98, 6
    %v3841 = vrot.slane %v99, 6
    %v3842 = vrot.slane %v100, 6
    %v3851 = vadd.f32 %v3827, %v3835
    %v3852 = vadd.f32 %v3828, %v3836
    %v3853 = vadd.f32 %v3829, %v3837
    %v3854 = vadd.f32 %v3830, %v3838
    %v3855 = vadd.f32 %v3831, %v3839
    %v3856 = vadd.f32 %v3832, %v3840
    %v3857 = vadd.f32 %v3833, %v3841
    %v3858 = vadd.f32 %v3834, %v3842
    %s3859 = sld [smem:[#allocation7 + $0x380]]
    %v3860 = vstv %s3859
    %v3861 = vmul.f32 %v415, %v3860
    %v3862 = vmul.f32 %v416, %v3860
    %v3863 = vmul.f32 %v417, %v3860
    %v3864 = vmul.f32 %v418, %v3860
    %v3865 = vmul.f32 %v419, %v3860
    %v3866 = vmul.f32 %v420, %v3860
    %v3867 = vmul.f32 %v421, %v3860
    %v3868 = vmul.f32 %v422, %v3860
    %s3869 = sld [smem:[#allocation7 + $0x381]]
    %v3870 = vstv %s3869
    %v3871 = vmul.f32 %v737, %v3870
    %v3872 = vmul.f32 %v738, %v3870
    %v3873 = vmul.f32 %v739, %v3870
    %v3874 = vmul.f32 %v740, %v3870
    %v3875 = vmul.f32 %v741, %v3870
    %v3876 = vmul.f32 %v742, %v3870
    %v3877 = vmul.f32 %v743, %v3870
    %v3878 = vmul.f32 %v744, %v3870
    %v3879 = vadd.f32 %v3861, %v3871
    %v3880 = vadd.f32 %v3862, %v3872
    %v3881 = vadd.f32 %v3863, %v3873
    %v3882 = vadd.f32 %v3864, %v3874
    %v3883 = vadd.f32 %v3865, %v3875
    %v3884 = vadd.f32 %v3866, %v3876
    %v3885 = vadd.f32 %v3867, %v3877
    %v3886 = vadd.f32 %v3868, %v3878
    %s3887 = sld [smem:[#allocation7 + $0x382]]
    %v3888 = vstv %s3887
    %v3889 = vmul.f32 %v1059, %v3888
    %v3890 = vmul.f32 %v1060, %v3888
    %v3891 = vmul.f32 %v1061, %v3888
    %v3892 = vmul.f32 %v1062, %v3888
    %v3893 = vmul.f32 %v1063, %v3888
    %v3894 = vmul.f32 %v1064, %v3888
    %v3895 = vmul.f32 %v1065, %v3888
    %v3896 = vmul.f32 %v1066, %v3888
    %v3897 = vadd.f32 %v3879, %v3889
    %v3898 = vadd.f32 %v3880, %v3890
    %v3899 = vadd.f32 %v3881, %v3891
    %v3900 = vadd.f32 %v3882, %v3892
    %v3901 = vadd.f32 %v3883, %v3893
    %v3902 = vadd.f32 %v3884, %v3894
    %v3903 = vadd.f32 %v3885, %v3895
    %v3904 = vadd.f32 %v3886, %v3896
    %s3905 = sld [smem:[#allocation7 + $0x383]]
    %v3906 = vstv %s3905
    %v3907 = vmul.f32 %v1381, %v3906
    %v3908 = vmul.f32 %v1382, %v3906
    %v3909 = vmul.f32 %v1383, %v3906
    %v3910 = vmul.f32 %v1384, %v3906
    %v3911 = vmul.f32 %v1385, %v3906
    %v3912 = vmul.f32 %v1386, %v3906
    %v3913 = vmul.f32 %v1387, %v3906
    %v3914 = vmul.f32 %v1388, %v3906
    %v3915 = vadd.f32 %v3897, %v3907
    %v3916 = vadd.f32 %v3898, %v3908
    %v3917 = vadd.f32 %v3899, %v3909
    %v3918 = vadd.f32 %v3900, %v3910
    %v3919 = vadd.f32 %v3901, %v3911
    %v3920 = vadd.f32 %v3902, %v3912
    %v3921 = vadd.f32 %v3903, %v3913
    %v3922 = vadd.f32 %v3904, %v3914
    %s3923 = sld [smem:[#allocation7 + $0x384]]
    %v3924 = vstv %s3923
    %v3925 = vmul.f32 %v1703, %v3924
    %v3926 = vmul.f32 %v1704, %v3924
    %v3927 = vmul.f32 %v1705, %v3924
    %v3928 = vmul.f32 %v1706, %v3924
    %v3929 = vmul.f32 %v1707, %v3924
    %v3930 = vmul.f32 %v1708, %v3924
    %v3931 = vmul.f32 %v1709, %v3924
    %v3932 = vmul.f32 %v1710, %v3924
    %v3933 = vadd.f32 %v3915, %v3925
    %v3934 = vadd.f32 %v3916, %v3926
    %v3935 = vadd.f32 %v3917, %v3927
    %v3936 = vadd.f32 %v3918, %v3928
    %v3937 = vadd.f32 %v3919, %v3929
    %v3938 = vadd.f32 %v3920, %v3930
    %v3939 = vadd.f32 %v3921, %v3931
    %v3940 = vadd.f32 %v3922, %v3932
    %s3941 = sld [smem:[#allocation7 + $0x385]]
    %v3942 = vstv %s3941
    %v3943 = vmul.f32 %v2025, %v3942
    %v3944 = vmul.f32 %v2026, %v3942
    %v3945 = vmul.f32 %v2027, %v3942
    %v3946 = vmul.f32 %v2028, %v3942
    %v3947 = vmul.f32 %v2029, %v3942
    %v3948 = vmul.f32 %v2030, %v3942
    %v3949 = vmul.f32 %v2031, %v3942
    %v3950 = vmul.f32 %v2032, %v3942
    %v3951 = vadd.f32 %v3933, %v3943
    %v3952 = vadd.f32 %v3934, %v3944
    %v3953 = vadd.f32 %v3935, %v3945
    %v3954 = vadd.f32 %v3936, %v3946
    %v3955 = vadd.f32 %v3937, %v3947
    %v3956 = vadd.f32 %v3938, %v3948
    %v3957 = vadd.f32 %v3939, %v3949
    %v3958 = vadd.f32 %v3940, %v3950
    %s3959 = sld [smem:[#allocation7 + $0x386]]
    %v3960 = vstv %s3959
    %v3961 = vmul.f32 %v2347, %v3960
    %v3962 = vmul.f32 %v2348, %v3960
    %v3963 = vmul.f32 %v2349, %v3960
    %v3964 = vmul.f32 %v2350, %v3960
    %v3965 = vmul.f32 %v2351, %v3960
    %v3966 = vmul.f32 %v2352, %v3960
    %v3967 = vmul.f32 %v2353, %v3960
    %v3968 = vmul.f32 %v2354, %v3960
    %v3969 = vadd.f32 %v3951, %v3961
    %v3970 = vadd.f32 %v3952, %v3962
    %v3971 = vadd.f32 %v3953, %v3963
    %v3972 = vadd.f32 %v3954, %v3964
    %v3973 = vadd.f32 %v3955, %v3965
    %v3974 = vadd.f32 %v3956, %v3966
    %v3975 = vadd.f32 %v3957, %v3967
    %v3976 = vadd.f32 %v3958, %v3968
    %s3977 = sld [smem:[#allocation7 + $0x387]]
    %v3978 = vstv %s3977
    %v3979 = vmul.f32 %v2669, %v3978
    %v3980 = vmul.f32 %v2670, %v3978
    %v3981 = vmul.f32 %v2671, %v3978
    %v3982 = vmul.f32 %v2672, %v3978
    %v3983 = vmul.f32 %v2673, %v3978
    %v3984 = vmul.f32 %v2674, %v3978
    %v3985 = vmul.f32 %v2675, %v3978
    %v3986 = vmul.f32 %v2676, %v3978
    %v3987 = vadd.f32 %v3969, %v3979
    %v3988 = vadd.f32 %v3970, %v3980
    %v3989 = vadd.f32 %v3971, %v3981
    %v3990 = vadd.f32 %v3972, %v3982
    %v3991 = vadd.f32 %v3973, %v3983
    %v3992 = vadd.f32 %v3974, %v3984
    %v3993 = vadd.f32 %v3975, %v3985
    %v3994 = vadd.f32 %v3976, %v3986
    %s3995 = sld [smem:[#allocation8 + $0x7]]
    %v3996 = vstv %s3995
    %v3997 = vadd.f32 %v3987, %v3996
    %v3998 = vadd.f32 %v3988, %v3996
    %v3999 = vadd.f32 %v3989, %v3996
    %v4000 = vadd.f32 %v3990, %v3996
    %v4001 = vadd.f32 %v3991, %v3996
    %v4002 = vadd.f32 %v3992, %v3996
    %v4003 = vadd.f32 %v3993, %v3996
    %v4004 = vadd.f32 %v3994, %v3996
    %v4005 = vrot.slane %v93, 7
    %v4006 = vrot.slane %v94, 7
    %v4007 = vrot.slane %v95, 7
    %v4008 = vrot.slane %v96, 7
    %v4009 = vrot.slane %v97, 7
    %v4010 = vrot.slane %v98, 7
    %v4011 = vrot.slane %v99, 7
    %v4012 = vrot.slane %v100, 7
    %v4021 = vadd.f32 %v3997, %v4005
    %v4022 = vadd.f32 %v3998, %v4006
    %v4023 = vadd.f32 %v3999, %v4007
    %v4024 = vadd.f32 %v4000, %v4008
    %v4025 = vadd.f32 %v4001, %v4009
    %v4026 = vadd.f32 %v4002, %v4010
    %v4027 = vadd.f32 %v4003, %v4011
    %v4028 = vadd.f32 %v4004, %v4012
    %v4037 = vrot.slane %v3001, 7
    %v4038 = vrot.slane %v3002, 7
    %v4039 = vrot.slane %v3003, 7
    %v4040 = vrot.slane %v3004, 7
    %v4041 = vrot.slane %v3005, 7
    %v4042 = vrot.slane %v3006, 7
    %v4043 = vrot.slane %v3007, 7
    %v4044 = vrot.slane %v3008, 7
    %v4061 = vrot.slane %v3171, 6
    %v4062 = vrot.slane %v3172, 6
    %v4063 = vrot.slane %v3173, 6
    %v4064 = vrot.slane %v3174, 6
    %v4065 = vrot.slane %v3175, 6
    %v4066 = vrot.slane %v3176, 6
    %v4067 = vrot.slane %v3177, 6
    %v4068 = vrot.slane %v3178, 6
    %v4085 = vrot.slane %v3341, 5
    %v4086 = vrot.slane %v3342, 5
    %v4087 = vrot.slane %v3343, 5
    %v4088 = vrot.slane %v3344, 5
    %v4089 = vrot.slane %v3345, 5
    %v4090 = vrot.slane %v3346, 5
    %v4091 = vrot.slane %v3347, 5
    %v4092 = vrot.slane %v3348, 5
    %v4109 = vrot.slane %v3511, 4
    %v4110 = vrot.slane %v3512, 4
    %v4111 = vrot.slane %v3513, 4
    %v4112 = vrot.slane %v3514, 4
    %v4113 = vrot.slane %v3515, 4
    %v4114 = vrot.slane %v3516, 4
    %v4115 = vrot.slane %v3517, 4
    %v4116 = vrot.slane %v3518, 4
    %v4133 = vrot.slane %v3681, 3
    %v4134 = vrot.slane %v3682, 3
    %v4135 = vrot.slane %v3683, 3
    %v4136 = vrot.slane %v3684, 3
    %v4137 = vrot.slane %v3685, 3
    %v4138 = vrot.slane %v3686, 3
    %v4139 = vrot.slane %v3687, 3
    %v4140 = vrot.slane %v3688, 3
    %v4157 = vrot.slane %v3851, 2
    %v4158 = vrot.slane %v3852, 2
    %v4159 = vrot.slane %v3853, 2
    %v4160 = vrot.slane %v3854, 2
    %v4161 = vrot.slane %v3855, 2
    %v4162 = vrot.slane %v3856, 2
    %v4163 = vrot.slane %v3857, 2
    %v4164 = vrot.slane %v3858, 2
    %v4181 = vrot.slane %v4021, 1
    %v4182 = vrot.slane %v4022, 1
    %v4183 = vrot.slane %v4023, 1
    %v4184 = vrot.slane %v4024, 1
    %v4185 = vrot.slane %v4025, 1
    %v4186 = vrot.slane %v4026, 1
    %v4187 = vrot.slane %v4027, 1
    %v4188 = vrot.slane %v4028, 1
    %vm4197 = vcmask 1040384
    %v4198 = vsel %vm4197, %v2823, %v4037
    %v4199 = vsel %vm4197, %v2824, %v4038
    %v4200 = vsel %vm4197, %v2825, %v4039
    %v4201 = vsel %vm4197, %v2826, %v4040
    %v4202 = vsel %vm4197, %v2827, %v4041
    %v4203 = vsel %vm4197, %v2828, %v4042
    %v4204 = vsel %vm4197, %v2829, %v4043
    %v4205 = vsel %vm4197, %v2830, %v4044
    %vm4206 = vcmask 1041408
    %v4207 = vsel %vm4206, %v4198, %v4061
    %v4208 = vsel %vm4206, %v4199, %v4062
    %v4209 = vsel %vm4206, %v4200, %v4063
    %v4210 = vsel %vm4206, %v4201, %v4064
    %v4211 = vsel %vm4206, %v4202, %v4065
    %v4212 = vsel %vm4206, %v4203, %v4066
    %v4213 = vsel %vm4206, %v4204, %v4067
    %v4214 = vsel %vm4206, %v4205, %v4068
    %vm4215 = vcmask 1042432
    %v4216 = vsel %vm4215, %v4207, %v4085
    %v4217 = vsel %vm4215, %v4208, %v4086
    %v4218 = vsel %vm4215, %v4209, %v4087
    %v4219 = vsel %vm4215, %v4210, %v4088
    %v4220 = vsel %vm4215, %v4211, %v4089
    %v4221 = vsel %vm4215, %v4212, %v4090
    %v4222 = vsel %vm4215, %v4213, %v4091
    %v4223 = vsel %vm4215, %v4214, %v4092
    %vm4224 = vcmask 1043456
    %v4225 = vsel %vm4224, %v4216, %v4109
    %v4226 = vsel %vm4224, %v4217, %v4110
    %v4227 = vsel %vm4224, %v4218, %v4111
    %v4228 = vsel %vm4224, %v4219, %v4112
    %v4229 = vsel %vm4224, %v4220, %v4113
    %v4230 = vsel %vm4224, %v4221, %v4114
    %v4231 = vsel %vm4224, %v4222, %v4115
    %v4232 = vsel %vm4224, %v4223, %v4116
    %vm4233 = vcmask 1044480
    %v4234 = vsel %vm4233, %v4225, %v4133
    %v4235 = vsel %vm4233, %v4226, %v4134
    %v4236 = vsel %vm4233, %v4227, %v4135
    %v4237 = vsel %vm4233, %v4228, %v4136
    %v4238 = vsel %vm4233, %v4229, %v4137
    %v4239 = vsel %vm4233, %v4230, %v4138
    %v4240 = vsel %vm4233, %v4231, %v4139
    %v4241 = vsel %vm4233, %v4232, %v4140
    %vm4242 = vcmask 1045504
    %v4243 = vsel %vm4242, %v4234, %v4157
    %v4244 = vsel %vm4242, %v4235, %v4158
    %v4245 = vsel %vm4242, %v4236, %v4159
    %v4246 = vsel %vm4242, %v4237, %v4160
    %v4247 = vsel %vm4242, %v4238, %v4161
    %v4248 = vsel %vm4242, %v4239, %v4162
    %v4249 = vsel %vm4242, %v4240, %v4163
    %v4250 = vsel %vm4242, %v4241, %v4164
    %vm4251 = vcmask 1046528
    %v4252 = vsel %vm4251, %v4243, %v4181
    %v4253 = vsel %vm4251, %v4244, %v4182
    %v4254 = vsel %vm4251, %v4245, %v4183
    %v4255 = vsel %vm4251, %v4246, %v4184
    %v4256 = vsel %vm4251, %v4247, %v4185
    %v4257 = vsel %vm4251, %v4248, %v4186
    %v4258 = vsel %vm4251, %v4249, %v4187
    %v4259 = vsel %vm4251, %v4250, %v4188
    %v4260 = vpack.c.bf16 %v4253, %v4252
    %v4261 = vpack.c.bf16 %v4255, %v4254
    %v4262 = vpack.c.bf16 %v4257, %v4256
    %v4263 = vpack.c.bf16 %v4259, %v4258
    %v4264 = vld [vmem:[%s6] sm:$0xf]
    %v4265 = vld [vmem:[%s6 + $0x4] sm:$0xf]
    %v4266 = vld [vmem:[%s6 + $0x8] sm:$0xf]
    %v4267 = vld [vmem:[%s6 + $0xc] sm:$0xf]
    %v4268 = vld [vmem:[%s6 + $0x10] sm:$0xf]
    %v4269 = vld [vmem:[%s6 + $0x14] sm:$0xf]
    %v4270 = vld [vmem:[%s6 + $0x18] sm:$0xf]
    %v4271 = vld [vmem:[%s6 + $0x1c] sm:$0xf]
    %v4272 = vld [vmem:[%s6 + $0x20] sm:$0xf]
    %v4273 = vld [vmem:[%s6 + $0x24] sm:$0xf]
    %v4274 = vld [vmem:[%s6 + $0x28] sm:$0xf]
    %v4275 = vld [vmem:[%s6 + $0x2c] sm:$0xf]
    %v4276 = vld [vmem:[%s6 + $0x30] sm:$0xf]
    %v4277 = vld [vmem:[%s6 + $0x34] sm:$0xf]
    %v4278 = vld [vmem:[%s6 + $0x38] sm:$0xf]
    %v4279 = vld [vmem:[%s6 + $0x3c] sm:$0xf]
    %v4280 = vld [vmem:[%s7] sm:$0x1]
    %v4282 = vperm.slane %v4280, 0
    %v4300 = vunpack.c.l.b16 %v4264
    %v4301 = vunpack.c.l.b16 %v4265
    %v4302 = vunpack.c.l.b16 %v4266
    %v4303 = vunpack.c.l.b16 %v4267
    %v4304 = vunpack.c.l.b16 %v4268
    %v4305 = vunpack.c.l.b16 %v4269
    %v4306 = vunpack.c.l.b16 %v4270
    %v4307 = vunpack.c.l.b16 %v4271
    %v4308 = vunpack.c.l.b16 %v4272
    %v4309 = vunpack.c.l.b16 %v4273
    %v4310 = vunpack.c.l.b16 %v4274
    %v4311 = vunpack.c.l.b16 %v4275
    %v4312 = vunpack.c.l.b16 %v4276
    %v4313 = vunpack.c.l.b16 %v4277
    %v4314 = vunpack.c.l.b16 %v4278
    %v4315 = vunpack.c.l.b16 %v4279
    %v4316 = vpack.c.b16 %v4301, %v4300
    %v4317 = vpack.c.b16 %v4303, %v4302
    %v4318 = vpack.c.b16 %v4305, %v4304
    %v4319 = vpack.c.b16 %v4307, %v4306
    %v4320 = vpack.c.b16 %v4309, %v4308
    %v4321 = vpack.c.b16 %v4311, %v4310
    %v4322 = vpack.c.b16 %v4313, %v4312
    %v4323 = vpack.c.b16 %v4315, %v4314
    %4332 = vmatpush.bf16.msra.mxu0 %v4323
    %4333 = vmatpush.bf16.msra.mxu0 %v4322
    %4334 = vmatpush.bf16.msra.mxu0 %v4321
    %4335 = vmatpush.bf16.msra.mxu0 %v4320
    %4336 = vmatpush.bf16.msra.mxu0 %v4319
    %4337 = vmatpush.bf16.msra.mxu0 %v4318
    %4338 = vmatpush.bf16.msra.mxu0 %v4317
    %4339 = vmatpush.bf16.msra.mxu0 %v4316
    %4340 = vmatmul.bf16.gmra.mxu0 %v4260
    %v4341 = vpop.f32.mrf.mxu0
    %v4342 = vadd.f32 %v4282, %v4341
    %v4343 = vpop.f32.mrf.mxu0
    %v4344 = vadd.f32 %v4282, %v4343
    %4345 = vmatmul.bf16.gmra.mxu0 %v4261
    %v4346 = vpop.f32.mrf.mxu0
    %v4347 = vadd.f32 %v4282, %v4346
    %v4348 = vpop.f32.mrf.mxu0
    %v4349 = vadd.f32 %v4282, %v4348
    %4350 = vmatmul.bf16.gmra.mxu0 %v4262
    %v4351 = vpop.f32.mrf.mxu0
    %v4352 = vadd.f32 %v4282, %v4351
    %v4353 = vpop.f32.mrf.mxu0
    %v4354 = vadd.f32 %v4282, %v4353
    %4355 = vmatmul.bf16.gmra.mxu0 %v4263
    %v4356 = vpop.f32.mrf.mxu0
    %v4357 = vadd.f32 %v4282, %v4356
    %v4358 = vpop.f32.mrf.mxu0
    %v4359 = vadd.f32 %v4282, %v4358
    %4360 = vdwg.mxu0
    %v4361 = vmax.f32 %v4342, 0.0
    %v4362 = vmax.f32 %v4344, 0.0
    %v4363 = vmax.f32 %v4347, 0.0
    %v4364 = vmax.f32 %v4349, 0.0
    %v4365 = vmax.f32 %v4352, 0.0
    %v4366 = vmax.f32 %v4354, 0.0
    %v4367 = vmax.f32 %v4357, 0.0
    %v4368 = vmax.f32 %v4359, 0.0
    %v4369 = vpack.c.bf16 %v4362, %v4361
    %v4370 = vpack.c.bf16 %v4364, %v4363
    %v4371 = vpack.c.bf16 %v4366, %v4365
    %v4372 = vpack.c.bf16 %v4368, %v4367
    %v4373 = vld [vmem:[%s8] sm:$0xf]
    %v4374 = vld [vmem:[%s8 + $0x4] sm:$0xf]
    %v4375 = vld [vmem:[%s8 + $0x8] sm:$0xf]
    %v4376 = vld [vmem:[%s8 + $0xc] sm:$0xf]
    %v4377 = vld [vmem:[%s8 + $0x10] sm:$0xf]
    %v4378 = vld [vmem:[%s8 + $0x14] sm:$0xf]
    %v4379 = vld [vmem:[%s8 + $0x18] sm:$0xf]
    %v4380 = vld [vmem:[%s8 + $0x1c] sm:$0xf]
    %v4381 = vld [vmem:[%s8 + $0x20] sm:$0xf]
    %v4382 = vld [vmem:[%s8 + $0x24] sm:$0xf]
    %v4383 = vld [vmem:[%s8 + $0x28] sm:$0xf]
    %v4384 = vld [vmem:[%s8 + $0x2c] sm:$0xf]
    %v4385 = vld [vmem:[%s8 + $0x30] sm:$0xf]
    %v4386 = vld [vmem:[%s8 + $0x34] sm:$0xf]
    %v4387 = vld [vmem:[%s8 + $0x38] sm:$0xf]
    %v4388 = vld [vmem:[%s8 + $0x3c] sm:$0xf]
    %v4389 = vld [vmem:[%s9] sm:$0x1]
    %v4391 = vperm.slane %v4389, 0
    %v4409 = vunpack.c.l.b16 %v4373
    %v4410 = vunpack.c.l.b16 %v4374
    %v4411 = vunpack.c.l.b16 %v4375
    %v4412 = vunpack.c.l.b16 %v4376
    %v4413 = vunpack.c.l.b16 %v4377
    %v4414 = vunpack.c.l.b16 %v4378
    %v4415 = vunpack.c.l.b16 %v4379
    %v4416 = vunpack.c.l.b16 %v4380
    %v4417 = vunpack.c.l.b16 %v4381
    %v4418 = vunpack.c.l.b16 %v4382
    %v4419 = vunpack.c.l.b16 %v4383
    %v4420 = vunpack.c.l.b16 %v4384
    %v4421 = vunpack.c.l.b16 %v4385
    %v4422 = vunpack.c.l.b16 %v4386
    %v4423 = vunpack.c.l.b16 %v4387
    %v4424 = vunpack.c.l.b16 %v4388
    %v4425 = vpack.c.b16 %v4410, %v4409
    %v4426 = vpack.c.b16 %v4412, %v4411
    %v4427 = vpack.c.b16 %v4414, %v4413
    %v4428 = vpack.c.b16 %v4416, %v4415
    %v4429 = vpack.c.b16 %v4418, %v4417
    %v4430 = vpack.c.b16 %v4420, %v4419
    %v4431 = vpack.c.b16 %v4422, %v4421
    %v4432 = vpack.c.b16 %v4424, %v4423
    %4441 = vmatpush.bf16.msra.mxu0 %v4432
    %4442 = vmatpush.bf16.msra.mxu0 %v4431
    %4443 = vmatpush.bf16.msra.mxu0 %v4430
    %4444 = vmatpush.bf16.msra.mxu0 %v4429
    %4445 = vmatpush.bf16.msra.mxu0 %v4428
    %4446 = vmatpush.bf16.msra.mxu0 %v4427
    %4447 = vmatpush.bf16.msra.mxu0 %v4426
    %4448 = vmatpush.bf16.msra.mxu0 %v4425
    %4449 = vmatmul.bf16.gmra.mxu0 %v4369
    %v4450 = vpop.f32.mrf.mxu0
    %v4451 = vadd.f32 %v4391, %v4450
    %v4452 = vpop.f32.mrf.mxu0
    %v4453 = vadd.f32 %v4391, %v4452
    %4454 = vmatmul.bf16.gmra.mxu0 %v4370
    %v4455 = vpop.f32.mrf.mxu0
    %v4456 = vadd.f32 %v4391, %v4455
    %v4457 = vpop.f32.mrf.mxu0
    %v4458 = vadd.f32 %v4391, %v4457
    %4459 = vmatmul.bf16.gmra.mxu0 %v4371
    %v4460 = vpop.f32.mrf.mxu0
    %v4461 = vadd.f32 %v4391, %v4460
    %v4462 = vpop.f32.mrf.mxu0
    %v4463 = vadd.f32 %v4391, %v4462
    %4464 = vmatmul.bf16.gmra.mxu0 %v4372
    %v4465 = vpop.f32.mrf.mxu0
    %v4466 = vadd.f32 %v4391, %v4465
    %v4467 = vpop.f32.mrf.mxu0
    %v4468 = vadd.f32 %v4391, %v4467
    %4469 = vdwg.mxu0
    %v4470 = vadd.f32 %v4451, %v4252
    %v4471 = vadd.f32 %v4453, %v4253
    %v4472 = vadd.f32 %v4456, %v4254
    %v4473 = vadd.f32 %v4458, %v4255
    %v4474 = vadd.f32 %v4461, %v4256
    %v4475 = vadd.f32 %v4463, %v4257
    %v4476 = vadd.f32 %v4466, %v4258
    %v4477 = vadd.f32 %v4468, %v4259
    %4478 = vst [vmem:[#allocation10] sm:$0xff] %v4470
    %4479 = vst [vmem:[#allocation10 + $0x8] sm:$0xff] %v4471
    %4480 = vst [vmem:[#allocation10 + $0x10] sm:$0xff] %v4472
    %4481 = vst [vmem:[#allocation10 + $0x18] sm:$0xff] %v4473
    %4482 = vst [vmem:[#allocation10 + $0x20] sm:$0xff] %v4474
    %4483 = vst [vmem:[#allocation10 + $0x28] sm:$0xff] %v4475
    %4484 = vst [vmem:[#allocation10 + $0x30] sm:$0xff] %v4476
    %4485 = vst [vmem:[#allocation10 + $0x38] sm:$0xff] %v4477
    // Predicated region
    $region58: #{mlp_mix_enrich.1} parent=1 // pred_check
      _
    $region59: #{mlp_mix_enrich.1} parent=1 // pred_check_branch
      %4487 = sbr.rel (0) target = $region61
    $region60: #{mlp_mix_enrich.1} parent=1 // pred_region
      %4489 = vsyncadd [#allocation3], 0
      %s4490 = sshll.u32 [#allocation10], 4
      %s4491 = int_to_ptr.vmem [resolvable:$true] %s4490
      %s4492 = sshll.u32 %s10, 4
      %s4493 = int_to_ptr.hbm [resolvable:$true] %s4492
      %4498 = dma.vmem_to_hbm [thread:$0]  %s4491, 1024, %s4493, [#allocation3], 128, 128, 8
    $region61: #{mlp_mix_enrich.1} parent=1 // pred_fallthru
      _
    // Predicated region
    $region62: #{mlp_mix_enrich.1} parent=1 // pred_check
      _
    $region63: #{mlp_mix_enrich.1} parent=1 // pred_check_branch
      %4500 = sbr.rel (0) target = $region65
    $region64: #{mlp_mix_enrich.1} parent=1 // pred_region
      %4502 = dma.done [#allocation3], 1024
    $region65: #{mlp_mix_enrich.1} parent=1 // pred_fallthru
      _
    %4503 = vsyncpa [#allocation3], 1
    %4504 = vsyncpa [#allocation4], 1
    %4505 = vsyncpa [#allocation6], 1
    %4506 = vsyncpa [#allocation9], 1

</llo_original>
